<compile_context>
chip_gen: v7x
topology: tpu7x:2x2x1
jax: 0.10.0
libtpu: 0.0.40
codegen_flags: <defaults>
</compile_context>

<pallas_src>
import functools
import math

import jax
import jax.numpy as jnp
from jax.experimental import pallas as pl
from jax.experimental.pallas import tpu as pltpu

CPAD = 128   # lane-dense classifier output width (class_num zero-padded to 128)
LPAD = 128   # lane-dense per-batch loss-partials width


# ----------------------- fused BERT + classifier + CE kernel ----------------

def _bert_kernel(ids_ref, tgt_ref,
                 word_ref, pos_ref, type_ref, eg_ref, eb_ref,
                 wq_ref, wk_ref, wv_ref, bq_ref, bk_ref, bv_ref,
                 wo_ref, bo_ref, ln1g_ref, ln1b_ref,
                 w1_ref, b1_ref, w2_ref, b2_ref, ln2g_ref, ln2b_ref,
                 clsw_ref, clsb_ref,
                 logits_ref, loss_ref,
                 *, num_layers, num_heads, head_dim, seq, vocab, class_num, eps):
    S = seq
    f32 = jnp.float32
    bf16 = jnp.bfloat16
    scale = 1.0 / math.sqrt(head_dim)

    def dotf(a, b):
        return jnp.dot(a, b, preferred_element_type=f32)

    def ln(y, g, b):  # f32 statistics (v5e VPU/EUP have no bf16)
        mu = jnp.mean(y, axis=-1, keepdims=True)
        yc = y - mu
        var = jnp.mean(yc * yc, axis=-1, keepdims=True)
        return yc * jax.lax.rsqrt(var + eps) * g + b

    # ---- fused embedding lookup: one-hot (S, V) @ word_emb (V, H) on the MXU
    ids = ids_ref[...]                                              # (S, 1) i32
    vocab_iota = jax.lax.broadcasted_iota(jnp.int32, (S, vocab), 1)
    onehot = (vocab_iota == ids).astype(f32)                        # (S, V)
    emb = dotf(onehot, word_ref[...]) + pos_ref[...] + type_ref[...]
    h = ln(emb, eg_ref[...], eb_ref[...])                           # (S, H) f32

    # TODO(synk): switch to lax.fori_loop over layers (dynamic ref[l]) if
    # num_layers grows beyond the toy config (static unroll does not bound
    # vreg live ranges).
    for l in range(num_layers):
        hb = h.astype(bf16)
        attn = bo_ref[l]                                            # (1, H) bias seeds accumulator
        for hh in range(num_heads):
            # per-head projections: no lane slicing of activations anywhere
            q = dotf(hb, wq_ref[l, hh]) + bq_ref[l, hh]             # (S, dh) f32
            k = dotf(hb, wk_ref[l, hh]) + bk_ref[l, hh]
            v = dotf(hb, wv_ref[l, hh]) + bv_ref[l, hh]
            s = jax.lax.dot_general(q.astype(bf16), k.astype(bf16),
                                    (((1,), (1,)), ((), ())),
                                    preferred_element_type=f32) * scale   # (S, S)
            m = jnp.max(s, axis=-1, keepdims=True)
            p = jnp.exp(s - m)
            p = p * pl.reciprocal(jnp.sum(p, axis=-1, keepdims=True),
                                  approx=True)
            ctx = dotf(p.astype(bf16), v.astype(bf16))              # (S, dh)
            # accumulate straight into the output projection (no head concat)
            attn = attn + dotf(ctx.astype(bf16), wo_ref[l, hh])     # (S, H)

        h = ln(h + attn, ln1g_ref[l], ln1b_ref[l])                  # residual in LN

        ff = dotf(h.astype(bf16), w1_ref[l]) + b1_ref[l]
        # GELU, tanh approximation (EUP); exact erf GELU differs slightly.
        c = math.sqrt(2.0 / math.pi)
        ff = 0.5 * ff * (1.0 + jnp.tanh(c * (ff + 0.044715 * ff * ff * ff)))
        ff = dotf(ff.astype(bf16), w2_ref[l]) + b2_ref[l]

        h = ln(h + ff, ln2g_ref[l], ln2b_ref[l])                    # residual in LN

    # lane-dense classifier output: (S, CPAD) slab, live classes in [:, :class_num]
    logits = dotf(h.astype(bf16), clsw_ref[...]) + clsb_ref[...]
    logits_ref[...] = logits

    # ---- fused cross-entropy partials (ignore_index=-100, padded classes masked)
    tgt = tgt_ref[...]                                              # (S, 1) i32
    cls = jax.lax.broadcasted_iota(jnp.int32, (S, CPAD), 1)
    class_ok = cls < class_num
    masked = jnp.where(class_ok, logits, -1e30)                     # mask BEFORE exp
    m = jnp.max(masked, axis=-1, keepdims=True)
    z = jnp.sum(jnp.exp(masked - m), axis=-1, keepdims=True)
    lse = jnp.log(z) + m
    picked = jnp.sum(jnp.where(cls == tgt, logits, 0.0), axis=-1, keepdims=True)
    valid = (tgt != -100).astype(f32)
    loss_sum = jnp.sum((lse - picked) * valid)
    cnt = jnp.sum(valid)
    lane = jax.lax.broadcasted_iota(jnp.int32, (1, 8, LPAD), 2)
    loss_ref[...] = jnp.where(lane == 0, loss_sum,
                              jnp.where(lane == 1, cnt, 0.0))


def _resident_spec(a):
    nd = a.ndim
    return pl.BlockSpec(a.shape, lambda b, _nd=nd: (0,) * _nd)


def bert_forward_pallas(ids2d, tgt2d, params, cfg, batch, seq):
    H = cfg["hidden"]
    L = cfg["num_layers"]
    nh = cfg["num_heads"]
    dh = H // nh
    V = cfg["vocab_size"]
    I = cfg["intermediate"]
    C = cfg["class_num"]
    S = seq

    inputs = [
        ids2d, tgt2d,
        params["word_emb"], params["pos_emb"][:S], params["type_emb"][0:1],
        params["emb_ln_g"], params["emb_ln_b"],
        params["wq"], params["wk"], params["wv"],
        params["bq"], params["bk"], params["bv"],
        params["wo"], params["bo"], params["ln1_g"], params["ln1_b"],
        params["w1"], params["b1"], params["w2"], params["b2"],
        params["ln2_g"], params["ln2_b"],
        params["cls_w"], params["cls_b"],
    ]

    in_specs = ([pl.BlockSpec((S, 1), lambda b: (b, 0)),
                 pl.BlockSpec((S, 1), lambda b: (b, 0))]
                + [_resident_spec(a) for a in inputs[2:]])

    out_shapes = (jax.ShapeDtypeStruct((batch * S, CPAD), jnp.float32),
                  jax.ShapeDtypeStruct((batch, 8, LPAD), jnp.float32))
    out_specs = (pl.BlockSpec((S, CPAD), lambda b: (b, 0)),
                 pl.BlockSpec((1, 8, LPAD), lambda b: (b, 0, 0)))

    # rough cost hint for XLA's scheduler
    flops_layer = nh * (3 * 2 * S * H * dh + 2 * 2 * S * S * dh + 2 * S * dh * H) \
        + 2 * 2 * S * H * I
    flops = batch * (L * flops_layer + 2 * S * V * H + 2 * S * H * CPAD)
    transcendentals = batch * (L * (S * I + nh * S * S) + S * CPAD)
    bytes_accessed = sum(int(a.size) * a.dtype.itemsize for a in inputs) \
        + batch * S * CPAD * 4 + batch * 8 * LPAD * 4

    kern = functools.partial(
        _bert_kernel, num_layers=L, num_heads=nh, head_dim=dh,
        seq=S, vocab=V, class_num=C, eps=1e-12)

    return pl.pallas_call(
        kern,
        out_shape=out_shapes,
        grid=(batch,),
        in_specs=in_specs,
        out_specs=out_specs,
        compiler_params=pltpu.CompilerParams(
            dimension_semantics=("parallel",)),
        cost_estimate=pl.CostEstimate(
            flops=int(flops), transcendentals=int(transcendentals),
            bytes_accessed=int(bytes_accessed)),
    )(*inputs)


# ----------------------------- model wrapper -------------------------------

CFG = dict(vocab_size=64, hidden=32, num_heads=2, num_layers=2,
           intermediate=128, max_length=8, class_num=8, use_crf=False)


def init_params(key, cfg):
    H, I = cfg["hidden"], cfg["intermediate"]
    C, L = cfg["class_num"], cfg["num_layers"]
    nh = cfg["num_heads"]
    dh = H // nh
    V, Smax = cfg["vocab_size"], cfg["max_length"]
    ks = iter(jax.random.split(key, 24))

    def nrm(shape, s=0.02):
        return (s * jax.random.normal(next(ks), shape)).astype(jnp.float32)

    cls_w = jnp.zeros((H, CPAD), jnp.float32).at[:, :C].set(nrm((H, C)))
    return dict(
        word_emb=nrm((V, H)),
        pos_emb=nrm((Smax, H)),
        type_emb=nrm((2, H)),
        emb_ln_g=jnp.ones((1, H), jnp.float32),
        emb_ln_b=jnp.zeros((1, H), jnp.float32),
        # per-layer, per-head weights on leading axes (no in-kernel lane slicing);
        # MXU operands in bf16, biases/LN in f32
        wq=nrm((L, nh, H, dh)).astype(jnp.bfloat16),
        wk=nrm((L, nh, H, dh)).astype(jnp.bfloat16),
        wv=nrm((L, nh, H, dh)).astype(jnp.bfloat16),
        bq=jnp.zeros((L, nh, 1, dh), jnp.float32),
        bk=jnp.zeros((L, nh, 1, dh), jnp.float32),
        bv=jnp.zeros((L, nh, 1, dh), jnp.float32),
        wo=nrm((L, nh, dh, H)).astype(jnp.bfloat16),
        bo=jnp.zeros((L, 1, H), jnp.float32),
        ln1_g=jnp.ones((L, 1, H), jnp.float32),
        ln1_b=jnp.zeros((L, 1, H), jnp.float32),
        w1=nrm((L, H, I)).astype(jnp.bfloat16),
        b1=jnp.zeros((L, 1, I), jnp.float32),
        w2=nrm((L, I, H)).astype(jnp.bfloat16),
        b2=jnp.zeros((L, 1, H), jnp.float32),
        ln2_g=jnp.ones((L, 1, H), jnp.float32),
        ln2_b=jnp.zeros((L, 1, H), jnp.float32),
        cls_w=cls_w.astype(jnp.bfloat16),   # lane-dense, zero-padded columns
        cls_b=jnp.zeros((1, CPAD), jnp.float32),
    )


def torch_model_forward(params, x_tokens, cfg, target=None, use_crf=False):
    """Mirrors TorchModel.forward: BERT -> classify -> (loss | logits)."""
    B, S = x_tokens.shape
    C = cfg["class_num"]

    ids2d = x_tokens.astype(jnp.int32).reshape(B * S, 1)
    if target is None:
        tgt2d = jnp.full((B * S, 1), -100, jnp.int32)   # dummy; CE partials unused
    else:
        tgt2d = target.astype(jnp.int32).reshape(B * S, 1)

    logits_pad, loss_parts = bert_forward_pallas(ids2d, tgt2d, params, cfg, B, S)

    if target is not None:
        if use_crf:
            # TODO(synk): torchcrf CRF negative log-likelihood has no Pallas port here.
            raise NotImplementedError("use_crf=True training path not implemented")
        loss_sum = jnp.sum(loss_parts[:, 0, 0])
        cnt = jnp.sum(loss_parts[:, 0, 1])
        # NOTE: PyTorch returns NaN when every target is ignored; we clamp to 0.0.
        return loss_sum / jnp.maximum(cnt, 1.0)

    predict = logits_pad[:, :C].reshape(B, S, C)
    if use_crf:
        # TODO(synk): CRF Viterbi decode not implemented; returning raw logits instead.
        return predict
    return predict


# --------------------------------- demo ------------------------------------

if __name__ == "__main__":
    key = jax.random.PRNGKey(0)
    pk, xk, tk = jax.random.split(key, 3)

    params = init_params(pk, CFG)

    B, S = 2, CFG["max_length"]
    x = jax.random.randint(xk, (B, S), 0, CFG["vocab_size"], dtype=jnp.int32)

    # Inference path (target=None, use_crf=False): returns logits (B, S, class_num).
    predict = torch_model_forward(params, x, CFG, target=None, use_crf=CFG["use_crf"])
    predict = jax.block_until_ready(predict)
    assert predict.shape == (B, S, CFG["class_num"])
    assert bool(jnp.all(jnp.isfinite(predict)))

    # Training path (target given, use_crf=False): CrossEntropy with ignore_index=-100.
    target = jax.random.randint(tk, (B, S), 0, CFG["class_num"], dtype=jnp.int32)
    target = target.at[:, 0].set(-100)   # mimic padded / ignored positions
    loss = torch_model_forward(params, x, CFG, target=target, use_crf=CFG["use_crf"])
    loss = jax.block_until_ready(loss)
    assert loss.shape == () and bool(jnp.isfinite(loss))

    print("KERNEL_OK")
</pallas_src>

<mosaic_0001>
module attributes {stable_mosaic.version = 11 : i64} {
  func.func @_bert_kernel(%arg0: i32, %arg1: memref<8x1xi32, #tpu.memory_space<vmem>>, %arg2: memref<8x1xi32, #tpu.memory_space<vmem>>, %arg3: memref<64x32xf32, #tpu.memory_space<vmem>>, %arg4: memref<8x32xf32, #tpu.memory_space<vmem>>, %arg5: memref<1x32xf32, #tpu.memory_space<vmem>>, %arg6: memref<1x32xf32, #tpu.memory_space<vmem>>, %arg7: memref<1x32xf32, #tpu.memory_space<vmem>>, %arg8: memref<2x2x32x16xbf16, #tpu.memory_space<vmem>>, %arg9: memref<2x2x32x16xbf16, #tpu.memory_space<vmem>>, %arg10: memref<2x2x32x16xbf16, #tpu.memory_space<vmem>>, %arg11: memref<2x2x1x16xf32, #tpu.memory_space<vmem>>, %arg12: memref<2x2x1x16xf32, #tpu.memory_space<vmem>>, %arg13: memref<2x2x1x16xf32, #tpu.memory_space<vmem>>, %arg14: memref<2x2x16x32xbf16, #tpu.memory_space<vmem>>, %arg15: memref<2x1x32xf32, #tpu.memory_space<vmem>>, %arg16: memref<2x1x32xf32, #tpu.memory_space<vmem>>, %arg17: memref<2x1x32xf32, #tpu.memory_space<vmem>>, %arg18: memref<2x32x128xbf16, #tpu.memory_space<vmem>>, %arg19: memref<2x1x128xf32, #tpu.memory_space<vmem>>, %arg20: memref<2x128x32xbf16, #tpu.memory_space<vmem>>, %arg21: memref<2x1x32xf32, #tpu.memory_space<vmem>>, %arg22: memref<2x1x32xf32, #tpu.memory_space<vmem>>, %arg23: memref<2x1x32xf32, #tpu.memory_space<vmem>>, %arg24: memref<32x128xbf16, #tpu.memory_space<vmem>>, %arg25: memref<1x128xf32, #tpu.memory_space<vmem>>, %arg26: memref<8x128xf32, #tpu.memory_space<vmem>>, %arg27: memref<1x8x128xf32, #tpu.memory_space<vmem>>) attributes {dimension_semantics = [#tpu.dimension_semantics<parallel>], iteration_bounds = array<i64: 2>, scalar_prefetch = 0 : i64, scratch_operands = 0 : i64, tpu.core_type = #tpu.core_type<tc>, window_params = [{transform_indices = @transform_0, window_bounds = array<i64: 8, 1>}, {transform_indices = @transform_1, window_bounds = array<i64: 8, 1>}, {pipeline_mode = #tpu.pipeline_mode<synchronous>, transform_indices = @transform_2, window_bounds = array<i64: 64, 32>}, {pipeline_mode = #tpu.pipeline_mode<synchronous>, transform_indices = @transform_3, window_bounds = array<i64: 8, 32>}, {pipeline_mode = #tpu.pipeline_mode<synchronous>, transform_indices = @transform_4, window_bounds = array<i64: 1, 32>}, {pipeline_mode = #tpu.pipeline_mode<synchronous>, transform_indices = @transform_5, window_bounds = array<i64: 1, 32>}, {pipeline_mode = #tpu.pipeline_mode<synchronous>, transform_indices = @transform_6, window_bounds = array<i64: 1, 32>}, {pipeline_mode = #tpu.pipeline_mode<synchronous>, transform_indices = @transform_7, window_bounds = array<i64: 2, 2, 32, 16>}, {pipeline_mode = #tpu.pipeline_mode<synchronous>, transform_indices = @transform_8, window_bounds = array<i64: 2, 2, 32, 16>}, {pipeline_mode = #tpu.pipeline_mode<synchronous>, transform_indices = @transform_9, window_bounds = array<i64: 2, 2, 32, 16>}, {pipeline_mode = #tpu.pipeline_mode<synchronous>, transform_indices = @transform_10, window_bounds = array<i64: 2, 2, 1, 16>}, {pipeline_mode = #tpu.pipeline_mode<synchronous>, transform_indices = @transform_11, window_bounds = array<i64: 2, 2, 1, 16>}, {pipeline_mode = #tpu.pipeline_mode<synchronous>, transform_indices = @transform_12, window_bounds = array<i64: 2, 2, 1, 16>}, {pipeline_mode = #tpu.pipeline_mode<synchronous>, transform_indices = @transform_13, window_bounds = array<i64: 2, 2, 16, 32>}, {pipeline_mode = #tpu.pipeline_mode<synchronous>, transform_indices = @transform_14, window_bounds = array<i64: 2, 1, 32>}, {pipeline_mode = #tpu.pipeline_mode<synchronous>, transform_indices = @transform_15, window_bounds = array<i64: 2, 1, 32>}, {pipeline_mode = #tpu.pipeline_mode<synchronous>, transform_indices = @transform_16, window_bounds = array<i64: 2, 1, 32>}, {pipeline_mode = #tpu.pipeline_mode<synchronous>, transform_indices = @transform_17, window_bounds = array<i64: 2, 32, 128>}, {pipeline_mode = #tpu.pipeline_mode<synchronous>, transform_indices = @transform_18, window_bounds = array<i64: 2, 1, 128>}, {pipeline_mode = #tpu.pipeline_mode<synchronous>, transform_indices = @transform_19, window_bounds = array<i64: 2, 128, 32>}, {pipeline_mode = #tpu.pipeline_mode<synchronous>, transform_indices = @transform_20, window_bounds = array<i64: 2, 1, 32>}, {pipeline_mode = #tpu.pipeline_mode<synchronous>, transform_indices = @transform_21, window_bounds = array<i64: 2, 1, 32>}, {pipeline_mode = #tpu.pipeline_mode<synchronous>, transform_indices = @transform_22, window_bounds = array<i64: 2, 1, 32>}, {pipeline_mode = #tpu.pipeline_mode<synchronous>, transform_indices = @transform_23, window_bounds = array<i64: 32, 128>}, {pipeline_mode = #tpu.pipeline_mode<synchronous>, transform_indices = @transform_24, window_bounds = array<i64: 1, 128>}, {transform_indices = @transform_25, window_bounds = array<i64: 8, 128>}, {transform_indices = @transform_26, window_bounds = array<i64: 1, 8, 128>}]} {
    %c0 = arith.constant 0 : index
    %c0_0 = arith.constant 0 : index
    %0 = vector.load %arg1[%c0, %c0_0] : memref<8x1xi32, #tpu.memory_space<vmem>>, vector<8x1xi32>
    %1 = tpu.iota {dimensions = array<i32: 1>} : vector<8x64xi32>
    %2 = vector.broadcast %0 : vector<8x1xi32> to vector<8x64xi32>
    %3 = arith.cmpi eq, %1, %2 : vector<8x64xi32>
    %4 = arith.extui %3 : vector<8x64xi1> to vector<8x64xi32>
    %5 = arith.sitofp %4 : vector<8x64xi32> to vector<8x64xf32>
    %c0_1 = arith.constant 0 : index
    %c0_2 = arith.constant 0 : index
    %6 = vector.load %arg3[%c0_1, %c0_2] : memref<64x32xf32, #tpu.memory_space<vmem>>, vector<64x32xf32>
    %cst = arith.constant dense<0.000000e+00> : vector<8x32xf32>
    %7 = tpu.matmul %5, %6, %cst {dimension_numbers = #tpu.dot_dimension_numbers<[1], [0], [0], [1], [0, 0, 1, 1], [], []>} : vector<8x64xf32>, vector<64x32xf32>, vector<8x32xf32> -> vector<8x32xf32>
    %c0_3 = arith.constant 0 : index
    %c0_4 = arith.constant 0 : index
    %8 = vector.load %arg4[%c0_3, %c0_4] : memref<8x32xf32, #tpu.memory_space<vmem>>, vector<8x32xf32>
    %9 = arith.addf %7, %8 : vector<8x32xf32>
    %c0_5 = arith.constant 0 : index
    %c0_6 = arith.constant 0 : index
    %10 = vector.load %arg5[%c0_5, %c0_6] : memref<1x32xf32, #tpu.memory_space<vmem>>, vector<1x32xf32>
    %11 = vector.broadcast %10 : vector<1x32xf32> to vector<8x32xf32>
    %12 = arith.addf %9, %11 : vector<8x32xf32>
    %c0_7 = arith.constant 0 : index
    %c0_8 = arith.constant 0 : index
    %13 = vector.load %arg6[%c0_7, %c0_8] : memref<1x32xf32, #tpu.memory_space<vmem>>, vector<1x32xf32>
    %c0_9 = arith.constant 0 : index
    %c0_10 = arith.constant 0 : index
    %14 = vector.load %arg7[%c0_9, %c0_10] : memref<1x32xf32, #tpu.memory_space<vmem>>, vector<1x32xf32>
    %cst_11 = arith.constant dense<0.000000e+00> : vector<8xf32>
    %15 = vector.multi_reduction <add>, %12, %cst_11 [1] : vector<8x32xf32> to vector<8xf32>
    %16 = vector.shape_cast %15 : vector<8xf32> to vector<8x1xf32>
    %cst_12 = arith.constant 3.200000e+01 : f32
    %17 = vector.broadcast %cst_12 : f32 to vector<8x1xf32>
    %18 = arith.divf %16, %17 : vector<8x1xf32>
    %19 = vector.broadcast %18 : vector<8x1xf32> to vector<8x32xf32>
    %20 = arith.subf %12, %19 : vector<8x32xf32>
    %21 = arith.mulf %20, %20 : vector<8x32xf32>
    %cst_13 = arith.constant dense<0.000000e+00> : vector<8xf32>
    %22 = vector.multi_reduction <add>, %21, %cst_13 [1] : vector<8x32xf32> to vector<8xf32>
    %23 = vector.shape_cast %22 : vector<8xf32> to vector<8x1xf32>
    %cst_14 = arith.constant 3.200000e+01 : f32
    %24 = vector.broadcast %cst_14 : f32 to vector<8x1xf32>
    %25 = arith.divf %23, %24 : vector<8x1xf32>
    %cst_15 = arith.constant 9.99999996E-13 : f32
    %26 = vector.broadcast %cst_15 : f32 to vector<8x1xf32>
    %27 = arith.addf %25, %26 : vector<8x1xf32>
    %28 = math.rsqrt %27 : vector<8x1xf32>
    %29 = vector.broadcast %28 : vector<8x1xf32> to vector<8x32xf32>
    %30 = arith.mulf %20, %29 : vector<8x32xf32>
    %31 = vector.broadcast %13 : vector<1x32xf32> to vector<8x32xf32>
    %32 = arith.mulf %30, %31 : vector<8x32xf32>
    %33 = vector.broadcast %14 : vector<1x32xf32> to vector<8x32xf32>
    %34 = arith.addf %32, %33 : vector<8x32xf32>
    %35 = arith.truncf %34 : vector<8x32xf32> to vector<8x32xbf16>
    %c0_16 = arith.constant 0 : index
    %c0_17 = arith.constant 0 : index
    %c0_18 = arith.constant 0 : index
    %36 = vector.load %arg15[%c0_16, %c0_17, %c0_18] : memref<2x1x32xf32, #tpu.memory_space<vmem>>, vector<1x1x32xf32>
    %37 = vector.shape_cast %36 : vector<1x1x32xf32> to vector<1x32xf32>
    %c0_19 = arith.constant 0 : index
    %c0_20 = arith.constant 0 : index
    %c0_21 = arith.constant 0 : index
    %c0_22 = arith.constant 0 : index
    %38 = vector.load %arg8[%c0_19, %c0_20, %c0_21, %c0_22] : memref<2x2x32x16xbf16, #tpu.memory_space<vmem>>, vector<1x1x32x16xbf16>
    %39 = vector.shape_cast %38 : vector<1x1x32x16xbf16> to vector<32x16xbf16>
    %cst_23 = arith.constant dense<0.000000e+00> : vector<8x16xf32>
    %40 = tpu.matmul %35, %39, %cst_23 {dimension_numbers = #tpu.dot_dimension_numbers<[1], [0], [0], [1], [0, 0, 1, 1], [], []>} : vector<8x32xbf16>, vector<32x16xbf16>, vector<8x16xf32> -> vector<8x16xf32>
    %c0_24 = arith.constant 0 : index
    %c0_25 = arith.constant 0 : index
    %c0_26 = arith.constant 0 : index
    %c0_27 = arith.constant 0 : index
    %41 = vector.load %arg11[%c0_24, %c0_25, %c0_26, %c0_27] : memref<2x2x1x16xf32, #tpu.memory_space<vmem>>, vector<1x1x1x16xf32>
    %42 = vector.shape_cast %41 : vector<1x1x1x16xf32> to vector<1x16xf32>
    %43 = vector.broadcast %42 : vector<1x16xf32> to vector<8x16xf32>
    %44 = arith.addf %40, %43 : vector<8x16xf32>
    %c0_28 = arith.constant 0 : index
    %c0_29 = arith.constant 0 : index
    %c0_30 = arith.constant 0 : index
    %c0_31 = arith.constant 0 : index
    %45 = vector.load %arg9[%c0_28, %c0_29, %c0_30, %c0_31] : memref<2x2x32x16xbf16, #tpu.memory_space<vmem>>, vector<1x1x32x16xbf16>
    %46 = vector.shape_cast %45 : vector<1x1x32x16xbf16> to vector<32x16xbf16>
    %cst_32 = arith.constant dense<0.000000e+00> : vector<8x16xf32>
    %47 = tpu.matmul %35, %46, %cst_32 {dimension_numbers = #tpu.dot_dimension_numbers<[1], [0], [0], [1], [0, 0, 1, 1], [], []>} : vector<8x32xbf16>, vector<32x16xbf16>, vector<8x16xf32> -> vector<8x16xf32>
    %c0_33 = arith.constant 0 : index
    %c0_34 = arith.constant 0 : index
    %c0_35 = arith.constant 0 : index
    %c0_36 = arith.constant 0 : index
    %48 = vector.load %arg12[%c0_33, %c0_34, %c0_35, %c0_36] : memref<2x2x1x16xf32, #tpu.memory_space<vmem>>, vector<1x1x1x16xf32>
    %49 = vector.shape_cast %48 : vector<1x1x1x16xf32> to vector<1x16xf32>
    %50 = vector.broadcast %49 : vector<1x16xf32> to vector<8x16xf32>
    %51 = arith.addf %47, %50 : vector<8x16xf32>
    %c0_37 = arith.constant 0 : index
    %c0_38 = arith.constant 0 : index
    %c0_39 = arith.constant 0 : index
    %c0_40 = arith.constant 0 : index
    %52 = vector.load %arg10[%c0_37, %c0_38, %c0_39, %c0_40] : memref<2x2x32x16xbf16, #tpu.memory_space<vmem>>, vector<1x1x32x16xbf16>
    %53 = vector.shape_cast %52 : vector<1x1x32x16xbf16> to vector<32x16xbf16>
    %cst_41 = arith.constant dense<0.000000e+00> : vector<8x16xf32>
    %54 = tpu.matmul %35, %53, %cst_41 {dimension_numbers = #tpu.dot_dimension_numbers<[1], [0], [0], [1], [0, 0, 1, 1], [], []>} : vector<8x32xbf16>, vector<32x16xbf16>, vector<8x16xf32> -> vector<8x16xf32>
    %c0_42 = arith.constant 0 : index
    %c0_43 = arith.constant 0 : index
    %c0_44 = arith.constant 0 : index
    %c0_45 = arith.constant 0 : index
    %55 = vector.load %arg13[%c0_42, %c0_43, %c0_44, %c0_45] : memref<2x2x1x16xf32, #tpu.memory_space<vmem>>, vector<1x1x1x16xf32>
    %56 = vector.shape_cast %55 : vector<1x1x1x16xf32> to vector<1x16xf32>
    %57 = vector.broadcast %56 : vector<1x16xf32> to vector<8x16xf32>
    %58 = arith.addf %54, %57 : vector<8x16xf32>
    %59 = arith.truncf %44 : vector<8x16xf32> to vector<8x16xbf16>
    %60 = arith.truncf %51 : vector<8x16xf32> to vector<8x16xbf16>
    %cst_46 = arith.constant dense<0.000000e+00> : vector<8x8xf32>
    %61 = tpu.matmul %59, %60, %cst_46 {dimension_numbers = #tpu.dot_dimension_numbers<[1], [1], [0], [0], [0, 0, 1, 0], [], []>} : vector<8x16xbf16>, vector<8x16xbf16>, vector<8x8xf32> -> vector<8x8xf32>
    %cst_47 = arith.constant 2.500000e-01 : f32
    %62 = vector.broadcast %cst_47 : f32 to vector<8x8xf32>
    %63 = arith.mulf %61, %62 : vector<8x8xf32>
    %cst_48 = arith.constant dense<0xFF800000> : vector<8xf32>
    %64 = vector.multi_reduction <maximumf>, %63, %cst_48 [1] : vector<8x8xf32> to vector<8xf32>
    %65 = vector.shape_cast %64 : vector<8xf32> to vector<8x1xf32>
    %66 = vector.broadcast %65 : vector<8x1xf32> to vector<8x8xf32>
    %67 = arith.subf %63, %66 : vector<8x8xf32>
    %68 = math.exp %67 : vector<8x8xf32>
    %cst_49 = arith.constant dense<0.000000e+00> : vector<8xf32>
    %69 = vector.multi_reduction <add>, %68, %cst_49 [1] : vector<8x8xf32> to vector<8xf32>
    %70 = vector.shape_cast %69 : vector<8xf32> to vector<8x1xf32>
    %71 = tpu.reciprocal %70 {approx = true} : vector<8x1xf32> -> vector<8x1xf32>
    %72 = vector.broadcast %71 : vector<8x1xf32> to vector<8x8xf32>
    %73 = arith.mulf %68, %72 : vector<8x8xf32>
    %74 = arith.truncf %73 : vector<8x8xf32> to vector<8x8xbf16>
    %75 = arith.truncf %58 : vector<8x16xf32> to vector<8x16xbf16>
    %cst_50 = arith.constant dense<0.000000e+00> : vector<8x16xf32>
    %76 = tpu.matmul %74, %75, %cst_50 {dimension_numbers = #tpu.dot_dimension_numbers<[1], [0], [0], [1], [0, 0, 1, 1], [], []>} : vector<8x8xbf16>, vector<8x16xbf16>, vector<8x16xf32> -> vector<8x16xf32>
    %77 = arith.truncf %76 : vector<8x16xf32> to vector<8x16xbf16>
    %c0_51 = arith.constant 0 : index
    %c0_52 = arith.constant 0 : index
    %c0_53 = arith.constant 0 : index
    %c0_54 = arith.constant 0 : index
    %78 = vector.load %arg14[%c0_51, %c0_52, %c0_53, %c0_54] : memref<2x2x16x32xbf16, #tpu.memory_space<vmem>>, vector<1x1x16x32xbf16>
    %79 = vector.shape_cast %78 : vector<1x1x16x32xbf16> to vector<16x32xbf16>
    %cst_55 = arith.constant dense<0.000000e+00> : vector<8x32xf32>
    %80 = tpu.matmul %77, %79, %cst_55 {dimension_numbers = #tpu.dot_dimension_numbers<[1], [0], [0], [1], [0, 0, 1, 1], [], []>} : vector<8x16xbf16>, vector<16x32xbf16>, vector<8x32xf32> -> vector<8x32xf32>
    %81 = vector.broadcast %37 : vector<1x32xf32> to vector<8x32xf32>
    %82 = arith.addf %81, %80 : vector<8x32xf32>
    %c0_56 = arith.constant 0 : index
    %c1 = arith.constant 1 : index
    %c0_57 = arith.constant 0 : index
    %c0_58 = arith.constant 0 : index
    %83 = vector.load %arg8[%c0_56, %c1, %c0_57, %c0_58] : memref<2x2x32x16xbf16, #tpu.memory_space<vmem>>, vector<1x1x32x16xbf16>
    %84 = vector.shape_cast %83 : vector<1x1x32x16xbf16> to vector<32x16xbf16>
    %cst_59 = arith.constant dense<0.000000e+00> : vector<8x16xf32>
    %85 = tpu.matmul %35, %84, %cst_59 {dimension_numbers = #tpu.dot_dimension_numbers<[1], [0], [0], [1], [0, 0, 1, 1], [], []>} : vector<8x32xbf16>, vector<32x16xbf16>, vector<8x16xf32> -> vector<8x16xf32>
    %c0_60 = arith.constant 0 : index
    %c1_61 = arith.constant 1 : index
    %c0_62 = arith.constant 0 : index
    %c0_63 = arith.constant 0 : index
    %86 = vector.load %arg11[%c0_60, %c1_61, %c0_62, %c0_63] : memref<2x2x1x16xf32, #tpu.memory_space<vmem>>, vector<1x1x1x16xf32>
    %87 = vector.shape_cast %86 : vector<1x1x1x16xf32> to vector<1x16xf32>
    %88 = vector.broadcast %87 : vector<1x16xf32> to vector<8x16xf32>
    %89 = arith.addf %85, %88 : vector<8x16xf32>
    %c0_64 = arith.constant 0 : index
    %c1_65 = arith.constant 1 : index
    %c0_66 = arith.constant 0 : index
    %c0_67 = arith.constant 0 : index
    %90 = vector.load %arg9[%c0_64, %c1_65, %c0_66, %c0_67] : memref<2x2x32x16xbf16, #tpu.memory_space<vmem>>, vector<1x1x32x16xbf16>
    %91 = vector.shape_cast %90 : vector<1x1x32x16xbf16> to vector<32x16xbf16>
    %cst_68 = arith.constant dense<0.000000e+00> : vector<8x16xf32>
    %92 = tpu.matmul %35, %91, %cst_68 {dimension_numbers = #tpu.dot_dimension_numbers<[1], [0], [0], [1], [0, 0, 1, 1], [], []>} : vector<8x32xbf16>, vector<32x16xbf16>, vector<8x16xf32> -> vector<8x16xf32>
    %c0_69 = arith.constant 0 : index
    %c1_70 = arith.constant 1 : index
    %c0_71 = arith.constant 0 : index
    %c0_72 = arith.constant 0 : index
    %93 = vector.load %arg12[%c0_69, %c1_70, %c0_71, %c0_72] : memref<2x2x1x16xf32, #tpu.memory_space<vmem>>, vector<1x1x1x16xf32>
    %94 = vector.shape_cast %93 : vector<1x1x1x16xf32> to vector<1x16xf32>
    %95 = vector.broadcast %94 : vector<1x16xf32> to vector<8x16xf32>
    %96 = arith.addf %92, %95 : vector<8x16xf32>
    %c0_73 = arith.constant 0 : index
    %c1_74 = arith.constant 1 : index
    %c0_75 = arith.constant 0 : index
    %c0_76 = arith.constant 0 : index
    %97 = vector.load %arg10[%c0_73, %c1_74, %c0_75, %c0_76] : memref<2x2x32x16xbf16, #tpu.memory_space<vmem>>, vector<1x1x32x16xbf16>
    %98 = vector.shape_cast %97 : vector<1x1x32x16xbf16> to vector<32x16xbf16>
    %cst_77 = arith.constant dense<0.000000e+00> : vector<8x16xf32>
    %99 = tpu.matmul %35, %98, %cst_77 {dimension_numbers = #tpu.dot_dimension_numbers<[1], [0], [0], [1], [0, 0, 1, 1], [], []>} : vector<8x32xbf16>, vector<32x16xbf16>, vector<8x16xf32> -> vector<8x16xf32>
    %c0_78 = arith.constant 0 : index
    %c1_79 = arith.constant 1 : index
    %c0_80 = arith.constant 0 : index
    %c0_81 = arith.constant 0 : index
    %100 = vector.load %arg13[%c0_78, %c1_79, %c0_80, %c0_81] : memref<2x2x1x16xf32, #tpu.memory_space<vmem>>, vector<1x1x1x16xf32>
    %101 = vector.shape_cast %100 : vector<1x1x1x16xf32> to vector<1x16xf32>
    %102 = vector.broadcast %101 : vector<1x16xf32> to vector<8x16xf32>
    %103 = arith.addf %99, %102 : vector<8x16xf32>
    %104 = arith.truncf %89 : vector<8x16xf32> to vector<8x16xbf16>
    %105 = arith.truncf %96 : vector<8x16xf32> to vector<8x16xbf16>
    %cst_82 = arith.constant dense<0.000000e+00> : vector<8x8xf32>
    %106 = tpu.matmul %104, %105, %cst_82 {dimension_numbers = #tpu.dot_dimension_numbers<[1], [1], [0], [0], [0, 0, 1, 0], [], []>} : vector<8x16xbf16>, vector<8x16xbf16>, vector<8x8xf32> -> vector<8x8xf32>
    %cst_83 = arith.constant 2.500000e-01 : f32
    %107 = vector.broadcast %cst_83 : f32 to vector<8x8xf32>
    %108 = arith.mulf %106, %107 : vector<8x8xf32>
    %cst_84 = arith.constant dense<0xFF800000> : vector<8xf32>
    %109 = vector.multi_reduction <maximumf>, %108, %cst_84 [1] : vector<8x8xf32> to vector<8xf32>
    %110 = vector.shape_cast %109 : vector<8xf32> to vector<8x1xf32>
    %111 = vector.broadcast %110 : vector<8x1xf32> to vector<8x8xf32>
    %112 = arith.subf %108, %111 : vector<8x8xf32>
    %113 = math.exp %112 : vector<8x8xf32>
    %cst_85 = arith.constant dense<0.000000e+00> : vector<8xf32>
    %114 = vector.multi_reduction <add>, %113, %cst_85 [1] : vector<8x8xf32> to vector<8xf32>
    %115 = vector.shape_cast %114 : vector<8xf32> to vector<8x1xf32>
    %116 = tpu.reciprocal %115 {approx = true} : vector<8x1xf32> -> vector<8x1xf32>
    %117 = vector.broadcast %116 : vector<8x1xf32> to vector<8x8xf32>
    %118 = arith.mulf %113, %117 : vector<8x8xf32>
    %119 = arith.truncf %118 : vector<8x8xf32> to vector<8x8xbf16>
    %120 = arith.truncf %103 : vector<8x16xf32> to vector<8x16xbf16>
    %cst_86 = arith.constant dense<0.000000e+00> : vector<8x16xf32>
    %121 = tpu.matmul %119, %120, %cst_86 {dimension_numbers = #tpu.dot_dimension_numbers<[1], [0], [0], [1], [0, 0, 1, 1], [], []>} : vector<8x8xbf16>, vector<8x16xbf16>, vector<8x16xf32> -> vector<8x16xf32>
    %122 = arith.truncf %121 : vector<8x16xf32> to vector<8x16xbf16>
    %c0_87 = arith.constant 0 : index
    %c1_88 = arith.constant 1 : index
    %c0_89 = arith.constant 0 : index
    %c0_90 = arith.constant 0 : index
    %123 = vector.load %arg14[%c0_87, %c1_88, %c0_89, %c0_90] : memref<2x2x16x32xbf16, #tpu.memory_space<vmem>>, vector<1x1x16x32xbf16>
    %124 = vector.shape_cast %123 : vector<1x1x16x32xbf16> to vector<16x32xbf16>
    %cst_91 = arith.constant dense<0.000000e+00> : vector<8x32xf32>
    %125 = tpu.matmul %122, %124, %cst_91 {dimension_numbers = #tpu.dot_dimension_numbers<[1], [0], [0], [1], [0, 0, 1, 1], [], []>} : vector<8x16xbf16>, vector<16x32xbf16>, vector<8x32xf32> -> vector<8x32xf32>
    %126 = arith.addf %82, %125 : vector<8x32xf32>
    %127 = arith.addf %34, %126 : vector<8x32xf32>
    %c0_92 = arith.constant 0 : index
    %c0_93 = arith.constant 0 : index
    %c0_94 = arith.constant 0 : index
    %128 = vector.load %arg16[%c0_92, %c0_93, %c0_94] : memref<2x1x32xf32, #tpu.memory_space<vmem>>, vector<1x1x32xf32>
    %129 = vector.shape_cast %128 : vector<1x1x32xf32> to vector<1x32xf32>
    %c0_95 = arith.constant 0 : index
    %c0_96 = arith.constant 0 : index
    %c0_97 = arith.constant 0 : index
    %130 = vector.load %arg17[%c0_95, %c0_96, %c0_97] : memref<2x1x32xf32, #tpu.memory_space<vmem>>, vector<1x1x32xf32>
    %131 = vector.shape_cast %130 : vector<1x1x32xf32> to vector<1x32xf32>
    %cst_98 = arith.constant dense<0.000000e+00> : vector<8xf32>
    %132 = vector.multi_reduction <add>, %127, %cst_98 [1] : vector<8x32xf32> to vector<8xf32>
    %133 = vector.shape_cast %132 : vector<8xf32> to vector<8x1xf32>
    %cst_99 = arith.constant 3.200000e+01 : f32
    %134 = vector.broadcast %cst_99 : f32 to vector<8x1xf32>
    %135 = arith.divf %133, %134 : vector<8x1xf32>
    %136 = vector.broadcast %135 : vector<8x1xf32> to vector<8x32xf32>
    %137 = arith.subf %127, %136 : vector<8x32xf32>
    %138 = arith.mulf %137, %137 : vector<8x32xf32>
    %cst_100 = arith.constant dense<0.000000e+00> : vector<8xf32>
    %139 = vector.multi_reduction <add>, %138, %cst_100 [1] : vector<8x32xf32> to vector<8xf32>
    %140 = vector.shape_cast %139 : vector<8xf32> to vector<8x1xf32>
    %cst_101 = arith.constant 3.200000e+01 : f32
    %141 = vector.broadcast %cst_101 : f32 to vector<8x1xf32>
    %142 = arith.divf %140, %141 : vector<8x1xf32>
    %cst_102 = arith.constant 9.99999996E-13 : f32
    %143 = vector.broadcast %cst_102 : f32 to vector<8x1xf32>
    %144 = arith.addf %142, %143 : vector<8x1xf32>
    %145 = math.rsqrt %144 : vector<8x1xf32>
    %146 = vector.broadcast %145 : vector<8x1xf32> to vector<8x32xf32>
    %147 = arith.mulf %137, %146 : vector<8x32xf32>
    %148 = vector.broadcast %129 : vector<1x32xf32> to vector<8x32xf32>
    %149 = arith.mulf %147, %148 : vector<8x32xf32>
    %150 = vector.broadcast %131 : vector<1x32xf32> to vector<8x32xf32>
    %151 = arith.addf %149, %150 : vector<8x32xf32>
    %152 = arith.truncf %151 : vector<8x32xf32> to vector<8x32xbf16>
    %c0_103 = arith.constant 0 : index
    %c0_104 = arith.constant 0 : index
    %c0_105 = arith.constant 0 : index
    %153 = vector.load %arg18[%c0_103, %c0_104, %c0_105] : memref<2x32x128xbf16, #tpu.memory_space<vmem>>, vector<1x32x128xbf16>
    %154 = vector.shape_cast %153 : vector<1x32x128xbf16> to vector<32x128xbf16>
    %cst_106 = arith.constant dense<0.000000e+00> : vector<8x128xf32>
    %155 = tpu.matmul %152, %154, %cst_106 {dimension_numbers = #tpu.dot_dimension_numbers<[1], [0], [0], [1], [0, 0, 1, 1], [], []>} : vector<8x32xbf16>, vector<32x128xbf16>, vector<8x128xf32> -> vector<8x128xf32>
    %c0_107 = arith.constant 0 : index
    %c0_108 = arith.constant 0 : index
    %c0_109 = arith.constant 0 : index
    %156 = vector.load %arg19[%c0_107, %c0_108, %c0_109] : memref<2x1x128xf32, #tpu.memory_space<vmem>>, vector<1x1x128xf32>
    %157 = vector.shape_cast %156 : vector<1x1x128xf32> to vector<1x128xf32>
    %158 = vector.broadcast %157 : vector<1x128xf32> to vector<8x128xf32>
    %159 = arith.addf %155, %158 : vector<8x128xf32>
    %cst_110 = arith.constant 5.000000e-01 : f32
    %160 = vector.broadcast %cst_110 : f32 to vector<8x128xf32>
    %161 = arith.mulf %160, %159 : vector<8x128xf32>
    %cst_111 = arith.constant 4.471500e-02 : f32
    %162 = vector.broadcast %cst_111 : f32 to vector<8x128xf32>
    %163 = arith.mulf %162, %159 : vector<8x128xf32>
    %164 = arith.mulf %163, %159 : vector<8x128xf32>
    %165 = arith.mulf %164, %159 : vector<8x128xf32>
    %166 = arith.addf %159, %165 : vector<8x128xf32>
    %cst_112 = arith.constant 0.797884583 : f32
    %167 = vector.broadcast %cst_112 : f32 to vector<8x128xf32>
    %168 = arith.mulf %167, %166 : vector<8x128xf32>
    %169 = math.tanh %168 : vector<8x128xf32>
    %cst_113 = arith.constant 1.000000e+00 : f32
    %170 = vector.broadcast %cst_113 : f32 to vector<8x128xf32>
    %171 = arith.addf %170, %169 : vector<8x128xf32>
    %172 = arith.mulf %161, %171 : vector<8x128xf32>
    %173 = arith.truncf %172 : vector<8x128xf32> to vector<8x128xbf16>
    %c0_114 = arith.constant 0 : index
    %c0_115 = arith.constant 0 : index
    %c0_116 = arith.constant 0 : index
    %174 = vector.load %arg20[%c0_114, %c0_115, %c0_116] : memref<2x128x32xbf16, #tpu.memory_space<vmem>>, vector<1x128x32xbf16>
    %175 = vector.shape_cast %174 : vector<1x128x32xbf16> to vector<128x32xbf16>
    %cst_117 = arith.constant dense<0.000000e+00> : vector<8x32xf32>
    %176 = tpu.matmul %173, %175, %cst_117 {dimension_numbers = #tpu.dot_dimension_numbers<[1], [0], [0], [1], [0, 0, 1, 1], [], []>} : vector<8x128xbf16>, vector<128x32xbf16>, vector<8x32xf32> -> vector<8x32xf32>
    %c0_118 = arith.constant 0 : index
    %c0_119 = arith.constant 0 : index
    %c0_120 = arith.constant 0 : index
    %177 = vector.load %arg21[%c0_118, %c0_119, %c0_120] : memref<2x1x32xf32, #tpu.memory_space<vmem>>, vector<1x1x32xf32>
    %178 = vector.shape_cast %177 : vector<1x1x32xf32> to vector<1x32xf32>
    %179 = vector.broadcast %178 : vector<1x32xf32> to vector<8x32xf32>
    %180 = arith.addf %176, %179 : vector<8x32xf32>
    %181 = arith.addf %151, %180 : vector<8x32xf32>
    %c0_121 = arith.constant 0 : index
    %c0_122 = arith.constant 0 : index
    %c0_123 = arith.constant 0 : index
    %182 = vector.load %arg22[%c0_121, %c0_122, %c0_123] : memref<2x1x32xf32, #tpu.memory_space<vmem>>, vector<1x1x32xf32>
    %183 = vector.shape_cast %182 : vector<1x1x32xf32> to vector<1x32xf32>
    %c0_124 = arith.constant 0 : index
    %c0_125 = arith.constant 0 : index
    %c0_126 = arith.constant 0 : index
    %184 = vector.load %arg23[%c0_124, %c0_125, %c0_126] : memref<2x1x32xf32, #tpu.memory_space<vmem>>, vector<1x1x32xf32>
    %185 = vector.shape_cast %184 : vector<1x1x32xf32> to vector<1x32xf32>
    %cst_127 = arith.constant dense<0.000000e+00> : vector<8xf32>
    %186 = vector.multi_reduction <add>, %181, %cst_127 [1] : vector<8x32xf32> to vector<8xf32>
    %187 = vector.shape_cast %186 : vector<8xf32> to vector<8x1xf32>
    %cst_128 = arith.constant 3.200000e+01 : f32
    %188 = vector.broadcast %cst_128 : f32 to vector<8x1xf32>
    %189 = arith.divf %187, %188 : vector<8x1xf32>
    %190 = vector.broadcast %189 : vector<8x1xf32> to vector<8x32xf32>
    %191 = arith.subf %181, %190 : vector<8x32xf32>
    %192 = arith.mulf %191, %191 : vector<8x32xf32>
    %cst_129 = arith.constant dense<0.000000e+00> : vector<8xf32>
    %193 = vector.multi_reduction <add>, %192, %cst_129 [1] : vector<8x32xf32> to vector<8xf32>
    %194 = vector.shape_cast %193 : vector<8xf32> to vector<8x1xf32>
    %cst_130 = arith.constant 3.200000e+01 : f32
    %195 = vector.broadcast %cst_130 : f32 to vector<8x1xf32>
    %196 = arith.divf %194, %195 : vector<8x1xf32>
    %cst_131 = arith.constant 9.99999996E-13 : f32
    %197 = vector.broadcast %cst_131 : f32 to vector<8x1xf32>
    %198 = arith.addf %196, %197 : vector<8x1xf32>
    %199 = math.rsqrt %198 : vector<8x1xf32>
    %200 = vector.broadcast %199 : vector<8x1xf32> to vector<8x32xf32>
    %201 = arith.mulf %191, %200 : vector<8x32xf32>
    %202 = vector.broadcast %183 : vector<1x32xf32> to vector<8x32xf32>
    %203 = arith.mulf %201, %202 : vector<8x32xf32>
    %204 = vector.broadcast %185 : vector<1x32xf32> to vector<8x32xf32>
    %205 = arith.addf %203, %204 : vector<8x32xf32>
    %206 = arith.truncf %205 : vector<8x32xf32> to vector<8x32xbf16>
    %c1_132 = arith.constant 1 : index
    %c0_133 = arith.constant 0 : index
    %c0_134 = arith.constant 0 : index
    %207 = vector.load %arg15[%c1_132, %c0_133, %c0_134] : memref<2x1x32xf32, #tpu.memory_space<vmem>>, vector<1x1x32xf32>
    %208 = vector.shape_cast %207 : vector<1x1x32xf32> to vector<1x32xf32>
    %c1_135 = arith.constant 1 : index
    %c0_136 = arith.constant 0 : index
    %c0_137 = arith.constant 0 : index
    %c0_138 = arith.constant 0 : index
    %209 = vector.load %arg8[%c1_135, %c0_136, %c0_137, %c0_138] : memref<2x2x32x16xbf16, #tpu.memory_space<vmem>>, vector<1x1x32x16xbf16>
    %210 = vector.shape_cast %209 : vector<1x1x32x16xbf16> to vector<32x16xbf16>
    %cst_139 = arith.constant dense<0.000000e+00> : vector<8x16xf32>
    %211 = tpu.matmul %206, %210, %cst_139 {dimension_numbers = #tpu.dot_dimension_numbers<[1], [0], [0], [1], [0, 0, 1, 1], [], []>} : vector<8x32xbf16>, vector<32x16xbf16>, vector<8x16xf32> -> vector<8x16xf32>
    %c1_140 = arith.constant 1 : index
    %c0_141 = arith.constant 0 : index
    %c0_142 = arith.constant 0 : index
    %c0_143 = arith.constant 0 : index
    %212 = vector.load %arg11[%c1_140, %c0_141, %c0_142, %c0_143] : memref<2x2x1x16xf32, #tpu.memory_space<vmem>>, vector<1x1x1x16xf32>
    %213 = vector.shape_cast %212 : vector<1x1x1x16xf32> to vector<1x16xf32>
    %214 = vector.broadcast %213 : vector<1x16xf32> to vector<8x16xf32>
    %215 = arith.addf %211, %214 : vector<8x16xf32>
    %c1_144 = arith.constant 1 : index
    %c0_145 = arith.constant 0 : index
    %c0_146 = arith.constant 0 : index
    %c0_147 = arith.constant 0 : index
    %216 = vector.load %arg9[%c1_144, %c0_145, %c0_146, %c0_147] : memref<2x2x32x16xbf16, #tpu.memory_space<vmem>>, vector<1x1x32x16xbf16>
    %217 = vector.shape_cast %216 : vector<1x1x32x16xbf16> to vector<32x16xbf16>
    %cst_148 = arith.constant dense<0.000000e+00> : vector<8x16xf32>
    %218 = tpu.matmul %206, %217, %cst_148 {dimension_numbers = #tpu.dot_dimension_numbers<[1], [0], [0], [1], [0, 0, 1, 1], [], []>} : vector<8x32xbf16>, vector<32x16xbf16>, vector<8x16xf32> -> vector<8x16xf32>
    %c1_149 = arith.constant 1 : index
    %c0_150 = arith.constant 0 : index
    %c0_151 = arith.constant 0 : index
    %c0_152 = arith.constant 0 : index
    %219 = vector.load %arg12[%c1_149, %c0_150, %c0_151, %c0_152] : memref<2x2x1x16xf32, #tpu.memory_space<vmem>>, vector<1x1x1x16xf32>
    %220 = vector.shape_cast %219 : vector<1x1x1x16xf32> to vector<1x16xf32>
    %221 = vector.broadcast %220 : vector<1x16xf32> to vector<8x16xf32>
    %222 = arith.addf %218, %221 : vector<8x16xf32>
    %c1_153 = arith.constant 1 : index
    %c0_154 = arith.constant 0 : index
    %c0_155 = arith.constant 0 : index
    %c0_156 = arith.constant 0 : index
    %223 = vector.load %arg10[%c1_153, %c0_154, %c0_155, %c0_156] : memref<2x2x32x16xbf16, #tpu.memory_space<vmem>>, vector<1x1x32x16xbf16>
    %224 = vector.shape_cast %223 : vector<1x1x32x16xbf16> to vector<32x16xbf16>
    %cst_157 = arith.constant dense<0.000000e+00> : vector<8x16xf32>
    %225 = tpu.matmul %206, %224, %cst_157 {dimension_numbers = #tpu.dot_dimension_numbers<[1], [0], [0], [1], [0, 0, 1, 1], [], []>} : vector<8x32xbf16>, vector<32x16xbf16>, vector<8x16xf32> -> vector<8x16xf32>
    %c1_158 = arith.constant 1 : index
    %c0_159 = arith.constant 0 : index
    %c0_160 = arith.constant 0 : index
    %c0_161 = arith.constant 0 : index
    %226 = vector.load %arg13[%c1_158, %c0_159, %c0_160, %c0_161] : memref<2x2x1x16xf32, #tpu.memory_space<vmem>>, vector<1x1x1x16xf32>
    %227 = vector.shape_cast %226 : vector<1x1x1x16xf32> to vector<1x16xf32>
    %228 = vector.broadcast %227 : vector<1x16xf32> to vector<8x16xf32>
    %229 = arith.addf %225, %228 : vector<8x16xf32>
    %230 = arith.truncf %215 : vector<8x16xf32> to vector<8x16xbf16>
    %231 = arith.truncf %222 : vector<8x16xf32> to vector<8x16xbf16>
    %cst_162 = arith.constant dense<0.000000e+00> : vector<8x8xf32>
    %232 = tpu.matmul %230, %231, %cst_162 {dimension_numbers = #tpu.dot_dimension_numbers<[1], [1], [0], [0], [0, 0, 1, 0], [], []>} : vector<8x16xbf16>, vector<8x16xbf16>, vector<8x8xf32> -> vector<8x8xf32>
    %cst_163 = arith.constant 2.500000e-01 : f32
    %233 = vector.broadcast %cst_163 : f32 to vector<8x8xf32>
    %234 = arith.mulf %232, %233 : vector<8x8xf32>
    %cst_164 = arith.constant dense<0xFF800000> : vector<8xf32>
    %235 = vector.multi_reduction <maximumf>, %234, %cst_164 [1] : vector<8x8xf32> to vector<8xf32>
    %236 = vector.shape_cast %235 : vector<8xf32> to vector<8x1xf32>
    %237 = vector.broadcast %236 : vector<8x1xf32> to vector<8x8xf32>
    %238 = arith.subf %234, %237 : vector<8x8xf32>
    %239 = math.exp %238 : vector<8x8xf32>
    %cst_165 = arith.constant dense<0.000000e+00> : vector<8xf32>
    %240 = vector.multi_reduction <add>, %239, %cst_165 [1] : vector<8x8xf32> to vector<8xf32>
    %241 = vector.shape_cast %240 : vector<8xf32> to vector<8x1xf32>
    %242 = tpu.reciprocal %241 {approx = true} : vector<8x1xf32> -> vector<8x1xf32>
    %243 = vector.broadcast %242 : vector<8x1xf32> to vector<8x8xf32>
    %244 = arith.mulf %239, %243 : vector<8x8xf32>
    %245 = arith.truncf %244 : vector<8x8xf32> to vector<8x8xbf16>
    %246 = arith.truncf %229 : vector<8x16xf32> to vector<8x16xbf16>
    %cst_166 = arith.constant dense<0.000000e+00> : vector<8x16xf32>
    %247 = tpu.matmul %245, %246, %cst_166 {dimension_numbers = #tpu.dot_dimension_numbers<[1], [0], [0], [1], [0, 0, 1, 1], [], []>} : vector<8x8xbf16>, vector<8x16xbf16>, vector<8x16xf32> -> vector<8x16xf32>
    %248 = arith.truncf %247 : vector<8x16xf32> to vector<8x16xbf16>
    %c1_167 = arith.constant 1 : index
    %c0_168 = arith.constant 0 : index
    %c0_169 = arith.constant 0 : index
    %c0_170 = arith.constant 0 : index
    %249 = vector.load %arg14[%c1_167, %c0_168, %c0_169, %c0_170] : memref<2x2x16x32xbf16, #tpu.memory_space<vmem>>, vector<1x1x16x32xbf16>
    %250 = vector.shape_cast %249 : vector<1x1x16x32xbf16> to vector<16x32xbf16>
    %cst_171 = arith.constant dense<0.000000e+00> : vector<8x32xf32>
    %251 = tpu.matmul %248, %250, %cst_171 {dimension_numbers = #tpu.dot_dimension_numbers<[1], [0], [0], [1], [0, 0, 1, 1], [], []>} : vector<8x16xbf16>, vector<16x32xbf16>, vector<8x32xf32> -> vector<8x32xf32>
    %252 = vector.broadcast %208 : vector<1x32xf32> to vector<8x32xf32>
    %253 = arith.addf %252, %251 : vector<8x32xf32>
    %c1_172 = arith.constant 1 : index
    %c1_173 = arith.constant 1 : index
    %c0_174 = arith.constant 0 : index
    %c0_175 = arith.constant 0 : index
    %254 = vector.load %arg8[%c1_172, %c1_173, %c0_174, %c0_175] : memref<2x2x32x16xbf16, #tpu.memory_space<vmem>>, vector<1x1x32x16xbf16>
    %255 = vector.shape_cast %254 : vector<1x1x32x16xbf16> to vector<32x16xbf16>
    %cst_176 = arith.constant dense<0.000000e+00> : vector<8x16xf32>
    %256 = tpu.matmul %206, %255, %cst_176 {dimension_numbers = #tpu.dot_dimension_numbers<[1], [0], [0], [1], [0, 0, 1, 1], [], []>} : vector<8x32xbf16>, vector<32x16xbf16>, vector<8x16xf32> -> vector<8x16xf32>
    %c1_177 = arith.constant 1 : index
    %c1_178 = arith.constant 1 : index
    %c0_179 = arith.constant 0 : index
    %c0_180 = arith.constant 0 : index
    %257 = vector.load %arg11[%c1_177, %c1_178, %c0_179, %c0_180] : memref<2x2x1x16xf32, #tpu.memory_space<vmem>>, vector<1x1x1x16xf32>
    %258 = vector.shape_cast %257 : vector<1x1x1x16xf32> to vector<1x16xf32>
    %259 = vector.broadcast %258 : vector<1x16xf32> to vector<8x16xf32>
    %260 = arith.addf %256, %259 : vector<8x16xf32>
    %c1_181 = arith.constant 1 : index
    %c1_182 = arith.constant 1 : index
    %c0_183 = arith.constant 0 : index
    %c0_184 = arith.constant 0 : index
    %261 = vector.load %arg9[%c1_181, %c1_182, %c0_183, %c0_184] : memref<2x2x32x16xbf16, #tpu.memory_space<vmem>>, vector<1x1x32x16xbf16>
    %262 = vector.shape_cast %261 : vector<1x1x32x16xbf16> to vector<32x16xbf16>
    %cst_185 = arith.constant dense<0.000000e+00> : vector<8x16xf32>
    %263 = tpu.matmul %206, %262, %cst_185 {dimension_numbers = #tpu.dot_dimension_numbers<[1], [0], [0], [1], [0, 0, 1, 1], [], []>} : vector<8x32xbf16>, vector<32x16xbf16>, vector<8x16xf32> -> vector<8x16xf32>
    %c1_186 = arith.constant 1 : index
    %c1_187 = arith.constant 1 : index
    %c0_188 = arith.constant 0 : index
    %c0_189 = arith.constant 0 : index
    %264 = vector.load %arg12[%c1_186, %c1_187, %c0_188, %c0_189] : memref<2x2x1x16xf32, #tpu.memory_space<vmem>>, vector<1x1x1x16xf32>
    %265 = vector.shape_cast %264 : vector<1x1x1x16xf32> to vector<1x16xf32>
    %266 = vector.broadcast %265 : vector<1x16xf32> to vector<8x16xf32>
    %267 = arith.addf %263, %266 : vector<8x16xf32>
    %c1_190 = arith.constant 1 : index
    %c1_191 = arith.constant 1 : index
    %c0_192 = arith.constant 0 : index
    %c0_193 = arith.constant 0 : index
    %268 = vector.load %arg10[%c1_190, %c1_191, %c0_192, %c0_193] : memref<2x2x32x16xbf16, #tpu.memory_space<vmem>>, vector<1x1x32x16xbf16>
    %269 = vector.shape_cast %268 : vector<1x1x32x16xbf16> to vector<32x16xbf16>
    %cst_194 = arith.constant dense<0.000000e+00> : vector<8x16xf32>
    %270 = tpu.matmul %206, %269, %cst_194 {dimension_numbers = #tpu.dot_dimension_numbers<[1], [0], [0], [1], [0, 0, 1, 1], [], []>} : vector<8x32xbf16>, vector<32x16xbf16>, vector<8x16xf32> -> vector<8x16xf32>
    %c1_195 = arith.constant 1 : index
    %c1_196 = arith.constant 1 : index
    %c0_197 = arith.constant 0 : index
    %c0_198 = arith.constant 0 : index
    %271 = vector.load %arg13[%c1_195, %c1_196, %c0_197, %c0_198] : memref<2x2x1x16xf32, #tpu.memory_space<vmem>>, vector<1x1x1x16xf32>
    %272 = vector.shape_cast %271 : vector<1x1x1x16xf32> to vector<1x16xf32>
    %273 = vector.broadcast %272 : vector<1x16xf32> to vector<8x16xf32>
    %274 = arith.addf %270, %273 : vector<8x16xf32>
    %275 = arith.truncf %260 : vector<8x16xf32> to vector<8x16xbf16>
    %276 = arith.truncf %267 : vector<8x16xf32> to vector<8x16xbf16>
    %cst_199 = arith.constant dense<0.000000e+00> : vector<8x8xf32>
    %277 = tpu.matmul %275, %276, %cst_199 {dimension_numbers = #tpu.dot_dimension_numbers<[1], [1], [0], [0], [0, 0, 1, 0], [], []>} : vector<8x16xbf16>, vector<8x16xbf16>, vector<8x8xf32> -> vector<8x8xf32>
    %cst_200 = arith.constant 2.500000e-01 : f32
    %278 = vector.broadcast %cst_200 : f32 to vector<8x8xf32>
    %279 = arith.mulf %277, %278 : vector<8x8xf32>
    %cst_201 = arith.constant dense<0xFF800000> : vector<8xf32>
    %280 = vector.multi_reduction <maximumf>, %279, %cst_201 [1] : vector<8x8xf32> to vector<8xf32>
    %281 = vector.shape_cast %280 : vector<8xf32> to vector<8x1xf32>
    %282 = vector.broadcast %281 : vector<8x1xf32> to vector<8x8xf32>
    %283 = arith.subf %279, %282 : vector<8x8xf32>
    %284 = math.exp %283 : vector<8x8xf32>
    %cst_202 = arith.constant dense<0.000000e+00> : vector<8xf32>
    %285 = vector.multi_reduction <add>, %284, %cst_202 [1] : vector<8x8xf32> to vector<8xf32>
    %286 = vector.shape_cast %285 : vector<8xf32> to vector<8x1xf32>
    %287 = tpu.reciprocal %286 {approx = true} : vector<8x1xf32> -> vector<8x1xf32>
    %288 = vector.broadcast %287 : vector<8x1xf32> to vector<8x8xf32>
    %289 = arith.mulf %284, %288 : vector<8x8xf32>
    %290 = arith.truncf %289 : vector<8x8xf32> to vector<8x8xbf16>
    %291 = arith.truncf %274 : vector<8x16xf32> to vector<8x16xbf16>
    %cst_203 = arith.constant dense<0.000000e+00> : vector<8x16xf32>
    %292 = tpu.matmul %290, %291, %cst_203 {dimension_numbers = #tpu.dot_dimension_numbers<[1], [0], [0], [1], [0, 0, 1, 1], [], []>} : vector<8x8xbf16>, vector<8x16xbf16>, vector<8x16xf32> -> vector<8x16xf32>
    %293 = arith.truncf %292 : vector<8x16xf32> to vector<8x16xbf16>
    %c1_204 = arith.constant 1 : index
    %c1_205 = arith.constant 1 : index
    %c0_206 = arith.constant 0 : index
    %c0_207 = arith.constant 0 : index
    %294 = vector.load %arg14[%c1_204, %c1_205, %c0_206, %c0_207] : memref<2x2x16x32xbf16, #tpu.memory_space<vmem>>, vector<1x1x16x32xbf16>
    %295 = vector.shape_cast %294 : vector<1x1x16x32xbf16> to vector<16x32xbf16>
    %cst_208 = arith.constant dense<0.000000e+00> : vector<8x32xf32>
    %296 = tpu.matmul %293, %295, %cst_208 {dimension_numbers = #tpu.dot_dimension_numbers<[1], [0], [0], [1], [0, 0, 1, 1], [], []>} : vector<8x16xbf16>, vector<16x32xbf16>, vector<8x32xf32> -> vector<8x32xf32>
    %297 = arith.addf %253, %296 : vector<8x32xf32>
    %298 = arith.addf %205, %297 : vector<8x32xf32>
    %c1_209 = arith.constant 1 : index
    %c0_210 = arith.constant 0 : index
    %c0_211 = arith.constant 0 : index
    %299 = vector.load %arg16[%c1_209, %c0_210, %c0_211] : memref<2x1x32xf32, #tpu.memory_space<vmem>>, vector<1x1x32xf32>
    %300 = vector.shape_cast %299 : vector<1x1x32xf32> to vector<1x32xf32>
    %c1_212 = arith.constant 1 : index
    %c0_213 = arith.constant 0 : index
    %c0_214 = arith.constant 0 : index
    %301 = vector.load %arg17[%c1_212, %c0_213, %c0_214] : memref<2x1x32xf32, #tpu.memory_space<vmem>>, vector<1x1x32xf32>
    %302 = vector.shape_cast %301 : vector<1x1x32xf32> to vector<1x32xf32>
    %cst_215 = arith.constant dense<0.000000e+00> : vector<8xf32>
    %303 = vector.multi_reduction <add>, %298, %cst_215 [1] : vector<8x32xf32> to vector<8xf32>
    %304 = vector.shape_cast %303 : vector<8xf32> to vector<8x1xf32>
    %cst_216 = arith.constant 3.200000e+01 : f32
    %305 = vector.broadcast %cst_216 : f32 to vector<8x1xf32>
    %306 = arith.divf %304, %305 : vector<8x1xf32>
    %307 = vector.broadcast %306 : vector<8x1xf32> to vector<8x32xf32>
    %308 = arith.subf %298, %307 : vector<8x32xf32>
    %309 = arith.mulf %308, %308 : vector<8x32xf32>
    %cst_217 = arith.constant dense<0.000000e+00> : vector<8xf32>
    %310 = vector.multi_reduction <add>, %309, %cst_217 [1] : vector<8x32xf32> to vector<8xf32>
    %311 = vector.shape_cast %310 : vector<8xf32> to vector<8x1xf32>
    %cst_218 = arith.constant 3.200000e+01 : f32
    %312 = vector.broadcast %cst_218 : f32 to vector<8x1xf32>
    %313 = arith.divf %311, %312 : vector<8x1xf32>
    %cst_219 = arith.constant 9.99999996E-13 : f32
    %314 = vector.broadcast %cst_219 : f32 to vector<8x1xf32>
    %315 = arith.addf %313, %314 : vector<8x1xf32>
    %316 = math.rsqrt %315 : vector<8x1xf32>
    %317 = vector.broadcast %316 : vector<8x1xf32> to vector<8x32xf32>
    %318 = arith.mulf %308, %317 : vector<8x32xf32>
    %319 = vector.broadcast %300 : vector<1x32xf32> to vector<8x32xf32>
    %320 = arith.mulf %318, %319 : vector<8x32xf32>
    %321 = vector.broadcast %302 : vector<1x32xf32> to vector<8x32xf32>
    %322 = arith.addf %320, %321 : vector<8x32xf32>
    %323 = arith.truncf %322 : vector<8x32xf32> to vector<8x32xbf16>
    %c1_220 = arith.constant 1 : index
    %c0_221 = arith.constant 0 : index
    %c0_222 = arith.constant 0 : index
    %324 = vector.load %arg18[%c1_220, %c0_221, %c0_222] : memref<2x32x128xbf16, #tpu.memory_space<vmem>>, vector<1x32x128xbf16>
    %325 = vector.shape_cast %324 : vector<1x32x128xbf16> to vector<32x128xbf16>
    %cst_223 = arith.constant dense<0.000000e+00> : vector<8x128xf32>
    %326 = tpu.matmul %323, %325, %cst_223 {dimension_numbers = #tpu.dot_dimension_numbers<[1], [0], [0], [1], [0, 0, 1, 1], [], []>} : vector<8x32xbf16>, vector<32x128xbf16>, vector<8x128xf32> -> vector<8x128xf32>
    %c1_224 = arith.constant 1 : index
    %c0_225 = arith.constant 0 : index
    %c0_226 = arith.constant 0 : index
    %327 = vector.load %arg19[%c1_224, %c0_225, %c0_226] : memref<2x1x128xf32, #tpu.memory_space<vmem>>, vector<1x1x128xf32>
    %328 = vector.shape_cast %327 : vector<1x1x128xf32> to vector<1x128xf32>
    %329 = vector.broadcast %328 : vector<1x128xf32> to vector<8x128xf32>
    %330 = arith.addf %326, %329 : vector<8x128xf32>
    %cst_227 = arith.constant 5.000000e-01 : f32
    %331 = vector.broadcast %cst_227 : f32 to vector<8x128xf32>
    %332 = arith.mulf %331, %330 : vector<8x128xf32>
    %cst_228 = arith.constant 4.471500e-02 : f32
    %333 = vector.broadcast %cst_228 : f32 to vector<8x128xf32>
    %334 = arith.mulf %333, %330 : vector<8x128xf32>
    %335 = arith.mulf %334, %330 : vector<8x128xf32>
    %336 = arith.mulf %335, %330 : vector<8x128xf32>
    %337 = arith.addf %330, %336 : vector<8x128xf32>
    %cst_229 = arith.constant 0.797884583 : f32
    %338 = vector.broadcast %cst_229 : f32 to vector<8x128xf32>
    %339 = arith.mulf %338, %337 : vector<8x128xf32>
    %340 = math.tanh %339 : vector<8x128xf32>
    %cst_230 = arith.constant 1.000000e+00 : f32
    %341 = vector.broadcast %cst_230 : f32 to vector<8x128xf32>
    %342 = arith.addf %341, %340 : vector<8x128xf32>
    %343 = arith.mulf %332, %342 : vector<8x128xf32>
    %344 = arith.truncf %343 : vector<8x128xf32> to vector<8x128xbf16>
    %c1_231 = arith.constant 1 : index
    %c0_232 = arith.constant 0 : index
    %c0_233 = arith.constant 0 : index
    %345 = vector.load %arg20[%c1_231, %c0_232, %c0_233] : memref<2x128x32xbf16, #tpu.memory_space<vmem>>, vector<1x128x32xbf16>
    %346 = vector.shape_cast %345 : vector<1x128x32xbf16> to vector<128x32xbf16>
    %cst_234 = arith.constant dense<0.000000e+00> : vector<8x32xf32>
    %347 = tpu.matmul %344, %346, %cst_234 {dimension_numbers = #tpu.dot_dimension_numbers<[1], [0], [0], [1], [0, 0, 1, 1], [], []>} : vector<8x128xbf16>, vector<128x32xbf16>, vector<8x32xf32> -> vector<8x32xf32>
    %c1_235 = arith.constant 1 : index
    %c0_236 = arith.constant 0 : index
    %c0_237 = arith.constant 0 : index
    %348 = vector.load %arg21[%c1_235, %c0_236, %c0_237] : memref<2x1x32xf32, #tpu.memory_space<vmem>>, vector<1x1x32xf32>
    %349 = vector.shape_cast %348 : vector<1x1x32xf32> to vector<1x32xf32>
    %350 = vector.broadcast %349 : vector<1x32xf32> to vector<8x32xf32>
    %351 = arith.addf %347, %350 : vector<8x32xf32>
    %352 = arith.addf %322, %351 : vector<8x32xf32>
    %c1_238 = arith.constant 1 : index
    %c0_239 = arith.constant 0 : index
    %c0_240 = arith.constant 0 : index
    %353 = vector.load %arg22[%c1_238, %c0_239, %c0_240] : memref<2x1x32xf32, #tpu.memory_space<vmem>>, vector<1x1x32xf32>
    %354 = vector.shape_cast %353 : vector<1x1x32xf32> to vector<1x32xf32>
    %c1_241 = arith.constant 1 : index
    %c0_242 = arith.constant 0 : index
    %c0_243 = arith.constant 0 : index
    %355 = vector.load %arg23[%c1_241, %c0_242, %c0_243] : memref<2x1x32xf32, #tpu.memory_space<vmem>>, vector<1x1x32xf32>
    %356 = vector.shape_cast %355 : vector<1x1x32xf32> to vector<1x32xf32>
    %cst_244 = arith.constant dense<0.000000e+00> : vector<8xf32>
    %357 = vector.multi_reduction <add>, %352, %cst_244 [1] : vector<8x32xf32> to vector<8xf32>
    %358 = vector.shape_cast %357 : vector<8xf32> to vector<8x1xf32>
    %cst_245 = arith.constant 3.200000e+01 : f32
    %359 = vector.broadcast %cst_245 : f32 to vector<8x1xf32>
    %360 = arith.divf %358, %359 : vector<8x1xf32>
    %361 = vector.broadcast %360 : vector<8x1xf32> to vector<8x32xf32>
    %362 = arith.subf %352, %361 : vector<8x32xf32>
    %363 = arith.mulf %362, %362 : vector<8x32xf32>
    %cst_246 = arith.constant dense<0.000000e+00> : vector<8xf32>
    %364 = vector.multi_reduction <add>, %363, %cst_246 [1] : vector<8x32xf32> to vector<8xf32>
    %365 = vector.shape_cast %364 : vector<8xf32> to vector<8x1xf32>
    %cst_247 = arith.constant 3.200000e+01 : f32
    %366 = vector.broadcast %cst_247 : f32 to vector<8x1xf32>
    %367 = arith.divf %365, %366 : vector<8x1xf32>
    %cst_248 = arith.constant 9.99999996E-13 : f32
    %368 = vector.broadcast %cst_248 : f32 to vector<8x1xf32>
    %369 = arith.addf %367, %368 : vector<8x1xf32>
    %370 = math.rsqrt %369 : vector<8x1xf32>
    %371 = vector.broadcast %370 : vector<8x1xf32> to vector<8x32xf32>
    %372 = arith.mulf %362, %371 : vector<8x32xf32>
    %373 = vector.broadcast %354 : vector<1x32xf32> to vector<8x32xf32>
    %374 = arith.mulf %372, %373 : vector<8x32xf32>
    %375 = vector.broadcast %356 : vector<1x32xf32> to vector<8x32xf32>
    %376 = arith.addf %374, %375 : vector<8x32xf32>
    %377 = arith.truncf %376 : vector<8x32xf32> to vector<8x32xbf16>
    %c0_249 = arith.constant 0 : index
    %c0_250 = arith.constant 0 : index
    %378 = vector.load %arg24[%c0_249, %c0_250] : memref<32x128xbf16, #tpu.memory_space<vmem>>, vector<32x128xbf16>
    %cst_251 = arith.constant dense<0.000000e+00> : vector<8x128xf32>
    %379 = tpu.matmul %377, %378, %cst_251 {dimension_numbers = #tpu.dot_dimension_numbers<[1], [0], [0], [1], [0, 0, 1, 1], [], []>} : vector<8x32xbf16>, vector<32x128xbf16>, vector<8x128xf32> -> vector<8x128xf32>
    %c0_252 = arith.constant 0 : index
    %c0_253 = arith.constant 0 : index
    %380 = vector.load %arg25[%c0_252, %c0_253] : memref<1x128xf32, #tpu.memory_space<vmem>>, vector<1x128xf32>
    %381 = vector.broadcast %380 : vector<1x128xf32> to vector<8x128xf32>
    %382 = arith.addf %379, %381 : vector<8x128xf32>
    %c0_254 = arith.constant 0 : index
    %c0_255 = arith.constant 0 : index
    %383 = vector.load %arg26[%c0_254, %c0_255] : memref<8x128xf32, #tpu.memory_space<vmem>>, vector<8x128xf32>
    tpu.vector_store %arg26[%c0_254, %c0_255], %382 {strides = array<i32>} : memref<8x128xf32, #tpu.memory_space<vmem>>, vector<8x128xf32>,
    %c0_256 = arith.constant 0 : index
    %c0_257 = arith.constant 0 : index
    %384 = vector.load %arg2[%c0_256, %c0_257] : memref<8x1xi32, #tpu.memory_space<vmem>>, vector<8x1xi32>
    %385 = tpu.iota {dimensions = array<i32: 1>} : vector<8x128xi32>
    %c8_i32 = arith.constant 8 : i32
    %386 = vector.broadcast %c8_i32 : i32 to vector<8x128xi32>
    %387 = arith.cmpi slt, %385, %386 : vector<8x128xi32>
    %cst_258 = arith.constant -1.000000e+30 : f32
    %388 = vector.broadcast %cst_258 : f32 to vector<8x128xf32>
    %389 = arith.select %387, %382, %388 : vector<8x128xi1>, vector<8x128xf32>
    %cst_259 = arith.constant dense<0xFF800000> : vector<8xf32>
    %390 = vector.multi_reduction <maximumf>, %389, %cst_259 [1] : vector<8x128xf32> to vector<8xf32>
    %391 = vector.shape_cast %390 : vector<8xf32> to vector<8x1xf32>
    %392 = vector.broadcast %391 : vector<8x1xf32> to vector<8x128xf32>
    %393 = arith.subf %389, %392 : vector<8x128xf32>
    %394 = math.exp %393 : vector<8x128xf32>
    %cst_260 = arith.constant dense<0.000000e+00> : vector<8xf32>
    %395 = vector.multi_reduction <add>, %394, %cst_260 [1] : vector<8x128xf32> to vector<8xf32>
    %396 = vector.shape_cast %395 : vector<8xf32> to vector<8x1xf32>
    %397 = math.log %396 : vector<8x1xf32>
    %398 = arith.addf %397, %391 : vector<8x1xf32>
    %399 = vector.broadcast %384 : vector<8x1xi32> to vector<8x128xi32>
    %400 = arith.cmpi eq, %385, %399 : vector<8x128xi32>
    %cst_261 = arith.constant 0.000000e+00 : f32
    %401 = vector.broadcast %cst_261 : f32 to vector<8x128xf32>
    %402 = arith.select %400, %382, %401 : vector<8x128xi1>, vector<8x128xf32>
    %cst_262 = arith.constant dense<0.000000e+00> : vector<8xf32>
    %403 = vector.multi_reduction <add>, %402, %cst_262 [1] : vector<8x128xf32> to vector<8xf32>
    %404 = vector.shape_cast %403 : vector<8xf32> to vector<8x1xf32>
    %c-100_i32 = arith.constant -100 : i32
    %405 = vector.broadcast %c-100_i32 : i32 to vector<8x1xi32>
    %406 = arith.cmpi ne, %384, %405 : vector<8x1xi32>
    %407 = arith.extui %406 : vector<8x1xi1> to vector<8x1xi32>
    %408 = arith.sitofp %407 : vector<8x1xi32> to vector<8x1xf32>
    %409 = arith.subf %398, %404 : vector<8x1xf32>
    %410 = arith.mulf %409, %408 : vector<8x1xf32>
    %411 = vector.shape_cast %410 : vector<8x1xf32> to vector<1x8x1xf32>
    %cst_263 = arith.constant dense<0.000000e+00> : vector<1xf32>
    %412 = vector.multi_reduction <add>, %411, %cst_263 [1, 2] : vector<1x8x1xf32> to vector<1xf32>
    %413 = vector.shape_cast %412 : vector<1xf32> to vector<1x1x1xf32>
    %414 = vector.extract %413[0, 0, 0] : f32 from vector<1x1x1xf32>
    %415 = vector.shape_cast %408 : vector<8x1xf32> to vector<1x8x1xf32>
    %cst_264 = arith.constant dense<0.000000e+00> : vector<1xf32>
    %416 = vector.multi_reduction <add>, %415, %cst_264 [1, 2] : vector<1x8x1xf32> to vector<1xf32>
    %417 = vector.shape_cast %416 : vector<1xf32> to vector<1x1x1xf32>
    %418 = vector.extract %417[0, 0, 0] : f32 from vector<1x1x1xf32>
    %419 = tpu.iota {dimensions = array<i32: 2>} : vector<1x8x128xi32>
    %c0_i32 = arith.constant 0 : i32
    %420 = vector.broadcast %c0_i32 : i32 to vector<1x8x128xi32>
    %421 = arith.cmpi eq, %419, %420 : vector<1x8x128xi32>
    %c1_i32 = arith.constant 1 : i32
    %422 = vector.broadcast %c1_i32 : i32 to vector<1x8x128xi32>
    %423 = arith.cmpi eq, %419, %422 : vector<1x8x128xi32>
    %cst_265 = arith.constant 0.000000e+00 : f32
    %424 = vector.broadcast %418 : f32 to vector<1x8x128xf32>
    %425 = vector.broadcast %cst_265 : f32 to vector<1x8x128xf32>
    %426 = arith.select %423, %424, %425 : vector<1x8x128xi1>, vector<1x8x128xf32>
    %427 = vector.broadcast %414 : f32 to vector<1x8x128xf32>
    %428 = arith.select %421, %427, %426 : vector<1x8x128xi1>, vector<1x8x128xf32>
    %c0_266 = arith.constant 0 : index
    %c0_267 = arith.constant 0 : index
    %c0_268 = arith.constant 0 : index
    %429 = vector.load %arg27[%c0_266, %c0_267, %c0_268] : memref<1x8x128xf32, #tpu.memory_space<vmem>>, vector<1x8x128xf32>
    tpu.vector_store %arg27[%c0_266, %c0_267, %c0_268], %428 {strides = array<i32>} : memref<1x8x128xf32, #tpu.memory_space<vmem>>, vector<1x8x128xf32>,
    return
  }
  func.func @transform_0(%arg0: i32) -> (i32, i32) {
    %c0_i32 = arith.constant 0 : i32
    %c0_i32_0 = arith.constant 0 : i32
    return %arg0, %c0_i32 : i32, i32
  }
  func.func @transform_1(%arg0: i32) -> (i32, i32) {
    %c0_i32 = arith.constant 0 : i32
    %c0_i32_0 = arith.constant 0 : i32
    return %arg0, %c0_i32 : i32, i32
  }
  func.func @transform_2(%arg0: i32) -> (i32, i32) {
    %c0_i32 = arith.constant 0 : i32
    %c0_i32_0 = arith.constant 0 : i32
    %c0_i32_1 = arith.constant 0 : i32
    return %c0_i32, %c0_i32_0 : i32, i32
  }
  func.func @transform_3(%arg0: i32) -> (i32, i32) {
    %c0_i32 = arith.constant 0 : i32
    %c0_i32_0 = arith.constant 0 : i32
    %c0_i32_1 = arith.constant 0 : i32
    return %c0_i32, %c0_i32_0 : i32, i32
  }
  func.func @transform_4(%arg0: i32) -> (i32, i32) {
    %c0_i32 = arith.constant 0 : i32
    %c0_i32_0 = arith.constant 0 : i32
    %c0_i32_1 = arith.constant 0 : i32
    return %c0_i32, %c0_i32_0 : i32, i32
  }
  func.func @transform_5(%arg0: i32) -> (i32, i32) {
    %c0_i32 = arith.constant 0 : i32
    %c0_i32_0 = arith.constant 0 : i32
    %c0_i32_1 = arith.constant 0 : i32
    return %c0_i32, %c0_i32_0 : i32, i32
  }
  func.func @transform_6(%arg0: i32) -> (i32, i32) {
    %c0_i32 = arith.constant 0 : i32
    %c0_i32_0 = arith.constant 0 : i32
    %c0_i32_1 = arith.constant 0 : i32
    return %c0_i32, %c0_i32_0 : i32, i32
  }
  func.func @transform_7(%arg0: i32) -> (i32, i32, i32, i32) {
    %c0_i32 = arith.constant 0 : i32
    %c0_i32_0 = arith.constant 0 : i32
    %c0_i32_1 = arith.constant 0 : i32
    %c0_i32_2 = arith.constant 0 : i32
    %c0_i32_3 = arith.constant 0 : i32
    return %c0_i32, %c0_i32_0, %c0_i32_1, %c0_i32_2 : i32, i32, i32, i32
  }
  func.func @transform_8(%arg0: i32) -> (i32, i32, i32, i32) {
    %c0_i32 = arith.constant 0 : i32
    %c0_i32_0 = arith.constant 0 : i32
    %c0_i32_1 = arith.constant 0 : i32
    %c0_i32_2 = arith.constant 0 : i32
    %c0_i32_3 = arith.constant 0 : i32
    return %c0_i32, %c0_i32_0, %c0_i32_1, %c0_i32_2 : i32, i32, i32, i32
  }
  func.func @transform_9(%arg0: i32) -> (i32, i32, i32, i32) {
    %c0_i32 = arith.constant 0 : i32
    %c0_i32_0 = arith.constant 0 : i32
    %c0_i32_1 = arith.constant 0 : i32
    %c0_i32_2 = arith.constant 0 : i32
    %c0_i32_3 = arith.constant 0 : i32
    return %c0_i32, %c0_i32_0, %c0_i32_1, %c0_i32_2 : i32, i32, i32, i32
  }
  func.func @transform_10(%arg0: i32) -> (i32, i32, i32, i32) {
    %c0_i32 = arith.constant 0 : i32
    %c0_i32_0 = arith.constant 0 : i32
    %c0_i32_1 = arith.constant 0 : i32
    %c0_i32_2 = arith.constant 0 : i32
    %c0_i32_3 = arith.constant 0 : i32
    return %c0_i32, %c0_i32_0, %c0_i32_1, %c0_i32_2 : i32, i32, i32, i32
  }
  func.func @transform_11(%arg0: i32) -> (i32, i32, i32, i32) {
    %c0_i32 = arith.constant 0 : i32
    %c0_i32_0 = arith.constant 0 : i32
    %c0_i32_1 = arith.constant 0 : i32
    %c0_i32_2 = arith.constant 0 : i32
    %c0_i32_3 = arith.constant 0 : i32
    return %c0_i32, %c0_i32_0, %c0_i32_1, %c0_i32_2 : i32, i32, i32, i32
  }
  func.func @transform_12(%arg0: i32) -> (i32, i32, i32, i32) {
    %c0_i32 = arith.constant 0 : i32
    %c0_i32_0 = arith.constant 0 : i32
    %c0_i32_1 = arith.constant 0 : i32
    %c0_i32_2 = arith.constant 0 : i32
    %c0_i32_3 = arith.constant 0 : i32
    return %c0_i32, %c0_i32_0, %c0_i32_1, %c0_i32_2 : i32, i32, i32, i32
  }
  func.func @transform_13(%arg0: i32) -> (i32, i32, i32, i32) {
    %c0_i32 = arith.constant 0 : i32
    %c0_i32_0 = arith.constant 0 : i32
    %c0_i32_1 = arith.constant 0 : i32
    %c0_i32_2 = arith.constant 0 : i32
    %c0_i32_3 = arith.constant 0 : i32
    return %c0_i32, %c0_i32_0, %c0_i32_1, %c0_i32_2 : i32, i32, i32, i32
  }
  func.func @transform_14(%arg0: i32) -> (i32, i32, i32) {
    %c0_i32 = arith.constant 0 : i32
    %c0_i32_0 = arith.constant 0 : i32
    %c0_i32_1 = arith.constant 0 : i32
    %c0_i32_2 = arith.constant 0 : i32
    return %c0_i32, %c0_i32_0, %c0_i32_1 : i32, i32, i32
  }
  func.func @transform_15(%arg0: i32) -> (i32, i32, i32) {
    %c0_i32 = arith.constant 0 : i32
    %c0_i32_0 = arith.constant 0 : i32
    %c0_i32_1 = arith.constant 0 : i32
    %c0_i32_2 = arith.constant 0 : i32
    return %c0_i32, %c0_i32_0, %c0_i32_1 : i32, i32, i32
  }
  func.func @transform_16(%arg0: i32) -> (i32, i32, i32) {
    %c0_i32 = arith.constant 0 : i32
    %c0_i32_0 = arith.constant 0 : i32
    %c0_i32_1 = arith.constant 0 : i32
    %c0_i32_2 = arith.constant 0 : i32
    return %c0_i32, %c0_i32_0, %c0_i32_1 : i32, i32, i32
  }
  func.func @transform_17(%arg0: i32) -> (i32, i32, i32) {
    %c0_i32 = arith.constant 0 : i32
    %c0_i32_0 = arith.constant 0 : i32
    %c0_i32_1 = arith.constant 0 : i32
    %c0_i32_2 = arith.constant 0 : i32
    return %c0_i32, %c0_i32_0, %c0_i32_1 : i32, i32, i32
  }
  func.func @transform_18(%arg0: i32) -> (i32, i32, i32) {
    %c0_i32 = arith.constant 0 : i32
    %c0_i32_0 = arith.constant 0 : i32
    %c0_i32_1 = arith.constant 0 : i32
    %c0_i32_2 = arith.constant 0 : i32
    return %c0_i32, %c0_i32_0, %c0_i32_1 : i32, i32, i32
  }
  func.func @transform_19(%arg0: i32) -> (i32, i32, i32) {
    %c0_i32 = arith.constant 0 : i32
    %c0_i32_0 = arith.constant 0 : i32
    %c0_i32_1 = arith.constant 0 : i32
    %c0_i32_2 = arith.constant 0 : i32
    return %c0_i32, %c0_i32_0, %c0_i32_1 : i32, i32, i32
  }
  func.func @transform_20(%arg0: i32) -> (i32, i32, i32) {
    %c0_i32 = arith.constant 0 : i32
    %c0_i32_0 = arith.constant 0 : i32
    %c0_i32_1 = arith.constant 0 : i32
    %c0_i32_2 = arith.constant 0 : i32
    return %c0_i32, %c0_i32_0, %c0_i32_1 : i32, i32, i32
  }
  func.func @transform_21(%arg0: i32) -> (i32, i32, i32) {
    %c0_i32 = arith.constant 0 : i32
    %c0_i32_0 = arith.constant 0 : i32
    %c0_i32_1 = arith.constant 0 : i32
    %c0_i32_2 = arith.constant 0 : i32
    return %c0_i32, %c0_i32_0, %c0_i32_1 : i32, i32, i32
  }
  func.func @transform_22(%arg0: i32) -> (i32, i32, i32) {
    %c0_i32 = arith.constant 0 : i32
    %c0_i32_0 = arith.constant 0 : i32
    %c0_i32_1 = arith.constant 0 : i32
    %c0_i32_2 = arith.constant 0 : i32
    return %c0_i32, %c0_i32_0, %c0_i32_1 : i32, i32, i32
  }
  func.func @transform_23(%arg0: i32) -> (i32, i32) {
    %c0_i32 = arith.constant 0 : i32
    %c0_i32_0 = arith.constant 0 : i32
    %c0_i32_1 = arith.constant 0 : i32
    return %c0_i32, %c0_i32_0 : i32, i32
  }
  func.func @transform_24(%arg0: i32) -> (i32, i32) {
    %c0_i32 = arith.constant 0 : i32
    %c0_i32_0 = arith.constant 0 : i32
    %c0_i32_1 = arith.constant 0 : i32
    return %c0_i32, %c0_i32_0 : i32, i32
  }
  func.func @transform_25(%arg0: i32) -> (i32, i32) {
    %c0_i32 = arith.constant 0 : i32
    %c0_i32_0 = arith.constant 0 : i32
    return %arg0, %c0_i32 : i32, i32
  }
  func.func @transform_26(%arg0: i32) -> (i32, i32, i32) {
    %c0_i32 = arith.constant 0 : i32
    %c0_i32_0 = arith.constant 0 : i32
    %c0_i32_1 = arith.constant 0 : i32
    return %arg0, %c0_i32, %c0_i32_0 : i32, i32, i32
  }
}

</mosaic_0001>

<llo_original>
// kernel: tpu_custom_call.1
$region0: #{tpu_custom_call.1}
  #allocation0 [shape = 'u32[]', space=smem, size = 0x4, offset = 0x4, fixed_abs, tag = 'smem constant byte address 0x4 - core index']
  #allocation1 [shape = 'u32[144,128]{1,0:T(1,128)}', space=vmem, size = 0x12000, scoped, tag = 'internal scratch']
  %s0 = inlined_call_operand.vmem [shape: s32[16,1], index: 0, kind: input, shape index: {}]
  %s1 = inlined_call_operand.vmem [shape: s32[16,1], index: 1, kind: input, shape index: {}]
  %s2 = inlined_call_operand.vmem [shape: f32[64,32], index: 2, kind: input, shape index: {}]
  %s3 = inlined_call_operand.vmem [shape: f32[8,32], index: 3, kind: input, shape index: {}]
  %s4 = inlined_call_operand.vmem [shape: f32[1,32], index: 4, kind: input, shape index: {}]
  %s5 = inlined_call_operand.vmem [shape: f32[1,32], index: 5, kind: input, shape index: {}]
  %s6 = inlined_call_operand.vmem [shape: f32[1,32], index: 6, kind: input, shape index: {}]
  %s7 = inlined_call_operand.vmem [shape: bf16[2,2,32,16], index: 7, kind: input, shape index: {}]
  %s8 = inlined_call_operand.vmem [shape: bf16[2,2,32,16], index: 8, kind: input, shape index: {}]
  %s9 = inlined_call_operand.vmem [shape: bf16[2,2,32,16], index: 9, kind: input, shape index: {}]
  %s10 = inlined_call_operand.vmem [shape: f32[2,2,1,16], index: 10, kind: input, shape index: {}]
  %s11 = inlined_call_operand.vmem [shape: f32[2,2,1,16], index: 11, kind: input, shape index: {}]
  %s12 = inlined_call_operand.vmem [shape: f32[2,2,1,16], index: 12, kind: input, shape index: {}]
  %s13 = inlined_call_operand.vmem [shape: bf16[2,2,16,32], index: 13, kind: input, shape index: {}]
  %s14 = inlined_call_operand.vmem [shape: f32[2,1,32], index: 14, kind: input, shape index: {}]
  %s15 = inlined_call_operand.vmem [shape: f32[2,1,32], index: 15, kind: input, shape index: {}]
  %s16 = inlined_call_operand.vmem [shape: f32[2,1,32], index: 16, kind: input, shape index: {}]
  %s17 = inlined_call_operand.vmem [shape: bf16[2,32,128], index: 17, kind: input, shape index: {}]
  %s18 = inlined_call_operand.vmem [shape: f32[2,1,128], index: 18, kind: input, shape index: {}]
  %s19 = inlined_call_operand.vmem [shape: bf16[2,128,32], index: 19, kind: input, shape index: {}]
  %s20 = inlined_call_operand.vmem [shape: f32[2,1,32], index: 20, kind: input, shape index: {}]
  %s21 = inlined_call_operand.vmem [shape: f32[2,1,32], index: 21, kind: input, shape index: {}]
  %s22 = inlined_call_operand.vmem [shape: f32[2,1,32], index: 22, kind: input, shape index: {}]
  %s23 = inlined_call_operand.vmem [shape: bf16[32,128], index: 23, kind: input, shape index: {}]
  %s24 = inlined_call_operand.vmem [shape: f32[1,128], index: 24, kind: input, shape index: {}]
  %s25 = inlined_call_operand.hbm [shape: f32[16,128], index: 25, kind: output, shape index: {0}]
  %s26 = inlined_call_operand.hbm [shape: f32[2,8,128], index: 26, kind: output, shape index: {1}]
  %27 = xla_tuple %s25, %s26
  %s28 = sld [smem:[#allocation0]]
  $region141: #{tpu_custom_call.1} parent=0
    _
  %s30 = ssub.s32 1, %s28
  %s31 = scalar_select 0, %s30, %s28
  $region1: #{tpu_custom_call.1} parent=0
    #allocation2 [shape = 'u8[8192]{0}', space=vmem, size = 0x2000, scoped, tag = 'output window, operand 0']
    #allocation3 [shape = 's32[2]{0}', space=sflag, size = 0x8, scoped, tag = 'scoped memory for tpu_custom_call.1']
    #allocation4 [shape = 'u8[8192]{0}', space=vmem, size = 0x2000, scoped, tag = 'output window, operand 1']
    #allocation5 [shape = 's32[2]{0}', space=sflag, size = 0x8, scoped, tag = 'scoped memory for tpu_custom_call.1']
    %32 = vsyncpa [#allocation3], 0
    %s33 = scalar_lea.sflag [#allocation3], 1
    %34 = vsyncpa %s33, 0
    %35 = vsyncpa [#allocation5], 0
    %s36 = scalar_lea.sflag [#allocation5], 1
    %37 = vsyncpa %s36, 0
    loop: start=0, step=1, limit=4
    $region2: #{tpu_custom_call.1} parent=1 // loop_pre_header
      _
    $region3: #{tpu_custom_call.1} parent=1 // loop_header
      %s39 = sphi 0, %s43
      %p40 = scmp.ge.s32.totalorder %s39, 4
      %s49 = sphi 0, %s51
      %s52 = sphi 0, %s49
      %s53 = sphi 0, %s52
      %s69 = sphi 0, %s53
      %s75 = sphi 0, %s77
      %s78 = sphi 0, %s75
      %s79 = sphi 0, %s78
      %s95 = sphi 0, %s79
      %s99 = sphi 0, %s99
      %s101 = sphi 0, %s99
      %s102 = sphi 0, %s101
      %s116 = sphi 0, %s102
      %s120 = sphi 0, %s120
      %s122 = sphi 0, %s120
      %s123 = sphi 0, %s122
      %s137 = sphi 0, %s123
      %s141 = sphi 0, %s141
      %s143 = sphi 0, %s141
      %s144 = sphi 0, %s143
      %s158 = sphi 0, %s144
      %s162 = sphi 0, %s162
      %s164 = sphi 0, %s162
      %s165 = sphi 0, %s164
      %s179 = sphi 0, %s165
      %s183 = sphi 0, %s183
      %s185 = sphi 0, %s183
      %s186 = sphi 0, %s185
      %s200 = sphi 0, %s186
      %s204 = sphi 0, %s204
      %s206 = sphi 0, %s204
      %s207 = sphi 0, %s206
      %s221 = sphi 0, %s207
      %s225 = sphi 0, %s225
      %s227 = sphi 0, %s225
      %s228 = sphi 0, %s227
      %s242 = sphi 0, %s228
      %s246 = sphi 0, %s246
      %s248 = sphi 0, %s246
      %s249 = sphi 0, %s248
      %s263 = sphi 0, %s249
      %s267 = sphi 0, %s267
      %s269 = sphi 0, %s267
      %s270 = sphi 0, %s269
      %s284 = sphi 0, %s270
      %s288 = sphi 0, %s288
      %s290 = sphi 0, %s288
      %s291 = sphi 0, %s290
      %s305 = sphi 0, %s291
      %s309 = sphi 0, %s309
      %s311 = sphi 0, %s309
      %s312 = sphi 0, %s311
      %s326 = sphi 0, %s312
      %s330 = sphi 0, %s330
      %s332 = sphi 0, %s330
      %s333 = sphi 0, %s332
      %s347 = sphi 0, %s333
      %s351 = sphi 0, %s351
      %s353 = sphi 0, %s351
      %s354 = sphi 0, %s353
      %s368 = sphi 0, %s354
      %s372 = sphi 0, %s372
      %s374 = sphi 0, %s372
      %s375 = sphi 0, %s374
      %s389 = sphi 0, %s375
      %s393 = sphi 0, %s393
      %s395 = sphi 0, %s393
      %s396 = sphi 0, %s395
      %s410 = sphi 0, %s396
      %s414 = sphi 0, %s414
      %s416 = sphi 0, %s414
      %s417 = sphi 0, %s416
      %s431 = sphi 0, %s417
      %s435 = sphi 0, %s435
      %s437 = sphi 0, %s435
      %s438 = sphi 0, %s437
      %s452 = sphi 0, %s438
      %s456 = sphi 0, %s456
      %s458 = sphi 0, %s456
      %s459 = sphi 0, %s458
      %s473 = sphi 0, %s459
      %s477 = sphi 0, %s477
      %s479 = sphi 0, %s477
      %s480 = sphi 0, %s479
      %s494 = sphi 0, %s480
      %s498 = sphi 0, %s498
      %s500 = sphi 0, %s498
      %s501 = sphi 0, %s500
      %s515 = sphi 0, %s501
      %s519 = sphi 0, %s519
      %s521 = sphi 0, %s519
      %s522 = sphi 0, %s521
      %s536 = sphi 0, %s522
      %s540 = sphi 0, %s540
      %s542 = sphi 0, %s540
      %s543 = sphi 0, %s542
      %s557 = sphi 0, %s543
      %s561 = sphi 0, %s561
      %s563 = sphi 0, %s561
      %s564 = sphi 0, %s563
      %s578 = sphi 0, %s564
      %s584 = sphi 0, %s586
      %s587 = sphi 0, %s584
      %s588 = sphi 0, %s587
      %s604 = sphi 0, %s588
      %s610 = sphi 0, %s612
      %s613 = sphi 0, %s610
      %s614 = sphi 0, %s613
      %s630 = sphi 0, %s614
    $region4: #{tpu_custom_call.1} parent=1 // loop_header_branch
      %42 = sbr.rel (%p40) target = $region8
    $region5: #{tpu_custom_call.1} parent=1 // loop_body
      %s44 = ssub.s32 %s39, 1
      %s45 = ssub.s32 %s39, 2
      %s46 = sadd.s32 %s39, 1
      %s47 = ssub.s32 %s39, %s46
      %p48 = scmp.eq.s32.totalorder %s47, 0
      %s50 = sadd.s32 %s49, 1
      %s51 = scalar_select %p48, %s49, %s50
      %p54 = pneg %p48
      %p55 = scmp.eq.s32.totalorder %s39, 1
      %p56 = por %p54, %p55
      %p57 = scmp.ne.s32.totalorder %s49, %s52
      %p58 = scmp.eq.s32.totalorder %s39, 0
      %p59 = por %p57, %p58
      %p60 = scmp.ne.s32.totalorder %s49, %s52
      %p61 = scmp.eq.s32.totalorder %s44, 1
      %p62 = por %p60, %p61
      %p63 = scmp.ne.s32.totalorder %s52, %s53
      %p64 = scmp.eq.s32.totalorder %s44, 0
      %p65 = por %p63, %p64
      %p66 = scmp.ne.s32.totalorder %s52, %s53
      %p67 = scmp.eq.s32.totalorder %s45, 1
      %p68 = por %p66, %p67
      %p70 = scmp.ne.s32.totalorder %s53, %s69
      %p71 = scmp.eq.s32.totalorder %s45, 0
      %p72 = por %p70, %p71
      %s73 = ssub.s32 %s39, %s46
      %p74 = scmp.eq.s32.totalorder %s73, 0
      %s76 = sadd.s32 %s75, 1
      %s77 = scalar_select %p74, %s75, %s76
      %p80 = pneg %p74
      %p81 = scmp.eq.s32.totalorder %s39, 1
      %p82 = por %p80, %p81
      %p83 = scmp.ne.s32.totalorder %s75, %s78
      %p84 = scmp.eq.s32.totalorder %s39, 0
      %p85 = por %p83, %p84
      %p86 = scmp.ne.s32.totalorder %s75, %s78
      %p87 = scmp.eq.s32.totalorder %s44, 1
      %p88 = por %p86, %p87
      %p89 = scmp.ne.s32.totalorder %s78, %s79
      %p90 = scmp.eq.s32.totalorder %s44, 0
      %p91 = por %p89, %p90
      %p92 = scmp.ne.s32.totalorder %s78, %s79
      %p93 = scmp.eq.s32.totalorder %s45, 1
      %p94 = por %p92, %p93
      %p96 = scmp.ne.s32.totalorder %s79, %s95
      %p97 = scmp.eq.s32.totalorder %s45, 0
      %p98 = por %p96, %p97
      %s100 = sadd.s32 %s99, 1
      %p103 = scmp.eq.s32.totalorder %s39, 1
      %p104 = scmp.ne.s32.totalorder %s99, %s101
      %p105 = scmp.eq.s32.totalorder %s39, 0
      %p106 = por %p104, %p105
      %p107 = scmp.ne.s32.totalorder %s99, %s101
      %p108 = scmp.eq.s32.totalorder %s44, 1
      %p109 = por %p107, %p108
      %p110 = scmp.ne.s32.totalorder %s101, %s102
      %p111 = scmp.eq.s32.totalorder %s44, 0
      %p112 = por %p110, %p111
      %p113 = scmp.ne.s32.totalorder %s101, %s102
      %p114 = scmp.eq.s32.totalorder %s45, 1
      %p115 = por %p113, %p114
      %p117 = scmp.ne.s32.totalorder %s102, %s116
      %p118 = scmp.eq.s32.totalorder %s45, 0
      %p119 = por %p117, %p118
      %s121 = sadd.s32 %s120, 1
      %p124 = scmp.eq.s32.totalorder %s39, 1
      %p125 = scmp.ne.s32.totalorder %s120, %s122
      %p126 = scmp.eq.s32.totalorder %s39, 0
      %p127 = por %p125, %p126
      %p128 = scmp.ne.s32.totalorder %s120, %s122
      %p129 = scmp.eq.s32.totalorder %s44, 1
      %p130 = por %p128, %p129
      %p131 = scmp.ne.s32.totalorder %s122, %s123
      %p132 = scmp.eq.s32.totalorder %s44, 0
      %p133 = por %p131, %p132
      %p134 = scmp.ne.s32.totalorder %s122, %s123
      %p135 = scmp.eq.s32.totalorder %s45, 1
      %p136 = por %p134, %p135
      %p138 = scmp.ne.s32.totalorder %s123, %s137
      %p139 = scmp.eq.s32.totalorder %s45, 0
      %p140 = por %p138, %p139
      %s142 = sadd.s32 %s141, 1
      %p145 = scmp.eq.s32.totalorder %s39, 1
      %p146 = scmp.ne.s32.totalorder %s141, %s143
      %p147 = scmp.eq.s32.totalorder %s39, 0
      %p148 = por %p146, %p147
      %p149 = scmp.ne.s32.totalorder %s141, %s143
      %p150 = scmp.eq.s32.totalorder %s44, 1
      %p151 = por %p149, %p150
      %p152 = scmp.ne.s32.totalorder %s143, %s144
      %p153 = scmp.eq.s32.totalorder %s44, 0
      %p154 = por %p152, %p153
      %p155 = scmp.ne.s32.totalorder %s143, %s144
      %p156 = scmp.eq.s32.totalorder %s45, 1
      %p157 = por %p155, %p156
      %p159 = scmp.ne.s32.totalorder %s144, %s158
      %p160 = scmp.eq.s32.totalorder %s45, 0
      %p161 = por %p159, %p160
      %s163 = sadd.s32 %s162, 1
      %p166 = scmp.eq.s32.totalorder %s39, 1
      %p167 = scmp.ne.s32.totalorder %s162, %s164
      %p168 = scmp.eq.s32.totalorder %s39, 0
      %p169 = por %p167, %p168
      %p170 = scmp.ne.s32.totalorder %s162, %s164
      %p171 = scmp.eq.s32.totalorder %s44, 1
      %p172 = por %p170, %p171
      %p173 = scmp.ne.s32.totalorder %s164, %s165
      %p174 = scmp.eq.s32.totalorder %s44, 0
      %p175 = por %p173, %p174
      %p176 = scmp.ne.s32.totalorder %s164, %s165
      %p177 = scmp.eq.s32.totalorder %s45, 1
      %p178 = por %p176, %p177
      %p180 = scmp.ne.s32.totalorder %s165, %s179
      %p181 = scmp.eq.s32.totalorder %s45, 0
      %p182 = por %p180, %p181
      %s184 = sadd.s32 %s183, 1
      %p187 = scmp.eq.s32.totalorder %s39, 1
      %p188 = scmp.ne.s32.totalorder %s183, %s185
      %p189 = scmp.eq.s32.totalorder %s39, 0
      %p190 = por %p188, %p189
      %p191 = scmp.ne.s32.totalorder %s183, %s185
      %p192 = scmp.eq.s32.totalorder %s44, 1
      %p193 = por %p191, %p192
      %p194 = scmp.ne.s32.totalorder %s185, %s186
      %p195 = scmp.eq.s32.totalorder %s44, 0
      %p196 = por %p194, %p195
      %p197 = scmp.ne.s32.totalorder %s185, %s186
      %p198 = scmp.eq.s32.totalorder %s45, 1
      %p199 = por %p197, %p198
      %p201 = scmp.ne.s32.totalorder %s186, %s200
      %p202 = scmp.eq.s32.totalorder %s45, 0
      %p203 = por %p201, %p202
      %s205 = sadd.s32 %s204, 1
      %p208 = scmp.eq.s32.totalorder %s39, 1
      %p209 = scmp.ne.s32.totalorder %s204, %s206
      %p210 = scmp.eq.s32.totalorder %s39, 0
      %p211 = por %p209, %p210
      %p212 = scmp.ne.s32.totalorder %s204, %s206
      %p213 = scmp.eq.s32.totalorder %s44, 1
      %p214 = por %p212, %p213
      %p215 = scmp.ne.s32.totalorder %s206, %s207
      %p216 = scmp.eq.s32.totalorder %s44, 0
      %p217 = por %p215, %p216
      %p218 = scmp.ne.s32.totalorder %s206, %s207
      %p219 = scmp.eq.s32.totalorder %s45, 1
      %p220 = por %p218, %p219
      %p222 = scmp.ne.s32.totalorder %s207, %s221
      %p223 = scmp.eq.s32.totalorder %s45, 0
      %p224 = por %p222, %p223
      %s226 = sadd.s32 %s225, 1
      %p229 = scmp.eq.s32.totalorder %s39, 1
      %p230 = scmp.ne.s32.totalorder %s225, %s227
      %p231 = scmp.eq.s32.totalorder %s39, 0
      %p232 = por %p230, %p231
      %p233 = scmp.ne.s32.totalorder %s225, %s227
      %p234 = scmp.eq.s32.totalorder %s44, 1
      %p235 = por %p233, %p234
      %p236 = scmp.ne.s32.totalorder %s227, %s228
      %p237 = scmp.eq.s32.totalorder %s44, 0
      %p238 = por %p236, %p237
      %p239 = scmp.ne.s32.totalorder %s227, %s228
      %p240 = scmp.eq.s32.totalorder %s45, 1
      %p241 = por %p239, %p240
      %p243 = scmp.ne.s32.totalorder %s228, %s242
      %p244 = scmp.eq.s32.totalorder %s45, 0
      %p245 = por %p243, %p244
      %s247 = sadd.s32 %s246, 1
      %p250 = scmp.eq.s32.totalorder %s39, 1
      %p251 = scmp.ne.s32.totalorder %s246, %s248
      %p252 = scmp.eq.s32.totalorder %s39, 0
      %p253 = por %p251, %p252
      %p254 = scmp.ne.s32.totalorder %s246, %s248
      %p255 = scmp.eq.s32.totalorder %s44, 1
      %p256 = por %p254, %p255
      %p257 = scmp.ne.s32.totalorder %s248, %s249
      %p258 = scmp.eq.s32.totalorder %s44, 0
      %p259 = por %p257, %p258
      %p260 = scmp.ne.s32.totalorder %s248, %s249
      %p261 = scmp.eq.s32.totalorder %s45, 1
      %p262 = por %p260, %p261
      %p264 = scmp.ne.s32.totalorder %s249, %s263
      %p265 = scmp.eq.s32.totalorder %s45, 0
      %p266 = por %p264, %p265
      %s268 = sadd.s32 %s267, 1
      %p271 = scmp.eq.s32.totalorder %s39, 1
      %p272 = scmp.ne.s32.totalorder %s267, %s269
      %p273 = scmp.eq.s32.totalorder %s39, 0
      %p274 = por %p272, %p273
      %p275 = scmp.ne.s32.totalorder %s267, %s269
      %p276 = scmp.eq.s32.totalorder %s44, 1
      %p277 = por %p275, %p276
      %p278 = scmp.ne.s32.totalorder %s269, %s270
      %p279 = scmp.eq.s32.totalorder %s44, 0
      %p280 = por %p278, %p279
      %p281 = scmp.ne.s32.totalorder %s269, %s270
      %p282 = scmp.eq.s32.totalorder %s45, 1
      %p283 = por %p281, %p282
      %p285 = scmp.ne.s32.totalorder %s270, %s284
      %p286 = scmp.eq.s32.totalorder %s45, 0
      %p287 = por %p285, %p286
      %s289 = sadd.s32 %s288, 1
      %p292 = scmp.eq.s32.totalorder %s39, 1
      %p293 = scmp.ne.s32.totalorder %s288, %s290
      %p294 = scmp.eq.s32.totalorder %s39, 0
      %p295 = por %p293, %p294
      %p296 = scmp.ne.s32.totalorder %s288, %s290
      %p297 = scmp.eq.s32.totalorder %s44, 1
      %p298 = por %p296, %p297
      %p299 = scmp.ne.s32.totalorder %s290, %s291
      %p300 = scmp.eq.s32.totalorder %s44, 0
      %p301 = por %p299, %p300
      %p302 = scmp.ne.s32.totalorder %s290, %s291
      %p303 = scmp.eq.s32.totalorder %s45, 1
      %p304 = por %p302, %p303
      %p306 = scmp.ne.s32.totalorder %s291, %s305
      %p307 = scmp.eq.s32.totalorder %s45, 0
      %p308 = por %p306, %p307
      %s310 = sadd.s32 %s309, 1
      %p313 = scmp.eq.s32.totalorder %s39, 1
      %p314 = scmp.ne.s32.totalorder %s309, %s311
      %p315 = scmp.eq.s32.totalorder %s39, 0
      %p316 = por %p314, %p315
      %p317 = scmp.ne.s32.totalorder %s309, %s311
      %p318 = scmp.eq.s32.totalorder %s44, 1
      %p319 = por %p317, %p318
      %p320 = scmp.ne.s32.totalorder %s311, %s312
      %p321 = scmp.eq.s32.totalorder %s44, 0
      %p322 = por %p320, %p321
      %p323 = scmp.ne.s32.totalorder %s311, %s312
      %p324 = scmp.eq.s32.totalorder %s45, 1
      %p325 = por %p323, %p324
      %p327 = scmp.ne.s32.totalorder %s312, %s326
      %p328 = scmp.eq.s32.totalorder %s45, 0
      %p329 = por %p327, %p328
      %s331 = sadd.s32 %s330, 1
      %p334 = scmp.eq.s32.totalorder %s39, 1
      %p335 = scmp.ne.s32.totalorder %s330, %s332
      %p336 = scmp.eq.s32.totalorder %s39, 0
      %p337 = por %p335, %p336
      %p338 = scmp.ne.s32.totalorder %s330, %s332
      %p339 = scmp.eq.s32.totalorder %s44, 1
      %p340 = por %p338, %p339
      %p341 = scmp.ne.s32.totalorder %s332, %s333
      %p342 = scmp.eq.s32.totalorder %s44, 0
      %p343 = por %p341, %p342
      %p344 = scmp.ne.s32.totalorder %s332, %s333
      %p345 = scmp.eq.s32.totalorder %s45, 1
      %p346 = por %p344, %p345
      %p348 = scmp.ne.s32.totalorder %s333, %s347
      %p349 = scmp.eq.s32.totalorder %s45, 0
      %p350 = por %p348, %p349
      %s352 = sadd.s32 %s351, 1
      %p355 = scmp.eq.s32.totalorder %s39, 1
      %p356 = scmp.ne.s32.totalorder %s351, %s353
      %p357 = scmp.eq.s32.totalorder %s39, 0
      %p358 = por %p356, %p357
      %p359 = scmp.ne.s32.totalorder %s351, %s353
      %p360 = scmp.eq.s32.totalorder %s44, 1
      %p361 = por %p359, %p360
      %p362 = scmp.ne.s32.totalorder %s353, %s354
      %p363 = scmp.eq.s32.totalorder %s44, 0
      %p364 = por %p362, %p363
      %p365 = scmp.ne.s32.totalorder %s353, %s354
      %p366 = scmp.eq.s32.totalorder %s45, 1
      %p367 = por %p365, %p366
      %p369 = scmp.ne.s32.totalorder %s354, %s368
      %p370 = scmp.eq.s32.totalorder %s45, 0
      %p371 = por %p369, %p370
      %s373 = sadd.s32 %s372, 1
      %p376 = scmp.eq.s32.totalorder %s39, 1
      %p377 = scmp.ne.s32.totalorder %s372, %s374
      %p378 = scmp.eq.s32.totalorder %s39, 0
      %p379 = por %p377, %p378
      %p380 = scmp.ne.s32.totalorder %s372, %s374
      %p381 = scmp.eq.s32.totalorder %s44, 1
      %p382 = por %p380, %p381
      %p383 = scmp.ne.s32.totalorder %s374, %s375
      %p384 = scmp.eq.s32.totalorder %s44, 0
      %p385 = por %p383, %p384
      %p386 = scmp.ne.s32.totalorder %s374, %s375
      %p387 = scmp.eq.s32.totalorder %s45, 1
      %p388 = por %p386, %p387
      %p390 = scmp.ne.s32.totalorder %s375, %s389
      %p391 = scmp.eq.s32.totalorder %s45, 0
      %p392 = por %p390, %p391
      %s394 = sadd.s32 %s393, 1
      %p397 = scmp.eq.s32.totalorder %s39, 1
      %p398 = scmp.ne.s32.totalorder %s393, %s395
      %p399 = scmp.eq.s32.totalorder %s39, 0
      %p400 = por %p398, %p399
      %p401 = scmp.ne.s32.totalorder %s393, %s395
      %p402 = scmp.eq.s32.totalorder %s44, 1
      %p403 = por %p401, %p402
      %p404 = scmp.ne.s32.totalorder %s395, %s396
      %p405 = scmp.eq.s32.totalorder %s44, 0
      %p406 = por %p404, %p405
      %p407 = scmp.ne.s32.totalorder %s395, %s396
      %p408 = scmp.eq.s32.totalorder %s45, 1
      %p409 = por %p407, %p408
      %p411 = scmp.ne.s32.totalorder %s396, %s410
      %p412 = scmp.eq.s32.totalorder %s45, 0
      %p413 = por %p411, %p412
      %s415 = sadd.s32 %s414, 1
      %p418 = scmp.eq.s32.totalorder %s39, 1
      %p419 = scmp.ne.s32.totalorder %s414, %s416
      %p420 = scmp.eq.s32.totalorder %s39, 0
      %p421 = por %p419, %p420
      %p422 = scmp.ne.s32.totalorder %s414, %s416
      %p423 = scmp.eq.s32.totalorder %s44, 1
      %p424 = por %p422, %p423
      %p425 = scmp.ne.s32.totalorder %s416, %s417
      %p426 = scmp.eq.s32.totalorder %s44, 0
      %p427 = por %p425, %p426
      %p428 = scmp.ne.s32.totalorder %s416, %s417
      %p429 = scmp.eq.s32.totalorder %s45, 1
      %p430 = por %p428, %p429
      %p432 = scmp.ne.s32.totalorder %s417, %s431
      %p433 = scmp.eq.s32.totalorder %s45, 0
      %p434 = por %p432, %p433
      %s436 = sadd.s32 %s435, 1
      %p439 = scmp.eq.s32.totalorder %s39, 1
      %p440 = scmp.ne.s32.totalorder %s435, %s437
      %p441 = scmp.eq.s32.totalorder %s39, 0
      %p442 = por %p440, %p441
      %p443 = scmp.ne.s32.totalorder %s435, %s437
      %p444 = scmp.eq.s32.totalorder %s44, 1
      %p445 = por %p443, %p444
      %p446 = scmp.ne.s32.totalorder %s437, %s438
      %p447 = scmp.eq.s32.totalorder %s44, 0
      %p448 = por %p446, %p447
      %p449 = scmp.ne.s32.totalorder %s437, %s438
      %p450 = scmp.eq.s32.totalorder %s45, 1
      %p451 = por %p449, %p450
      %p453 = scmp.ne.s32.totalorder %s438, %s452
      %p454 = scmp.eq.s32.totalorder %s45, 0
      %p455 = por %p453, %p454
      %s457 = sadd.s32 %s456, 1
      %p460 = scmp.eq.s32.totalorder %s39, 1
      %p461 = scmp.ne.s32.totalorder %s456, %s458
      %p462 = scmp.eq.s32.totalorder %s39, 0
      %p463 = por %p461, %p462
      %p464 = scmp.ne.s32.totalorder %s456, %s458
      %p465 = scmp.eq.s32.totalorder %s44, 1
      %p466 = por %p464, %p465
      %p467 = scmp.ne.s32.totalorder %s458, %s459
      %p468 = scmp.eq.s32.totalorder %s44, 0
      %p469 = por %p467, %p468
      %p470 = scmp.ne.s32.totalorder %s458, %s459
      %p471 = scmp.eq.s32.totalorder %s45, 1
      %p472 = por %p470, %p471
      %p474 = scmp.ne.s32.totalorder %s459, %s473
      %p475 = scmp.eq.s32.totalorder %s45, 0
      %p476 = por %p474, %p475
      %s478 = sadd.s32 %s477, 1
      %p481 = scmp.eq.s32.totalorder %s39, 1
      %p482 = scmp.ne.s32.totalorder %s477, %s479
      %p483 = scmp.eq.s32.totalorder %s39, 0
      %p484 = por %p482, %p483
      %p485 = scmp.ne.s32.totalorder %s477, %s479
      %p486 = scmp.eq.s32.totalorder %s44, 1
      %p487 = por %p485, %p486
      %p488 = scmp.ne.s32.totalorder %s479, %s480
      %p489 = scmp.eq.s32.totalorder %s44, 0
      %p490 = por %p488, %p489
      %p491 = scmp.ne.s32.totalorder %s479, %s480
      %p492 = scmp.eq.s32.totalorder %s45, 1
      %p493 = por %p491, %p492
      %p495 = scmp.ne.s32.totalorder %s480, %s494
      %p496 = scmp.eq.s32.totalorder %s45, 0
      %p497 = por %p495, %p496
      %s499 = sadd.s32 %s498, 1
      %p502 = scmp.eq.s32.totalorder %s39, 1
      %p503 = scmp.ne.s32.totalorder %s498, %s500
      %p504 = scmp.eq.s32.totalorder %s39, 0
      %p505 = por %p503, %p504
      %p506 = scmp.ne.s32.totalorder %s498, %s500
      %p507 = scmp.eq.s32.totalorder %s44, 1
      %p508 = por %p506, %p507
      %p509 = scmp.ne.s32.totalorder %s500, %s501
      %p510 = scmp.eq.s32.totalorder %s44, 0
      %p511 = por %p509, %p510
      %p512 = scmp.ne.s32.totalorder %s500, %s501
      %p513 = scmp.eq.s32.totalorder %s45, 1
      %p514 = por %p512, %p513
      %p516 = scmp.ne.s32.totalorder %s501, %s515
      %p517 = scmp.eq.s32.totalorder %s45, 0
      %p518 = por %p516, %p517
      %s520 = sadd.s32 %s519, 1
      %p523 = scmp.eq.s32.totalorder %s39, 1
      %p524 = scmp.ne.s32.totalorder %s519, %s521
      %p525 = scmp.eq.s32.totalorder %s39, 0
      %p526 = por %p524, %p525
      %p527 = scmp.ne.s32.totalorder %s519, %s521
      %p528 = scmp.eq.s32.totalorder %s44, 1
      %p529 = por %p527, %p528
      %p530 = scmp.ne.s32.totalorder %s521, %s522
      %p531 = scmp.eq.s32.totalorder %s44, 0
      %p532 = por %p530, %p531
      %p533 = scmp.ne.s32.totalorder %s521, %s522
      %p534 = scmp.eq.s32.totalorder %s45, 1
      %p535 = por %p533, %p534
      %p537 = scmp.ne.s32.totalorder %s522, %s536
      %p538 = scmp.eq.s32.totalorder %s45, 0
      %p539 = por %p537, %p538
      %s541 = sadd.s32 %s540, 1
      %p544 = scmp.eq.s32.totalorder %s39, 1
      %p545 = scmp.ne.s32.totalorder %s540, %s542
      %p546 = scmp.eq.s32.totalorder %s39, 0
      %p547 = por %p545, %p546
      %p548 = scmp.ne.s32.totalorder %s540, %s542
      %p549 = scmp.eq.s32.totalorder %s44, 1
      %p550 = por %p548, %p549
      %p551 = scmp.ne.s32.totalorder %s542, %s543
      %p552 = scmp.eq.s32.totalorder %s44, 0
      %p553 = por %p551, %p552
      %p554 = scmp.ne.s32.totalorder %s542, %s543
      %p555 = scmp.eq.s32.totalorder %s45, 1
      %p556 = por %p554, %p555
      %p558 = scmp.ne.s32.totalorder %s543, %s557
      %p559 = scmp.eq.s32.totalorder %s45, 0
      %p560 = por %p558, %p559
      %s562 = sadd.s32 %s561, 1
      %p565 = scmp.eq.s32.totalorder %s39, 1
      %p566 = scmp.ne.s32.totalorder %s561, %s563
      %p567 = scmp.eq.s32.totalorder %s39, 0
      %p568 = por %p566, %p567
      %p569 = scmp.ne.s32.totalorder %s561, %s563
      %p570 = scmp.eq.s32.totalorder %s44, 1
      %p571 = por %p569, %p570
      %p572 = scmp.ne.s32.totalorder %s563, %s564
      %p573 = scmp.eq.s32.totalorder %s44, 0
      %p574 = por %p572, %p573
      %p575 = scmp.ne.s32.totalorder %s563, %s564
      %p576 = scmp.eq.s32.totalorder %s45, 1
      %p577 = por %p575, %p576
      %p579 = scmp.ne.s32.totalorder %s564, %s578
      %p580 = scmp.eq.s32.totalorder %s45, 0
      %p581 = por %p579, %p580
      %s582 = ssub.s32 %s39, %s46
      %p583 = scmp.eq.s32.totalorder %s582, 0
      %s585 = sadd.s32 %s584, 1
      %s586 = scalar_select %p583, %s584, %s585
      %p589 = pneg %p583
      %p590 = scmp.eq.s32.totalorder %s39, 1
      %p591 = por %p589, %p590
      %p592 = scmp.ne.s32.totalorder %s584, %s587
      %p593 = scmp.eq.s32.totalorder %s39, 0
      %p594 = por %p592, %p593
      %p595 = scmp.ne.s32.totalorder %s584, %s587
      %p596 = scmp.eq.s32.totalorder %s44, 1
      %p597 = por %p595, %p596
      %p598 = scmp.ne.s32.totalorder %s587, %s588
      %p599 = scmp.eq.s32.totalorder %s44, 0
      %p600 = por %p598, %p599
      %p601 = scmp.ne.s32.totalorder %s587, %s588
      %p602 = scmp.eq.s32.totalorder %s45, 1
      %p603 = por %p601, %p602
      %p605 = scmp.ne.s32.totalorder %s588, %s604
      %p606 = scmp.eq.s32.totalorder %s45, 0
      %p607 = por %p605, %p606
      %s608 = ssub.s32 %s39, %s46
      %p609 = scmp.eq.s32.totalorder %s608, 0
      %s611 = sadd.s32 %s610, 1
      %s612 = scalar_select %p609, %s610, %s611
      %p615 = pneg %p609
      %p616 = scmp.eq.s32.totalorder %s39, 1
      %p617 = por %p615, %p616
      %p618 = scmp.ne.s32.totalorder %s610, %s613
      %p619 = scmp.eq.s32.totalorder %s39, 0
      %p620 = por %p618, %p619
      %p621 = scmp.ne.s32.totalorder %s610, %s613
      %p622 = scmp.eq.s32.totalorder %s44, 1
      %p623 = por %p621, %p622
      %p624 = scmp.ne.s32.totalorder %s613, %s614
      %p625 = scmp.eq.s32.totalorder %s44, 0
      %p626 = por %p624, %p625
      %p627 = scmp.ne.s32.totalorder %s613, %s614
      %p628 = scmp.eq.s32.totalorder %s45, 1
      %p629 = por %p627, %p628
      %p631 = scmp.ne.s32.totalorder %s614, %s630
      %p632 = scmp.eq.s32.totalorder %s45, 0
      %p633 = por %p631, %p632
      %p634 = scmp.le.s32.totalorder 1, %s39
      %p635 = scmp.lt.s32.totalorder %s39, 3
      %p636 = pnand %p634, %p635
      %p637 = pneg %p636
      // Predicated region
      $region9: #{tpu_custom_call.1} parent=5 // pred_check
        _
      $region10: #{tpu_custom_call.1} parent=5 // pred_check_branch
        %639 = sbr.rel (%p636) target = $region12
      $region11: #{tpu_custom_call.1} parent=5 // pred_region
        %s640 = ssub.s32 %s39, 1
        // Predicated region
        $region13: #{tpu_custom_call.1} parent=11 // pred_check
          %p641 = pneg %p112
        $region14: #{tpu_custom_call.1} parent=11 // pred_check_branch
          %643 = sbr.rel (%p641) target = $region16
        $region15: #{tpu_custom_call.1} parent=11 // pred_region
          _
        $region16: #{tpu_custom_call.1} parent=11 // pred_fallthru
          _
        // Predicated region
        $region17: #{tpu_custom_call.1} parent=11 // pred_check
          %p644 = pneg %p133
        $region18: #{tpu_custom_call.1} parent=11 // pred_check_branch
          %646 = sbr.rel (%p644) target = $region20
        $region19: #{tpu_custom_call.1} parent=11 // pred_region
          _
        $region20: #{tpu_custom_call.1} parent=11 // pred_fallthru
          _
        // Predicated region
        $region21: #{tpu_custom_call.1} parent=11 // pred_check
          %p647 = pneg %p154
        $region22: #{tpu_custom_call.1} parent=11 // pred_check_branch
          %649 = sbr.rel (%p647) target = $region24
        $region23: #{tpu_custom_call.1} parent=11 // pred_region
          _
        $region24: #{tpu_custom_call.1} parent=11 // pred_fallthru
          _
        // Predicated region
        $region25: #{tpu_custom_call.1} parent=11 // pred_check
          %p650 = pneg %p175
        $region26: #{tpu_custom_call.1} parent=11 // pred_check_branch
          %652 = sbr.rel (%p650) target = $region28
        $region27: #{tpu_custom_call.1} parent=11 // pred_region
          _
        $region28: #{tpu_custom_call.1} parent=11 // pred_fallthru
          _
        // Predicated region
        $region29: #{tpu_custom_call.1} parent=11 // pred_check
          %p653 = pneg %p196
        $region30: #{tpu_custom_call.1} parent=11 // pred_check_branch
          %655 = sbr.rel (%p653) target = $region32
        $region31: #{tpu_custom_call.1} parent=11 // pred_region
          _
        $region32: #{tpu_custom_call.1} parent=11 // pred_fallthru
          _
        // Predicated region
        $region33: #{tpu_custom_call.1} parent=11 // pred_check
          %p656 = pneg %p217
        $region34: #{tpu_custom_call.1} parent=11 // pred_check_branch
          %658 = sbr.rel (%p656) target = $region36
        $region35: #{tpu_custom_call.1} parent=11 // pred_region
          _
        $region36: #{tpu_custom_call.1} parent=11 // pred_fallthru
          _
        // Predicated region
        $region37: #{tpu_custom_call.1} parent=11 // pred_check
          %p659 = pneg %p238
        $region38: #{tpu_custom_call.1} parent=11 // pred_check_branch
          %661 = sbr.rel (%p659) target = $region40
        $region39: #{tpu_custom_call.1} parent=11 // pred_region
          _
        $region40: #{tpu_custom_call.1} parent=11 // pred_fallthru
          _
        // Predicated region
        $region41: #{tpu_custom_call.1} parent=11 // pred_check
          %p662 = pneg %p259
        $region42: #{tpu_custom_call.1} parent=11 // pred_check_branch
          %664 = sbr.rel (%p662) target = $region44
        $region43: #{tpu_custom_call.1} parent=11 // pred_region
          _
        $region44: #{tpu_custom_call.1} parent=11 // pred_fallthru
          _
        // Predicated region
        $region45: #{tpu_custom_call.1} parent=11 // pred_check
          %p665 = pneg %p280
        $region46: #{tpu_custom_call.1} parent=11 // pred_check_branch
          %667 = sbr.rel (%p665) target = $region48
        $region47: #{tpu_custom_call.1} parent=11 // pred_region
          _
        $region48: #{tpu_custom_call.1} parent=11 // pred_fallthru
          _
        // Predicated region
        $region49: #{tpu_custom_call.1} parent=11 // pred_check
          %p668 = pneg %p301
        $region50: #{tpu_custom_call.1} parent=11 // pred_check_branch
          %670 = sbr.rel (%p668) target = $region52
        $region51: #{tpu_custom_call.1} parent=11 // pred_region
          _
        $region52: #{tpu_custom_call.1} parent=11 // pred_fallthru
          _
        // Predicated region
        $region53: #{tpu_custom_call.1} parent=11 // pred_check
          %p671 = pneg %p322
        $region54: #{tpu_custom_call.1} parent=11 // pred_check_branch
          %673 = sbr.rel (%p671) target = $region56
        $region55: #{tpu_custom_call.1} parent=11 // pred_region
          _
        $region56: #{tpu_custom_call.1} parent=11 // pred_fallthru
          _
        // Predicated region
        $region57: #{tpu_custom_call.1} parent=11 // pred_check
          %p674 = pneg %p343
        $region58: #{tpu_custom_call.1} parent=11 // pred_check_branch
          %676 = sbr.rel (%p674) target = $region60
        $region59: #{tpu_custom_call.1} parent=11 // pred_region
          _
        $region60: #{tpu_custom_call.1} parent=11 // pred_fallthru
          _
        // Predicated region
        $region61: #{tpu_custom_call.1} parent=11 // pred_check
          %p677 = pneg %p364
        $region62: #{tpu_custom_call.1} parent=11 // pred_check_branch
          %679 = sbr.rel (%p677) target = $region64
        $region63: #{tpu_custom_call.1} parent=11 // pred_region
          _
        $region64: #{tpu_custom_call.1} parent=11 // pred_fallthru
          _
        // Predicated region
        $region65: #{tpu_custom_call.1} parent=11 // pred_check
          %p680 = pneg %p385
        $region66: #{tpu_custom_call.1} parent=11 // pred_check_branch
          %682 = sbr.rel (%p680) target = $region68
        $region67: #{tpu_custom_call.1} parent=11 // pred_region
          _
        $region68: #{tpu_custom_call.1} parent=11 // pred_fallthru
          _
        // Predicated region
        $region69: #{tpu_custom_call.1} parent=11 // pred_check
          %p683 = pneg %p406
        $region70: #{tpu_custom_call.1} parent=11 // pred_check_branch
          %685 = sbr.rel (%p683) target = $region72
        $region71: #{tpu_custom_call.1} parent=11 // pred_region
          _
        $region72: #{tpu_custom_call.1} parent=11 // pred_fallthru
          _
        // Predicated region
        $region73: #{tpu_custom_call.1} parent=11 // pred_check
          %p686 = pneg %p427
        $region74: #{tpu_custom_call.1} parent=11 // pred_check_branch
          %688 = sbr.rel (%p686) target = $region76
        $region75: #{tpu_custom_call.1} parent=11 // pred_region
          _
        $region76: #{tpu_custom_call.1} parent=11 // pred_fallthru
          _
        // Predicated region
        $region77: #{tpu_custom_call.1} parent=11 // pred_check
          %p689 = pneg %p448
        $region78: #{tpu_custom_call.1} parent=11 // pred_check_branch
          %691 = sbr.rel (%p689) target = $region80
        $region79: #{tpu_custom_call.1} parent=11 // pred_region
          _
        $region80: #{tpu_custom_call.1} parent=11 // pred_fallthru
          _
        // Predicated region
        $region81: #{tpu_custom_call.1} parent=11 // pred_check
          %p692 = pneg %p469
        $region82: #{tpu_custom_call.1} parent=11 // pred_check_branch
          %694 = sbr.rel (%p692) target = $region84
        $region83: #{tpu_custom_call.1} parent=11 // pred_region
          _
        $region84: #{tpu_custom_call.1} parent=11 // pred_fallthru
          _
        // Predicated region
        $region85: #{tpu_custom_call.1} parent=11 // pred_check
          %p695 = pneg %p490
        $region86: #{tpu_custom_call.1} parent=11 // pred_check_branch
          %697 = sbr.rel (%p695) target = $region88
        $region87: #{tpu_custom_call.1} parent=11 // pred_region
          _
        $region88: #{tpu_custom_call.1} parent=11 // pred_fallthru
          _
        // Predicated region
        $region89: #{tpu_custom_call.1} parent=11 // pred_check
          %p698 = pneg %p511
        $region90: #{tpu_custom_call.1} parent=11 // pred_check_branch
          %700 = sbr.rel (%p698) target = $region92
        $region91: #{tpu_custom_call.1} parent=11 // pred_region
          _
        $region92: #{tpu_custom_call.1} parent=11 // pred_fallthru
          _
        // Predicated region
        $region93: #{tpu_custom_call.1} parent=11 // pred_check
          %p701 = pneg %p532
        $region94: #{tpu_custom_call.1} parent=11 // pred_check_branch
          %703 = sbr.rel (%p701) target = $region96
        $region95: #{tpu_custom_call.1} parent=11 // pred_region
          _
        $region96: #{tpu_custom_call.1} parent=11 // pred_fallthru
          _
        // Predicated region
        $region97: #{tpu_custom_call.1} parent=11 // pred_check
          %p704 = pneg %p553
        $region98: #{tpu_custom_call.1} parent=11 // pred_check_branch
          %706 = sbr.rel (%p704) target = $region100
        $region99: #{tpu_custom_call.1} parent=11 // pred_region
          _
        $region100: #{tpu_custom_call.1} parent=11 // pred_fallthru
          _
        // Predicated region
        $region101: #{tpu_custom_call.1} parent=11 // pred_check
          %p707 = pneg %p574
        $region102: #{tpu_custom_call.1} parent=11 // pred_check_branch
          %709 = sbr.rel (%p707) target = $region104
        $region103: #{tpu_custom_call.1} parent=11 // pred_region
          _
        $region104: #{tpu_custom_call.1} parent=11 // pred_fallthru
          _
      $region12: #{tpu_custom_call.1} parent=5 // pred_fallthru
        _
      %p710 = scmp.lt.s32.totalorder %s39, 2
      // Predicated region
      $region105: #{tpu_custom_call.1} parent=5 // pred_check
        %p711 = pneg %p710
      $region106: #{tpu_custom_call.1} parent=5 // pred_check_branch
        %713 = sbr.rel (%p711) target = $region108
      $region107: #{tpu_custom_call.1} parent=5 // pred_region
        // Predicated region
        $region109: #{tpu_custom_call.1} parent=107 // pred_check
          %p714 = pneg %p59
        $region110: #{tpu_custom_call.1} parent=107 // pred_check_branch
          %716 = sbr.rel (%p714) target = $region112
        $region111: #{tpu_custom_call.1} parent=107 // pred_region
          %p717 = scmp.lt.s32.totalorder %s39, 1
          %s718 = scalar_select %p717, %s39, 1
          %s719 = smul.addr %s718, 8
          %s720 = scalar_lea.vmem %s0, %s719
        $region112: #{tpu_custom_call.1} parent=107 // pred_fallthru
          _
        // Predicated region
        $region113: #{tpu_custom_call.1} parent=107 // pred_check
          %p721 = pneg %p85
        $region114: #{tpu_custom_call.1} parent=107 // pred_check_branch
          %723 = sbr.rel (%p721) target = $region116
        $region115: #{tpu_custom_call.1} parent=107 // pred_region
          %p724 = scmp.lt.s32.totalorder %s39, 1
          %s725 = scalar_select %p724, %s39, 1
          %s726 = smul.addr %s725, 8
          %s727 = scalar_lea.vmem %s1, %s726
        $region116: #{tpu_custom_call.1} parent=107 // pred_fallthru
          _
      $region108: #{tpu_custom_call.1} parent=5 // pred_fallthru
        _
      %p728 = scmp.le.s32.totalorder 1, %s39
      %p729 = scmp.lt.s32.totalorder %s39, 3
      %p730 = pnand %p728, %p729
      %p731 = pneg %p730
      // Predicated region
      $region117: #{tpu_custom_call.1} parent=5 // pred_check
        _
      $region118: #{tpu_custom_call.1} parent=5 // pred_check_branch
        %733 = sbr.rel (%p730) target = $region120
      $region119: #{tpu_custom_call.1} parent=5 // pred_region
        %s734 = ssub.s32 %s39, 1
        %p735 = scmp.lt.s32.totalorder %s44, 1
        %s736 = scalar_select %p735, %s44, 1
        %s737 = smul.addr %s736, 8
        %s738 = scalar_lea.vmem %s0, %s737
        %p739 = pneg %p65
        %p740 = pneg %p62
        %p741 = scmp.lt.s32.totalorder %s44, 1
        %s742 = scalar_select %p741, %s44, 1
        %s743 = smul.addr %s742, 8
        %s744 = scalar_lea.vmem %s1, %s743
        %p745 = pneg %p91
        %p746 = pneg %p88
        %p747 = pneg %p112
        %p748 = pneg %p109
        %p749 = pneg %p133
        %p750 = pneg %p130
        %p751 = pneg %p154
        %p752 = pneg %p151
        %p753 = pneg %p175
        %p754 = pneg %p172
        %p755 = pneg %p196
        %p756 = pneg %p193
        %p757 = pneg %p217
        %p758 = pneg %p214
        %p759 = pneg %p238
        %p760 = pneg %p235
        %p761 = pneg %p259
        %p762 = pneg %p256
        %p763 = pneg %p280
        %p764 = pneg %p277
        %p765 = pneg %p301
        %p766 = pneg %p298
        %p767 = pneg %p322
        %p768 = pneg %p319
        %p769 = pneg %p343
        %p770 = pneg %p340
        %p771 = pneg %p364
        %p772 = pneg %p361
        %p773 = pneg %p385
        %p774 = pneg %p382
        %p775 = pneg %p406
        %p776 = pneg %p403
        %p777 = pneg %p427
        %p778 = pneg %p424
        %p779 = pneg %p448
        %p780 = pneg %p445
        %p781 = pneg %p469
        %p782 = pneg %p466
        %p783 = pneg %p490
        %p784 = pneg %p487
        %p785 = pneg %p511
        %p786 = pneg %p508
        %p787 = pneg %p532
        %p788 = pneg %p529
        %p789 = pneg %p553
        %p790 = pneg %p550
        %p791 = pneg %p574
        %p792 = pneg %p571
        %p793 = pneg %p600
        %p794 = pneg %p597
        %s795 = sand.u32 %s587, 1
        %s796 = scalar_lea.sflag [#allocation3], %s795
        %s797 = sand.u32 %s587, 1
        %s798 = smul.addr %s797, 8
        %s799 = scalar_lea.vmem [#allocation2], %s798
        %p800 = pneg %p626
        %p801 = pneg %p623
        %s802 = sand.u32 %s613, 1
        %s803 = scalar_lea.sflag [#allocation5], %s802
        %s804 = sand.u32 %s613, 1
        %s805 = smul.addr %s804, 8
        %s806 = scalar_lea.vmem [#allocation4], %s805
        %p807 = scmp.lt.s32.totalorder %s44, 1
        %s808 = scalar_select %p807, %s44, 1
        %s809 = smul.addr %s808, 8
        %s810 = scalar_lea.vmem %s0, %s809
        %p811 = scmp.lt.s32.totalorder %s44, 1
        %s812 = scalar_select %p811, %s44, 1
        %s813 = smul.addr %s812, 8
        %s814 = scalar_lea.vmem %s1, %s813
        %v816 = vld [vmem:[%s810] sm:$0xff]
        %v817 = vlaneseq
        %v818 = vand.u32 %v817, 127
        %819 = vset.pattern.permute.xlu0 0
        %820 = vperm.xlu0 %819, %v816
        %v821 = vpop.permute.xlu0 %820
        %vm822 = vcmp.eq.s32.totalorder %v818, %v821
        %v823 = vsel %vm822, 1, 0
        %v824 = vcvt.s32.f32 %v823
        %v825 = vld [vmem:[%s2] sm:$0xff]
        %v826 = vld [vmem:[%s2 + $0x8] sm:$0xff]
        %v827 = vld [vmem:[%s2 + $0x10] sm:$0xff]
        %v828 = vld [vmem:[%s2 + $0x18] sm:$0xff]
        %v829 = vld [vmem:[%s2 + $0x20] sm:$0xff]
        %v830 = vld [vmem:[%s2 + $0x28] sm:$0xff]
        %v831 = vld [vmem:[%s2 + $0x30] sm:$0xff]
        %v832 = vld [vmem:[%s2 + $0x38] sm:$0xff]
        %v833 = vld [vmem:[%s3] sm:$0xff]
        %vm834 = vcmask 523264
        %v836 = vsel %vm834, %v824, 0
        %838 = vmatprep.subr.mxu0 0.0
        %839 = vmatpush1.msra.mxu0 %v825
        %840 = vmatprep.subr.mxu0 0.0
        %841 = vmatpush1.msra.mxu0 %v826
        %842 = vmatprep.subr.mxu0 0.0
        %843 = vmatpush1.msra.mxu0 %v827
        %844 = vmatprep.subr.mxu0 0.0
        %845 = vmatpush1.msra.mxu0 %v828
        %846 = vmatprep.subr.mxu0 0.0
        %847 = vmatpush1.msra.mxu0 %v829
        %848 = vmatprep.subr.mxu0 0.0
        %849 = vmatpush1.msra.mxu0 %v830
        %850 = vmatprep.subr.mxu0 0.0
        %851 = vmatpush1.msra.mxu0 %v831
        %852 = vmatprep.subr.mxu0 0.0
        %853 = vmatpush1.msra.mxu0 %v832
        %854 = vmatprep.subr.mxu0 0.0
        %855 = vmatpush1.msra.mxu0 0.0
        %856 = vmatprep.subr.mxu0 0.0
        %857 = vmatpush1.msra.mxu0 0.0
        %858 = vmatprep.subr.mxu0 0.0
        %859 = vmatpush1.msra.mxu0 0.0
        %860 = vmatprep.subr.mxu0 0.0
        %861 = vmatpush1.msra.mxu0 0.0
        %862 = vmatprep.subr.mxu0 0.0
        %863 = vmatpush1.msra.mxu0 0.0
        %864 = vmatprep.subr.mxu0 0.0
        %865 = vmatpush1.msra.mxu0 0.0
        %866 = vmatprep.subr.mxu0 0.0
        %867 = vmatpush1.msra.mxu0 0.0
        %868 = vmatprep.subr.mxu0 0.0
        %869 = vmatpush1.msra.mxu0 0.0
        %870 = vmatprep.subr.mxu0 0.0
        %871 = vmatpush1.msra.mxu0 0.0
        %872 = vmatprep.subr.mxu0 0.0
        %873 = vmatpush1.msra.mxu0 0.0
        %874 = vmatprep.subr.mxu0 0.0
        %875 = vmatpush1.msra.mxu0 0.0
        %876 = vmatprep.subr.mxu0 0.0
        %877 = vmatpush1.msra.mxu0 0.0
        %878 = vmatprep.subr.mxu0 0.0
        %879 = vmatpush1.msra.mxu0 0.0
        %880 = vmatprep.subr.mxu0 0.0
        %881 = vmatpush1.msra.mxu0 0.0
        %882 = vmatprep.subr.mxu0 0.0
        %883 = vmatpush1.msra.mxu0 0.0
        %884 = vmatprep.subr.mxu0 0.0
        %885 = vmatpush1.msra.mxu0 0.0
        %886 = vmatprep.subr.mxu0 0.0
        %887 = vmatpush1.msra.mxu0 0.0
        %888 = vmatprep.subr.mxu0 0.0
        %889 = vmatpush1.msra.mxu0 0.0
        %890 = vmatprep.subr.mxu0 0.0
        %891 = vmatpush1.msra.mxu0 0.0
        %892 = vmatprep.subr.mxu0 0.0
        %893 = vmatpush1.msra.mxu0 0.0
        %894 = vmatprep.subr.mxu0 0.0
        %895 = vmatpush1.msra.mxu0 0.0
        %896 = vmatprep.subr.mxu0 0.0
        %897 = vmatpush1.msra.mxu0 0.0
        %898 = vmatprep.subr.mxu0 0.0
        %899 = vmatpush1.msra.mxu0 0.0
        %900 = vmatprep.subr.mxu0 0.0
        %901 = vmatpush1.msra.mxu0 0.0
        %902 = vmatprep.mubr.f32.mxu0 0.0
        %903 = vmatmul.mubr.f32.gmra.mrb[0].mxu0 %v836
        %v904 = vpop.f32.mrb[0].mxu0
        %v905 = vadd.f32 %v833, %v904
        %v906 = vpop.f32.mrb[0].mxu0
        %907 = vdwg.mxu0
        %v908 = vld [vmem:[%s4] sm:$0x1]
        %v910 = vlaneseq
        %v911 = vshrl.u32 %v910, 7
        %v912 = vsub.s32 0, %v911
        %v913 = vrot.slane %v908, %v912
        %v915 = vadd.f32 %v905, %v913
        %v916 = vld [vmem:[%s5] sm:$0x1]
        %v917 = vld [vmem:[%s6] sm:$0x1]
        %vm918 = vcmask 261120
        %v919 = vsel %vm918, %v915, 0.0
        %920 = vadd.xlane.f32.xlu0 %v919
        %v921 = vpop.xlane.xlu0 %920
        %v922 = vrcp.pop 32.0
        %v923 = vmul.f32 %v921, %v922
        %v924 = vsub.f32 %v915, %v923
        %v925 = vmul.f32 %v924, %v924
        %v926 = vsel %vm918, %v925, 0.0
        %927 = vadd.xlane.f32.xlu0 %v926
        %v928 = vpop.xlane.xlu0 %927
        %v929 = vmul.f32 %v928, %v922
        %v930 = vadd.f32 %v929, 1e-12
        %v931 = vrsqrt.pop %v930
        %v932 = vmul.f32 %v924, %v931
        %v934 = vlaneseq
        %v935 = vshrl.u32 %v934, 7
        %v936 = vsub.s32 0, %v935
        %v937 = vrot.slane %v916, %v936
        %v939 = vmul.f32 %v932, %v937
        %v941 = vlaneseq
        %v942 = vshrl.u32 %v941, 7
        %v943 = vsub.s32 0, %v942
        %v944 = vrot.slane %v917, %v943
        %v946 = vadd.f32 %v939, %v944
        %v947 = vpack.c.bf16 %v946, %v946
        %v948 = vld [vmem:[%s14] sm:$0x1]
        %v949 = vld [vmem:[%s7] sm:$0xf]
        %v950 = vld [vmem:[%s7 + $0x4] sm:$0xf]
        %v951 = vld [vmem:[%s7 + $0x8] sm:$0xf]
        %v952 = vld [vmem:[%s7 + $0xc] sm:$0xf]
        %v953 = vld [vmem:[%s10] sm:$0x1]
        %v955 = vlaneseq
        %v956 = vshrl.u32 %v955, 7
        %v957 = vsub.s32 0, %v956
        %v958 = vrot.slane %v953, %v957
        %v964 = vunpack.c.l.b16 %v949
        %v965 = vunpack.c.l.b16 %v950
        %v966 = vunpack.c.l.b16 %v951
        %v967 = vunpack.c.l.b16 %v952
        %v968 = vpack.c.b16 %v965, %v964
        %v969 = vpack.c.b16 %v967, %v966
        %v973 = vsel %vm918, %v947, 0
        %975 = vmatprep.subr.bf16.mxu0 0
        %976 = vmatpush1.bf16.msra.mxu0 %v968
        %977 = vmatprep.subr.bf16.mxu0 0
        %978 = vmatpush1.bf16.msra.mxu0 %v969
        %979 = vmatprep.subr.bf16.mxu0 0
        %980 = vmatpush1.bf16.msra.mxu0 0
        %981 = vmatprep.subr.bf16.mxu0 0
        %982 = vmatpush1.bf16.msra.mxu0 0
        %983 = vmatprep.subr.bf16.mxu0 0
        %984 = vmatpush1.bf16.msra.mxu0 0
        %985 = vmatprep.subr.bf16.mxu0 0
        %986 = vmatpush1.bf16.msra.mxu0 0
        %987 = vmatprep.subr.bf16.mxu0 0
        %988 = vmatpush1.bf16.msra.mxu0 0
        %989 = vmatprep.subr.bf16.mxu0 0
        %990 = vmatpush1.bf16.msra.mxu0 0
        %991 = vmatprep.subr.bf16.mxu0 0
        %992 = vmatpush1.bf16.msra.mxu0 0
        %993 = vmatprep.subr.bf16.mxu0 0
        %994 = vmatpush1.bf16.msra.mxu0 0
        %995 = vmatprep.subr.bf16.mxu0 0
        %996 = vmatpush1.bf16.msra.mxu0 0
        %997 = vmatprep.subr.bf16.mxu0 0
        %998 = vmatpush1.bf16.msra.mxu0 0
        %999 = vmatprep.subr.bf16.mxu0 0
        %1000 = vmatpush1.bf16.msra.mxu0 0
        %1001 = vmatprep.subr.bf16.mxu0 0
        %1002 = vmatpush1.bf16.msra.mxu0 0
        %1003 = vmatprep.subr.bf16.mxu0 0
        %1004 = vmatpush1.bf16.msra.mxu0 0
        %1005 = vmatprep.subr.bf16.mxu0 0
        %1006 = vmatpush1.bf16.msra.mxu0 0
        %1007 = vmatprep.mubr.bf16.mxu0 0
        %1008 = vmatmul.mubr.bf16.gmra.mrb[0].mxu0 %v973
        %v1009 = vpop.f32.mrb[0].mxu0
        %v1010 = vadd.f32 %v958, %v1009
        %v1011 = vpop.f32.mrb[0].mxu0
        %v1012 = vpop.f32.mrb[0].mxu0
        %v1013 = vpop.f32.mrb[0].mxu0
        %1014 = vdwg.mxu0
        %v1015 = vld [vmem:[%s8] sm:$0xf]
        %v1016 = vld [vmem:[%s8 + $0x4] sm:$0xf]
        %v1017 = vld [vmem:[%s8 + $0x8] sm:$0xf]
        %v1018 = vld [vmem:[%s8 + $0xc] sm:$0xf]
        %v1019 = vld [vmem:[%s11] sm:$0x1]
        %v1021 = vlaneseq
        %v1022 = vshrl.u32 %v1021, 7
        %v1023 = vsub.s32 0, %v1022
        %v1024 = vrot.slane %v1019, %v1023
        %v1030 = vunpack.c.l.b16 %v1015
        %v1031 = vunpack.c.l.b16 %v1016
        %v1032 = vunpack.c.l.b16 %v1017
        %v1033 = vunpack.c.l.b16 %v1018
        %v1034 = vpack.c.b16 %v1031, %v1030
        %v1035 = vpack.c.b16 %v1033, %v1032
        %1038 = vmatprep.subr.bf16.mxu0 0
        %1039 = vmatpush1.bf16.msra.mxu0 %v1034
        %1040 = vmatprep.subr.bf16.mxu0 0
        %1041 = vmatpush1.bf16.msra.mxu0 %v1035
        %1042 = vmatprep.subr.bf16.mxu0 0
        %1043 = vmatpush1.bf16.msra.mxu0 0
        %1044 = vmatprep.subr.bf16.mxu0 0
        %1045 = vmatpush1.bf16.msra.mxu0 0
        %1046 = vmatprep.subr.bf16.mxu0 0
        %1047 = vmatpush1.bf16.msra.mxu0 0
        %1048 = vmatprep.subr.bf16.mxu0 0
        %1049 = vmatpush1.bf16.msra.mxu0 0
        %1050 = vmatprep.subr.bf16.mxu0 0
        %1051 = vmatpush1.bf16.msra.mxu0 0
        %1052 = vmatprep.subr.bf16.mxu0 0
        %1053 = vmatpush1.bf16.msra.mxu0 0
        %1054 = vmatprep.subr.bf16.mxu0 0
        %1055 = vmatpush1.bf16.msra.mxu0 0
        %1056 = vmatprep.subr.bf16.mxu0 0
        %1057 = vmatpush1.bf16.msra.mxu0 0
        %1058 = vmatprep.subr.bf16.mxu0 0
        %1059 = vmatpush1.bf16.msra.mxu0 0
        %1060 = vmatprep.subr.bf16.mxu0 0
        %1061 = vmatpush1.bf16.msra.mxu0 0
        %1062 = vmatprep.subr.bf16.mxu0 0
        %1063 = vmatpush1.bf16.msra.mxu0 0
        %1064 = vmatprep.subr.bf16.mxu0 0
        %1065 = vmatpush1.bf16.msra.mxu0 0
        %1066 = vmatprep.subr.bf16.mxu0 0
        %1067 = vmatpush1.bf16.msra.mxu0 0
        %1068 = vmatprep.subr.bf16.mxu0 0
        %1069 = vmatpush1.bf16.msra.mxu0 0
        %1070 = vmatprep.mubr.bf16.mxu0 0
        %1071 = vmatmul.mubr.bf16.gmra.mrb[0].mxu0 %v973
        %v1072 = vpop.f32.mrb[0].mxu0
        %v1073 = vadd.f32 %v1024, %v1072
        %v1074 = vpop.f32.mrb[0].mxu0
        %v1075 = vpop.f32.mrb[0].mxu0
        %v1076 = vpop.f32.mrb[0].mxu0
        %1077 = vdwg.mxu0
        %v1078 = vld [vmem:[%s9] sm:$0xf]
        %v1079 = vld [vmem:[%s9 + $0x4] sm:$0xf]
        %v1080 = vld [vmem:[%s9 + $0x8] sm:$0xf]
        %v1081 = vld [vmem:[%s9 + $0xc] sm:$0xf]
        %v1082 = vld [vmem:[%s12] sm:$0x1]
        %v1084 = vlaneseq
        %v1085 = vshrl.u32 %v1084, 7
        %v1086 = vsub.s32 0, %v1085
        %v1087 = vrot.slane %v1082, %v1086
        %v1093 = vunpack.c.l.b16 %v1078
        %v1094 = vunpack.c.l.b16 %v1079
        %v1095 = vunpack.c.l.b16 %v1080
        %v1096 = vunpack.c.l.b16 %v1081
        %v1097 = vpack.c.b16 %v1094, %v1093
        %v1098 = vpack.c.b16 %v1096, %v1095
        %1101 = vmatprep.subr.bf16.mxu0 0
        %1102 = vmatpush1.bf16.msra.mxu0 %v1097
        %1103 = vmatprep.subr.bf16.mxu0 0
        %1104 = vmatpush1.bf16.msra.mxu0 %v1098
        %1105 = vmatprep.subr.bf16.mxu0 0
        %1106 = vmatpush1.bf16.msra.mxu0 0
        %1107 = vmatprep.subr.bf16.mxu0 0
        %1108 = vmatpush1.bf16.msra.mxu0 0
        %1109 = vmatprep.subr.bf16.mxu0 0
        %1110 = vmatpush1.bf16.msra.mxu0 0
        %1111 = vmatprep.subr.bf16.mxu0 0
        %1112 = vmatpush1.bf16.msra.mxu0 0
        %1113 = vmatprep.subr.bf16.mxu0 0
        %1114 = vmatpush1.bf16.msra.mxu0 0
        %1115 = vmatprep.subr.bf16.mxu0 0
        %1116 = vmatpush1.bf16.msra.mxu0 0
        %1117 = vmatprep.subr.bf16.mxu0 0
        %1118 = vmatpush1.bf16.msra.mxu0 0
        %1119 = vmatprep.subr.bf16.mxu0 0
        %1120 = vmatpush1.bf16.msra.mxu0 0
        %1121 = vmatprep.subr.bf16.mxu0 0
        %1122 = vmatpush1.bf16.msra.mxu0 0
        %1123 = vmatprep.subr.bf16.mxu0 0
        %1124 = vmatpush1.bf16.msra.mxu0 0
        %1125 = vmatprep.subr.bf16.mxu0 0
        %1126 = vmatpush1.bf16.msra.mxu0 0
        %1127 = vmatprep.subr.bf16.mxu0 0
        %1128 = vmatpush1.bf16.msra.mxu0 0
        %1129 = vmatprep.subr.bf16.mxu0 0
        %1130 = vmatpush1.bf16.msra.mxu0 0
        %1131 = vmatprep.subr.bf16.mxu0 0
        %1132 = vmatpush1.bf16.msra.mxu0 0
        %1133 = vmatprep.mubr.bf16.mxu0 0
        %1134 = vmatmul.mubr.bf16.gmra.mrb[0].mxu0 %v973
        %v1135 = vpop.f32.mrb[0].mxu0
        %v1136 = vadd.f32 %v1087, %v1135
        %v1137 = vpop.f32.mrb[0].mxu0
        %v1138 = vpop.f32.mrb[0].mxu0
        %v1139 = vpop.f32.mrb[0].mxu0
        %1140 = vdwg.mxu0
        %v1141 = vpack.c.bf16 %v1010, %v1010
        %v1142 = vpack.c.bf16 %v1073, %v1073
        %vm1143 = vcmask 130048
        %v1145 = vsel %vm1143, %v1141, 0
        %v1148 = vsel %vm1143, %v1142, 0
        %1150 = vmatprep.subr.bf16.mxu0 0
        %1151 = vmatpush1.bf16.xpose.msra.mxu0 %v1148
        %1152 = vmatprep.subr.bf16.mxu0 0
        %1153 = vmatpush1.bf16.xpose.msra.mxu0 0
        %1154 = vmatprep.subr.bf16.mxu0 0
        %1155 = vmatpush1.bf16.xpose.msra.mxu0 0
        %1156 = vmatprep.subr.bf16.mxu0 0
        %1157 = vmatpush1.bf16.xpose.msra.mxu0 0
        %1158 = vmatprep.subr.bf16.mxu0 0
        %1159 = vmatpush1.bf16.xpose.msra.mxu0 0
        %1160 = vmatprep.subr.bf16.mxu0 0
        %1161 = vmatpush1.bf16.xpose.msra.mxu0 0
        %1162 = vmatprep.subr.bf16.mxu0 0
        %1163 = vmatpush1.bf16.xpose.msra.mxu0 0
        %1164 = vmatprep.subr.bf16.mxu0 0
        %1165 = vmatpush1.bf16.xpose.msra.mxu0 0
        %1166 = vmatprep.subr.bf16.mxu0 0
        %1167 = vmatpush1.bf16.xpose.msra.mxu0 0
        %1168 = vmatprep.subr.bf16.mxu0 0
        %1169 = vmatpush1.bf16.xpose.msra.mxu0 0
        %1170 = vmatprep.subr.bf16.mxu0 0
        %1171 = vmatpush1.bf16.xpose.msra.mxu0 0
        %1172 = vmatprep.subr.bf16.mxu0 0
        %1173 = vmatpush1.bf16.xpose.msra.mxu0 0
        %1174 = vmatprep.subr.bf16.mxu0 0
        %1175 = vmatpush1.bf16.xpose.msra.mxu0 0
        %1176 = vmatprep.subr.bf16.mxu0 0
        %1177 = vmatpush1.bf16.xpose.msra.mxu0 0
        %1178 = vmatprep.subr.bf16.mxu0 0
        %1179 = vmatpush1.bf16.xpose.msra.mxu0 0
        %1180 = vmatprep.subr.bf16.mxu0 0
        %1181 = vmatpush1.bf16.xpose.msra.mxu0 0
        %1182 = vmatprep.mubr.bf16.mxu0 0
        %1183 = vmatmul.mubr.bf16.gmra.mrb[0].mxu0 %v1145
        %v1184 = vpop.f32.mrb[0].mxu0
        %v1185 = vadd.f32 0.0, %v1184
        %v1186 = vpop.f32.mrb[0].mxu0
        %v1187 = vpop.f32.mrb[0].mxu0
        %v1188 = vpop.f32.mrb[0].mxu0
        %1189 = vdwg.mxu0
        %v1190 = vmul.f32 %v1185, 0.25
        %vm1191 = vcmask 64512
        %v1192 = vsel %vm1191, %v1190, -inf
        %1193 = vmax.xlane.f32.xlu0 %v1192
        %v1194 = vpop.xlane.xlu0 %1193
        %v1195 = vsub.f32 %v1190, %v1194
        %v1196 = vmul.f32 %v1195, 1.442695
        %v1197 = vpow.pop %v1196
        %v1198 = vsel %vm1191, %v1197, 0.0
        %1199 = vadd.xlane.f32.xlu0 %v1198
        %v1200 = vpop.xlane.xlu0 %1199
        %v1201 = vrcp.pop %v1200
        %v1202 = vmul.f32 %v1197, %v1201
        %v1203 = vpack.c.bf16 %v1202, %v1202
        %v1204 = vpack.c.bf16 %v1136, %v1136
        %v1206 = vsel %vm1191, %v1203, 0
        %vm1208 = vcmask 1043456
        %v1210 = vsel %vm1208, %v1204, 0
        %1212 = vmatprep.subr.bf16.mxu0 0
        %1213 = vmatpush1.bf16.msra.mxu0 %v1210
        %1214 = vmatprep.subr.bf16.mxu0 0
        %1215 = vmatpush1.bf16.msra.mxu0 0
        %1216 = vmatprep.subr.bf16.mxu0 0
        %1217 = vmatpush1.bf16.msra.mxu0 0
        %1218 = vmatprep.subr.bf16.mxu0 0
        %1219 = vmatpush1.bf16.msra.mxu0 0
        %1220 = vmatprep.subr.bf16.mxu0 0
        %1221 = vmatpush1.bf16.msra.mxu0 0
        %1222 = vmatprep.subr.bf16.mxu0 0
        %1223 = vmatpush1.bf16.msra.mxu0 0
        %1224 = vmatprep.subr.bf16.mxu0 0
        %1225 = vmatpush1.bf16.msra.mxu0 0
        %1226 = vmatprep.subr.bf16.mxu0 0
        %1227 = vmatpush1.bf16.msra.mxu0 0
        %1228 = vmatprep.subr.bf16.mxu0 0
        %1229 = vmatpush1.bf16.msra.mxu0 0
        %1230 = vmatprep.subr.bf16.mxu0 0
        %1231 = vmatpush1.bf16.msra.mxu0 0
        %1232 = vmatprep.subr.bf16.mxu0 0
        %1233 = vmatpush1.bf16.msra.mxu0 0
        %1234 = vmatprep.subr.bf16.mxu0 0
        %1235 = vmatpush1.bf16.msra.mxu0 0
        %1236 = vmatprep.subr.bf16.mxu0 0
        %1237 = vmatpush1.bf16.msra.mxu0 0
        %1238 = vmatprep.subr.bf16.mxu0 0
        %1239 = vmatpush1.bf16.msra.mxu0 0
        %1240 = vmatprep.subr.bf16.mxu0 0
        %1241 = vmatpush1.bf16.msra.mxu0 0
        %1242 = vmatprep.subr.bf16.mxu0 0
        %1243 = vmatpush1.bf16.msra.mxu0 0
        %1244 = vmatprep.mubr.bf16.mxu0 0
        %1245 = vmatmul.mubr.bf16.gmra.mrb[0].mxu0 %v1206
        %v1246 = vpop.f32.mrb[0].mxu0
        %v1247 = vadd.f32 0.0, %v1246
        %v1248 = vpop.f32.mrb[0].mxu0
        %v1249 = vpop.f32.mrb[0].mxu0
        %v1250 = vpop.f32.mrb[0].mxu0
        %1251 = vdwg.mxu0
        %v1252 = vpack.c.bf16 %v1247, %v1247
        %v1253 = vld [vmem:[%s13] sm:$0xf]
        %v1254 = vld [vmem:[%s13 + $0x4] sm:$0xf]
        %v1257 = vunpack.c.l.b16 %v1253
        %v1258 = vunpack.c.l.b16 %v1254
        %v1259 = vpack.c.b16 %v1258, %v1257
        %v1262 = vsel %vm1143, %v1252, 0
        %1264 = vmatprep.subr.bf16.mxu0 0
        %1265 = vmatpush1.bf16.msra.mxu0 %v1259
        %1266 = vmatprep.subr.bf16.mxu0 0
        %1267 = vmatpush1.bf16.msra.mxu0 0
        %1268 = vmatprep.subr.bf16.mxu0 0
        %1269 = vmatpush1.bf16.msra.mxu0 0
        %1270 = vmatprep.subr.bf16.mxu0 0
        %1271 = vmatpush1.bf16.msra.mxu0 0
        %1272 = vmatprep.subr.bf16.mxu0 0
        %1273 = vmatpush1.bf16.msra.mxu0 0
        %1274 = vmatprep.subr.bf16.mxu0 0
        %1275 = vmatpush1.bf16.msra.mxu0 0
        %1276 = vmatprep.subr.bf16.mxu0 0
        %1277 = vmatpush1.bf16.msra.mxu0 0
        %1278 = vmatprep.subr.bf16.mxu0 0
        %1279 = vmatpush1.bf16.msra.mxu0 0
        %1280 = vmatprep.subr.bf16.mxu0 0
        %1281 = vmatpush1.bf16.msra.mxu0 0
        %1282 = vmatprep.subr.bf16.mxu0 0
        %1283 = vmatpush1.bf16.msra.mxu0 0
        %1284 = vmatprep.subr.bf16.mxu0 0
        %1285 = vmatpush1.bf16.msra.mxu0 0
        %1286 = vmatprep.subr.bf16.mxu0 0
        %1287 = vmatpush1.bf16.msra.mxu0 0
        %1288 = vmatprep.subr.bf16.mxu0 0
        %1289 = vmatpush1.bf16.msra.mxu0 0
        %1290 = vmatprep.subr.bf16.mxu0 0
        %1291 = vmatpush1.bf16.msra.mxu0 0
        %1292 = vmatprep.subr.bf16.mxu0 0
        %1293 = vmatpush1.bf16.msra.mxu0 0
        %1294 = vmatprep.subr.bf16.mxu0 0
        %1295 = vmatpush1.bf16.msra.mxu0 0
        %1296 = vmatprep.mubr.bf16.mxu0 0
        %1297 = vmatmul.mubr.bf16.gmra.mrb[0].mxu0 %v1262
        %v1298 = vpop.f32.mrb[0].mxu0
        %v1299 = vadd.f32 0.0, %v1298
        %v1300 = vpop.f32.mrb[0].mxu0
        %v1301 = vpop.f32.mrb[0].mxu0
        %v1302 = vpop.f32.mrb[0].mxu0
        %1303 = vdwg.mxu0
        %v1305 = vlaneseq
        %v1306 = vshrl.u32 %v1305, 7
        %v1307 = vsub.s32 0, %v1306
        %v1308 = vrot.slane %v948, %v1307
        %v1310 = vadd.f32 %v1308, %v1299
        %s1311 = scalar_lea.vmem %s7, 16
        %v1312 = vld [vmem:[%s1311] sm:$0xf]
        %v1313 = vld [vmem:[%s1311 + $0x4] sm:$0xf]
        %v1314 = vld [vmem:[%s1311 + $0x8] sm:$0xf]
        %v1315 = vld [vmem:[%s1311 + $0xc] sm:$0xf]
        %s1316 = scalar_lea.vmem %s10, 1
        %v1317 = vld [vmem:[%s1316] sm:$0x1]
        %v1319 = vlaneseq
        %v1320 = vshrl.u32 %v1319, 7
        %v1321 = vsub.s32 0, %v1320
        %v1322 = vrot.slane %v1317, %v1321
        %v1328 = vunpack.c.l.b16 %v1312
        %v1329 = vunpack.c.l.b16 %v1313
        %v1330 = vunpack.c.l.b16 %v1314
        %v1331 = vunpack.c.l.b16 %v1315
        %v1332 = vpack.c.b16 %v1329, %v1328
        %v1333 = vpack.c.b16 %v1331, %v1330
        %1336 = vmatprep.subr.bf16.mxu0 0
        %1337 = vmatpush1.bf16.msra.mxu0 %v1332
        %1338 = vmatprep.subr.bf16.mxu0 0
        %1339 = vmatpush1.bf16.msra.mxu0 %v1333
        %1340 = vmatprep.subr.bf16.mxu0 0
        %1341 = vmatpush1.bf16.msra.mxu0 0
        %1342 = vmatprep.subr.bf16.mxu0 0
        %1343 = vmatpush1.bf16.msra.mxu0 0
        %1344 = vmatprep.subr.bf16.mxu0 0
        %1345 = vmatpush1.bf16.msra.mxu0 0
        %1346 = vmatprep.subr.bf16.mxu0 0
        %1347 = vmatpush1.bf16.msra.mxu0 0
        %1348 = vmatprep.subr.bf16.mxu0 0
        %1349 = vmatpush1.bf16.msra.mxu0 0
        %1350 = vmatprep.subr.bf16.mxu0 0
        %1351 = vmatpush1.bf16.msra.mxu0 0
        %1352 = vmatprep.subr.bf16.mxu0 0
        %1353 = vmatpush1.bf16.msra.mxu0 0
        %1354 = vmatprep.subr.bf16.mxu0 0
        %1355 = vmatpush1.bf16.msra.mxu0 0
        %1356 = vmatprep.subr.bf16.mxu0 0
        %1357 = vmatpush1.bf16.msra.mxu0 0
        %1358 = vmatprep.subr.bf16.mxu0 0
        %1359 = vmatpush1.bf16.msra.mxu0 0
        %1360 = vmatprep.subr.bf16.mxu0 0
        %1361 = vmatpush1.bf16.msra.mxu0 0
        %1362 = vmatprep.subr.bf16.mxu0 0
        %1363 = vmatpush1.bf16.msra.mxu0 0
        %1364 = vmatprep.subr.bf16.mxu0 0
        %1365 = vmatpush1.bf16.msra.mxu0 0
        %1366 = vmatprep.subr.bf16.mxu0 0
        %1367 = vmatpush1.bf16.msra.mxu0 0
        %1368 = vmatprep.mubr.bf16.mxu0 0
        %1369 = vmatmul.mubr.bf16.gmra.mrb[0].mxu0 %v973
        %v1370 = vpop.f32.mrb[0].mxu0
        %v1371 = vadd.f32 %v1322, %v1370
        %v1372 = vpop.f32.mrb[0].mxu0
        %v1373 = vpop.f32.mrb[0].mxu0
        %v1374 = vpop.f32.mrb[0].mxu0
        %1375 = vdwg.mxu0
        %s1376 = scalar_lea.vmem %s8, 16
        %v1377 = vld [vmem:[%s1376] sm:$0xf]
        %v1378 = vld [vmem:[%s1376 + $0x4] sm:$0xf]
        %v1379 = vld [vmem:[%s1376 + $0x8] sm:$0xf]
        %v1380 = vld [vmem:[%s1376 + $0xc] sm:$0xf]
        %s1381 = scalar_lea.vmem %s11, 1
        %v1382 = vld [vmem:[%s1381] sm:$0x1]
        %v1384 = vlaneseq
        %v1385 = vshrl.u32 %v1384, 7
        %v1386 = vsub.s32 0, %v1385
        %v1387 = vrot.slane %v1382, %v1386
        %v1393 = vunpack.c.l.b16 %v1377
        %v1394 = vunpack.c.l.b16 %v1378
        %v1395 = vunpack.c.l.b16 %v1379
        %v1396 = vunpack.c.l.b16 %v1380
        %v1397 = vpack.c.b16 %v1394, %v1393
        %v1398 = vpack.c.b16 %v1396, %v1395
        %1401 = vmatprep.subr.bf16.mxu0 0
        %1402 = vmatpush1.bf16.msra.mxu0 %v1397
        %1403 = vmatprep.subr.bf16.mxu0 0
        %1404 = vmatpush1.bf16.msra.mxu0 %v1398
        %1405 = vmatprep.subr.bf16.mxu0 0
        %1406 = vmatpush1.bf16.msra.mxu0 0
        %1407 = vmatprep.subr.bf16.mxu0 0
        %1408 = vmatpush1.bf16.msra.mxu0 0
        %1409 = vmatprep.subr.bf16.mxu0 0
        %1410 = vmatpush1.bf16.msra.mxu0 0
        %1411 = vmatprep.subr.bf16.mxu0 0
        %1412 = vmatpush1.bf16.msra.mxu0 0
        %1413 = vmatprep.subr.bf16.mxu0 0
        %1414 = vmatpush1.bf16.msra.mxu0 0
        %1415 = vmatprep.subr.bf16.mxu0 0
        %1416 = vmatpush1.bf16.msra.mxu0 0
        %1417 = vmatprep.subr.bf16.mxu0 0
        %1418 = vmatpush1.bf16.msra.mxu0 0
        %1419 = vmatprep.subr.bf16.mxu0 0
        %1420 = vmatpush1.bf16.msra.mxu0 0
        %1421 = vmatprep.subr.bf16.mxu0 0
        %1422 = vmatpush1.bf16.msra.mxu0 0
        %1423 = vmatprep.subr.bf16.mxu0 0
        %1424 = vmatpush1.bf16.msra.mxu0 0
        %1425 = vmatprep.subr.bf16.mxu0 0
        %1426 = vmatpush1.bf16.msra.mxu0 0
        %1427 = vmatprep.subr.bf16.mxu0 0
        %1428 = vmatpush1.bf16.msra.mxu0 0
        %1429 = vmatprep.subr.bf16.mxu0 0
        %1430 = vmatpush1.bf16.msra.mxu0 0
        %1431 = vmatprep.subr.bf16.mxu0 0
        %1432 = vmatpush1.bf16.msra.mxu0 0
        %1433 = vmatprep.mubr.bf16.mxu0 0
        %1434 = vmatmul.mubr.bf16.gmra.mrb[0].mxu0 %v973
        %v1435 = vpop.f32.mrb[0].mxu0
        %v1436 = vadd.f32 %v1387, %v1435
        %v1437 = vpop.f32.mrb[0].mxu0
        %v1438 = vpop.f32.mrb[0].mxu0
        %v1439 = vpop.f32.mrb[0].mxu0
        %1440 = vdwg.mxu0
        %s1441 = scalar_lea.vmem %s9, 16
        %v1442 = vld [vmem:[%s1441] sm:$0xf]
        %v1443 = vld [vmem:[%s1441 + $0x4] sm:$0xf]
        %v1444 = vld [vmem:[%s1441 + $0x8] sm:$0xf]
        %v1445 = vld [vmem:[%s1441 + $0xc] sm:$0xf]
        %s1446 = scalar_lea.vmem %s12, 1
        %v1447 = vld [vmem:[%s1446] sm:$0x1]
        %v1449 = vlaneseq
        %v1450 = vshrl.u32 %v1449, 7
        %v1451 = vsub.s32 0, %v1450
        %v1452 = vrot.slane %v1447, %v1451
        %v1458 = vunpack.c.l.b16 %v1442
        %v1459 = vunpack.c.l.b16 %v1443
        %v1460 = vunpack.c.l.b16 %v1444
        %v1461 = vunpack.c.l.b16 %v1445
        %v1462 = vpack.c.b16 %v1459, %v1458
        %v1463 = vpack.c.b16 %v1461, %v1460
        %1466 = vmatprep.subr.bf16.mxu0 0
        %1467 = vmatpush1.bf16.msra.mxu0 %v1462
        %1468 = vmatprep.subr.bf16.mxu0 0
        %1469 = vmatpush1.bf16.msra.mxu0 %v1463
        %1470 = vmatprep.subr.bf16.mxu0 0
        %1471 = vmatpush1.bf16.msra.mxu0 0
        %1472 = vmatprep.subr.bf16.mxu0 0
        %1473 = vmatpush1.bf16.msra.mxu0 0
        %1474 = vmatprep.subr.bf16.mxu0 0
        %1475 = vmatpush1.bf16.msra.mxu0 0
        %1476 = vmatprep.subr.bf16.mxu0 0
        %1477 = vmatpush1.bf16.msra.mxu0 0
        %1478 = vmatprep.subr.bf16.mxu0 0
        %1479 = vmatpush1.bf16.msra.mxu0 0
        %1480 = vmatprep.subr.bf16.mxu0 0
        %1481 = vmatpush1.bf16.msra.mxu0 0
        %1482 = vmatprep.subr.bf16.mxu0 0
        %1483 = vmatpush1.bf16.msra.mxu0 0
        %1484 = vmatprep.subr.bf16.mxu0 0
        %1485 = vmatpush1.bf16.msra.mxu0 0
        %1486 = vmatprep.subr.bf16.mxu0 0
        %1487 = vmatpush1.bf16.msra.mxu0 0
        %1488 = vmatprep.subr.bf16.mxu0 0
        %1489 = vmatpush1.bf16.msra.mxu0 0
        %1490 = vmatprep.subr.bf16.mxu0 0
        %1491 = vmatpush1.bf16.msra.mxu0 0
        %1492 = vmatprep.subr.bf16.mxu0 0
        %1493 = vmatpush1.bf16.msra.mxu0 0
        %1494 = vmatprep.subr.bf16.mxu0 0
        %1495 = vmatpush1.bf16.msra.mxu0 0
        %1496 = vmatprep.subr.bf16.mxu0 0
        %1497 = vmatpush1.bf16.msra.mxu0 0
        %1498 = vmatprep.mubr.bf16.mxu0 0
        %1499 = vmatmul.mubr.bf16.gmra.mrb[0].mxu0 %v973
        %v1500 = vpop.f32.mrb[0].mxu0
        %v1501 = vadd.f32 %v1452, %v1500
        %v1502 = vpop.f32.mrb[0].mxu0
        %v1503 = vpop.f32.mrb[0].mxu0
        %v1504 = vpop.f32.mrb[0].mxu0
        %1505 = vdwg.mxu0
        %v1506 = vpack.c.bf16 %v1371, %v1371
        %v1507 = vpack.c.bf16 %v1436, %v1436
        %v1509 = vsel %vm1143, %v1506, 0
        %v1512 = vsel %vm1143, %v1507, 0
        %1514 = vmatprep.subr.bf16.mxu0 0
        %1515 = vmatpush1.bf16.xpose.msra.mxu0 %v1512
        %1516 = vmatprep.subr.bf16.mxu0 0
        %1517 = vmatpush1.bf16.xpose.msra.mxu0 0
        %1518 = vmatprep.subr.bf16.mxu0 0
        %1519 = vmatpush1.bf16.xpose.msra.mxu0 0
        %1520 = vmatprep.subr.bf16.mxu0 0
        %1521 = vmatpush1.bf16.xpose.msra.mxu0 0
        %1522 = vmatprep.subr.bf16.mxu0 0
        %1523 = vmatpush1.bf16.xpose.msra.mxu0 0
        %1524 = vmatprep.subr.bf16.mxu0 0
        %1525 = vmatpush1.bf16.xpose.msra.mxu0 0
        %1526 = vmatprep.subr.bf16.mxu0 0
        %1527 = vmatpush1.bf16.xpose.msra.mxu0 0
        %1528 = vmatprep.subr.bf16.mxu0 0
        %1529 = vmatpush1.bf16.xpose.msra.mxu0 0
        %1530 = vmatprep.subr.bf16.mxu0 0
        %1531 = vmatpush1.bf16.xpose.msra.mxu0 0
        %1532 = vmatprep.subr.bf16.mxu0 0
        %1533 = vmatpush1.bf16.xpose.msra.mxu0 0
        %1534 = vmatprep.subr.bf16.mxu0 0
        %1535 = vmatpush1.bf16.xpose.msra.mxu0 0
        %1536 = vmatprep.subr.bf16.mxu0 0
        %1537 = vmatpush1.bf16.xpose.msra.mxu0 0
        %1538 = vmatprep.subr.bf16.mxu0 0
        %1539 = vmatpush1.bf16.xpose.msra.mxu0 0
        %1540 = vmatprep.subr.bf16.mxu0 0
        %1541 = vmatpush1.bf16.xpose.msra.mxu0 0
        %1542 = vmatprep.subr.bf16.mxu0 0
        %1543 = vmatpush1.bf16.xpose.msra.mxu0 0
        %1544 = vmatprep.subr.bf16.mxu0 0
        %1545 = vmatpush1.bf16.xpose.msra.mxu0 0
        %1546 = vmatprep.mubr.bf16.mxu0 0
        %1547 = vmatmul.mubr.bf16.gmra.mrb[0].mxu0 %v1509
        %v1548 = vpop.f32.mrb[0].mxu0
        %v1549 = vadd.f32 0.0, %v1548
        %v1550 = vpop.f32.mrb[0].mxu0
        %v1551 = vpop.f32.mrb[0].mxu0
        %v1552 = vpop.f32.mrb[0].mxu0
        %1553 = vdwg.mxu0
        %v1554 = vmul.f32 %v1549, 0.25
        %v1555 = vsel %vm1191, %v1554, -inf
        %1556 = vmax.xlane.f32.xlu0 %v1555
        %v1557 = vpop.xlane.xlu0 %1556
        %v1558 = vsub.f32 %v1554, %v1557
        %v1559 = vmul.f32 %v1558, 1.442695
        %v1560 = vpow.pop %v1559
        %v1561 = vsel %vm1191, %v1560, 0.0
        %1562 = vadd.xlane.f32.xlu0 %v1561
        %v1563 = vpop.xlane.xlu0 %1562
        %v1564 = vrcp.pop %v1563
        %v1565 = vmul.f32 %v1560, %v1564
        %v1566 = vpack.c.bf16 %v1565, %v1565
        %v1567 = vpack.c.bf16 %v1501, %v1501
        %v1569 = vsel %vm1191, %v1566, 0
        %v1572 = vsel %vm1208, %v1567, 0
        %1574 = vmatprep.subr.bf16.mxu0 0
        %1575 = vmatpush1.bf16.msra.mxu0 %v1572
        %1576 = vmatprep.subr.bf16.mxu0 0
        %1577 = vmatpush1.bf16.msra.mxu0 0
        %1578 = vmatprep.subr.bf16.mxu0 0
        %1579 = vmatpush1.bf16.msra.mxu0 0
        %1580 = vmatprep.subr.bf16.mxu0 0
        %1581 = vmatpush1.bf16.msra.mxu0 0
        %1582 = vmatprep.subr.bf16.mxu0 0
        %1583 = vmatpush1.bf16.msra.mxu0 0
        %1584 = vmatprep.subr.bf16.mxu0 0
        %1585 = vmatpush1.bf16.msra.mxu0 0
        %1586 = vmatprep.subr.bf16.mxu0 0
        %1587 = vmatpush1.bf16.msra.mxu0 0
        %1588 = vmatprep.subr.bf16.mxu0 0
        %1589 = vmatpush1.bf16.msra.mxu0 0
        %1590 = vmatprep.subr.bf16.mxu0 0
        %1591 = vmatpush1.bf16.msra.mxu0 0
        %1592 = vmatprep.subr.bf16.mxu0 0
        %1593 = vmatpush1.bf16.msra.mxu0 0
        %1594 = vmatprep.subr.bf16.mxu0 0
        %1595 = vmatpush1.bf16.msra.mxu0 0
        %1596 = vmatprep.subr.bf16.mxu0 0
        %1597 = vmatpush1.bf16.msra.mxu0 0
        %1598 = vmatprep.subr.bf16.mxu0 0
        %1599 = vmatpush1.bf16.msra.mxu0 0
        %1600 = vmatprep.subr.bf16.mxu0 0
        %1601 = vmatpush1.bf16.msra.mxu0 0
        %1602 = vmatprep.subr.bf16.mxu0 0
        %1603 = vmatpush1.bf16.msra.mxu0 0
        %1604 = vmatprep.subr.bf16.mxu0 0
        %1605 = vmatpush1.bf16.msra.mxu0 0
        %1606 = vmatprep.mubr.bf16.mxu0 0
        %1607 = vmatmul.mubr.bf16.gmra.mrb[0].mxu0 %v1569
        %v1608 = vpop.f32.mrb[0].mxu0
        %v1609 = vadd.f32 0.0, %v1608
        %v1610 = vpop.f32.mrb[0].mxu0
        %v1611 = vpop.f32.mrb[0].mxu0
        %v1612 = vpop.f32.mrb[0].mxu0
        %1613 = vdwg.mxu0
        %v1614 = vpack.c.bf16 %v1609, %v1609
        %s1615 = scalar_lea.vmem %s13, 8
        %v1616 = vld [vmem:[%s1615] sm:$0xf]
        %v1617 = vld [vmem:[%s1615 + $0x4] sm:$0xf]
        %v1620 = vunpack.c.l.b16 %v1616
        %v1621 = vunpack.c.l.b16 %v1617
        %v1622 = vpack.c.b16 %v1621, %v1620
        %v1625 = vsel %vm1143, %v1614, 0
        %1627 = vmatprep.subr.bf16.mxu0 0
        %1628 = vmatpush1.bf16.msra.mxu0 %v1622
        %1629 = vmatprep.subr.bf16.mxu0 0
        %1630 = vmatpush1.bf16.msra.mxu0 0
        %1631 = vmatprep.subr.bf16.mxu0 0
        %1632 = vmatpush1.bf16.msra.mxu0 0
        %1633 = vmatprep.subr.bf16.mxu0 0
        %1634 = vmatpush1.bf16.msra.mxu0 0
        %1635 = vmatprep.subr.bf16.mxu0 0
        %1636 = vmatpush1.bf16.msra.mxu0 0
        %1637 = vmatprep.subr.bf16.mxu0 0
        %1638 = vmatpush1.bf16.msra.mxu0 0
        %1639 = vmatprep.subr.bf16.mxu0 0
        %1640 = vmatpush1.bf16.msra.mxu0 0
        %1641 = vmatprep.subr.bf16.mxu0 0
        %1642 = vmatpush1.bf16.msra.mxu0 0
        %1643 = vmatprep.subr.bf16.mxu0 0
        %1644 = vmatpush1.bf16.msra.mxu0 0
        %1645 = vmatprep.subr.bf16.mxu0 0
        %1646 = vmatpush1.bf16.msra.mxu0 0
        %1647 = vmatprep.subr.bf16.mxu0 0
        %1648 = vmatpush1.bf16.msra.mxu0 0
        %1649 = vmatprep.subr.bf16.mxu0 0
        %1650 = vmatpush1.bf16.msra.mxu0 0
        %1651 = vmatprep.subr.bf16.mxu0 0
        %1652 = vmatpush1.bf16.msra.mxu0 0
        %1653 = vmatprep.subr.bf16.mxu0 0
        %1654 = vmatpush1.bf16.msra.mxu0 0
        %1655 = vmatprep.subr.bf16.mxu0 0
        %1656 = vmatpush1.bf16.msra.mxu0 0
        %1657 = vmatprep.subr.bf16.mxu0 0
        %1658 = vmatpush1.bf16.msra.mxu0 0
        %1659 = vmatprep.mubr.bf16.mxu0 0
        %1660 = vmatmul.mubr.bf16.gmra.mrb[0].mxu0 %v1625
        %v1661 = vpop.f32.mrb[0].mxu0
        %v1662 = vadd.f32 0.0, %v1661
        %v1663 = vpop.f32.mrb[0].mxu0
        %v1664 = vpop.f32.mrb[0].mxu0
        %v1665 = vpop.f32.mrb[0].mxu0
        %1666 = vdwg.mxu0
        %v1667 = vadd.f32 %v1310, %v1662
        %v1668 = vadd.f32 %v946, %v1667
        %v1669 = vld [vmem:[%s15] sm:$0x1]
        %v1670 = vld [vmem:[%s16] sm:$0x1]
        %v1671 = vsel %vm918, %v1668, 0.0
        %1672 = vadd.xlane.f32.xlu0 %v1671
        %v1673 = vpop.xlane.xlu0 %1672
        %v1674 = vmul.f32 %v1673, %v922
        %v1675 = vsub.f32 %v1668, %v1674
        %v1676 = vmul.f32 %v1675, %v1675
        %v1677 = vsel %vm918, %v1676, 0.0
        %1678 = vadd.xlane.f32.xlu0 %v1677
        %v1679 = vpop.xlane.xlu0 %1678
        %v1680 = vmul.f32 %v1679, %v922
        %v1681 = vadd.f32 %v1680, 1e-12
        %v1682 = vrsqrt.pop %v1681
        %v1683 = vmul.f32 %v1675, %v1682
        %v1685 = vlaneseq
        %v1686 = vshrl.u32 %v1685, 7
        %v1687 = vsub.s32 0, %v1686
        %v1688 = vrot.slane %v1669, %v1687
        %v1690 = vmul.f32 %v1683, %v1688
        %v1692 = vlaneseq
        %v1693 = vshrl.u32 %v1692, 7
        %v1694 = vsub.s32 0, %v1693
        %v1695 = vrot.slane %v1670, %v1694
        %v1697 = vadd.f32 %v1690, %v1695
        %v1698 = vpack.c.bf16 %v1697, %v1697
        %v1699 = vld [vmem:[%s17] sm:$0xf]
        %v1700 = vld [vmem:[%s17 + $0x4] sm:$0xf]
        %v1701 = vld [vmem:[%s17 + $0x8] sm:$0xf]
        %v1702 = vld [vmem:[%s17 + $0xc] sm:$0xf]
        %v1703 = vld [vmem:[%s18] sm:$0x1]
        %v1705 = vlaneseq
        %v1706 = vshrl.u32 %v1705, 7
        %v1707 = vsub.s32 0, %v1706
        %v1708 = vrot.slane %v1703, %v1707
        %v1714 = vunpack.c.l.b16 %v1699
        %v1715 = vunpack.c.l.b16 %v1700
        %v1716 = vunpack.c.l.b16 %v1701
        %v1717 = vunpack.c.l.b16 %v1702
        %v1718 = vpack.c.b16 %v1715, %v1714
        %v1719 = vpack.c.b16 %v1717, %v1716
        %v1723 = vsel %vm918, %v1698, 0
        %1725 = vmatprep.subr.bf16.mxu0 0
        %1726 = vmatpush1.bf16.msra.mxu0 %v1718
        %1727 = vmatprep.subr.bf16.mxu0 0
        %1728 = vmatpush1.bf16.msra.mxu0 %v1719
        %1729 = vmatprep.subr.bf16.mxu0 0
        %1730 = vmatpush1.bf16.msra.mxu0 0
        %1731 = vmatprep.subr.bf16.mxu0 0
        %1732 = vmatpush1.bf16.msra.mxu0 0
        %1733 = vmatprep.subr.bf16.mxu0 0
        %1734 = vmatpush1.bf16.msra.mxu0 0
        %1735 = vmatprep.subr.bf16.mxu0 0
        %1736 = vmatpush1.bf16.msra.mxu0 0
        %1737 = vmatprep.subr.bf16.mxu0 0
        %1738 = vmatpush1.bf16.msra.mxu0 0
        %1739 = vmatprep.subr.bf16.mxu0 0
        %1740 = vmatpush1.bf16.msra.mxu0 0
        %1741 = vmatprep.subr.bf16.mxu0 0
        %1742 = vmatpush1.bf16.msra.mxu0 0
        %1743 = vmatprep.subr.bf16.mxu0 0
        %1744 = vmatpush1.bf16.msra.mxu0 0
        %1745 = vmatprep.subr.bf16.mxu0 0
        %1746 = vmatpush1.bf16.msra.mxu0 0
        %1747 = vmatprep.subr.bf16.mxu0 0
        %1748 = vmatpush1.bf16.msra.mxu0 0
        %1749 = vmatprep.subr.bf16.mxu0 0
        %1750 = vmatpush1.bf16.msra.mxu0 0
        %1751 = vmatprep.subr.bf16.mxu0 0
        %1752 = vmatpush1.bf16.msra.mxu0 0
        %1753 = vmatprep.subr.bf16.mxu0 0
        %1754 = vmatpush1.bf16.msra.mxu0 0
        %1755 = vmatprep.subr.bf16.mxu0 0
        %1756 = vmatpush1.bf16.msra.mxu0 0
        %1757 = vmatprep.mubr.bf16.mxu0 0
        %1758 = vmatmul.mubr.bf16.gmra.mrb[0].mxu0 %v1723
        %v1759 = vpop.f32.mrb[0].mxu0
        %v1760 = vadd.f32 %v1708, %v1759
        %v1761 = vpop.f32.mrb[0].mxu0
        %v1762 = vpop.f32.mrb[0].mxu0
        %v1763 = vpop.f32.mrb[0].mxu0
        %1764 = vdwg.mxu0
        %v1765 = vmul.f32 %v1760, 0.5
        %v1766 = vmul.f32 %v1760, 0.044715
        %v1767 = vmul.f32 %v1766, %v1760
        %v1768 = vmul.f32 %v1767, %v1760
        %v1769 = vadd.f32 %v1760, %v1768
        %v1770 = vmul.f32 %v1769, 0.7978846
        %v1771 = vtanh.pop %v1770
        %v1772 = vadd.f32 %v1771, 1.0
        %v1773 = vmul.f32 %v1765, %v1772
        %v1774 = vpack.c.bf16 %v1773, %v1773
        %v1775 = vld [vmem:[%s19] sm:$0xf]
        %v1776 = vld [vmem:[%s19 + $0x4] sm:$0xf]
        %v1777 = vld [vmem:[%s19 + $0x8] sm:$0xf]
        %v1778 = vld [vmem:[%s19 + $0xc] sm:$0xf]
        %v1779 = vld [vmem:[%s19 + $0x10] sm:$0xf]
        %v1780 = vld [vmem:[%s19 + $0x14] sm:$0xf]
        %v1781 = vld [vmem:[%s19 + $0x18] sm:$0xf]
        %v1782 = vld [vmem:[%s19 + $0x1c] sm:$0xf]
        %v1783 = vld [vmem:[%s19 + $0x20] sm:$0xf]
        %v1784 = vld [vmem:[%s19 + $0x24] sm:$0xf]
        %v1785 = vld [vmem:[%s19 + $0x28] sm:$0xf]
        %v1786 = vld [vmem:[%s19 + $0x2c] sm:$0xf]
        %v1787 = vld [vmem:[%s19 + $0x30] sm:$0xf]
        %v1788 = vld [vmem:[%s19 + $0x34] sm:$0xf]
        %v1789 = vld [vmem:[%s19 + $0x38] sm:$0xf]
        %v1790 = vld [vmem:[%s19 + $0x3c] sm:$0xf]
        %v1791 = vld [vmem:[%s20] sm:$0x1]
        %v1793 = vlaneseq
        %v1794 = vshrl.u32 %v1793, 7
        %v1795 = vsub.s32 0, %v1794
        %v1796 = vrot.slane %v1791, %v1795
        %v1814 = vunpack.c.l.b16 %v1775
        %v1815 = vunpack.c.l.b16 %v1776
        %v1816 = vunpack.c.l.b16 %v1777
        %v1817 = vunpack.c.l.b16 %v1778
        %v1818 = vunpack.c.l.b16 %v1779
        %v1819 = vunpack.c.l.b16 %v1780
        %v1820 = vunpack.c.l.b16 %v1781
        %v1821 = vunpack.c.l.b16 %v1782
        %v1822 = vunpack.c.l.b16 %v1783
        %v1823 = vunpack.c.l.b16 %v1784
        %v1824 = vunpack.c.l.b16 %v1785
        %v1825 = vunpack.c.l.b16 %v1786
        %v1826 = vunpack.c.l.b16 %v1787
        %v1827 = vunpack.c.l.b16 %v1788
        %v1828 = vunpack.c.l.b16 %v1789
        %v1829 = vunpack.c.l.b16 %v1790
        %v1830 = vpack.c.b16 %v1815, %v1814
        %v1831 = vpack.c.b16 %v1817, %v1816
        %v1832 = vpack.c.b16 %v1819, %v1818
        %v1833 = vpack.c.b16 %v1821, %v1820
        %v1834 = vpack.c.b16 %v1823, %v1822
        %v1835 = vpack.c.b16 %v1825, %v1824
        %v1836 = vpack.c.b16 %v1827, %v1826
        %v1837 = vpack.c.b16 %v1829, %v1828
        %1846 = vmatprep.subr.bf16.mxu0 0
        %1847 = vmatpush1.bf16.msra.mxu0 %v1830
        %1848 = vmatprep.subr.bf16.mxu0 0
        %1849 = vmatpush1.bf16.msra.mxu0 %v1831
        %1850 = vmatprep.subr.bf16.mxu0 0
        %1851 = vmatpush1.bf16.msra.mxu0 %v1832
        %1852 = vmatprep.subr.bf16.mxu0 0
        %1853 = vmatpush1.bf16.msra.mxu0 %v1833
        %1854 = vmatprep.subr.bf16.mxu0 0
        %1855 = vmatpush1.bf16.msra.mxu0 %v1834
        %1856 = vmatprep.subr.bf16.mxu0 0
        %1857 = vmatpush1.bf16.msra.mxu0 %v1835
        %1858 = vmatprep.subr.bf16.mxu0 0
        %1859 = vmatpush1.bf16.msra.mxu0 %v1836
        %1860 = vmatprep.subr.bf16.mxu0 0
        %1861 = vmatpush1.bf16.msra.mxu0 %v1837
        %1862 = vmatprep.subr.bf16.mxu0 0
        %1863 = vmatpush1.bf16.msra.mxu0 0
        %1864 = vmatprep.subr.bf16.mxu0 0
        %1865 = vmatpush1.bf16.msra.mxu0 0
        %1866 = vmatprep.subr.bf16.mxu0 0
        %1867 = vmatpush1.bf16.msra.mxu0 0
        %1868 = vmatprep.subr.bf16.mxu0 0
        %1869 = vmatpush1.bf16.msra.mxu0 0
        %1870 = vmatprep.subr.bf16.mxu0 0
        %1871 = vmatpush1.bf16.msra.mxu0 0
        %1872 = vmatprep.subr.bf16.mxu0 0
        %1873 = vmatpush1.bf16.msra.mxu0 0
        %1874 = vmatprep.subr.bf16.mxu0 0
        %1875 = vmatpush1.bf16.msra.mxu0 0
        %1876 = vmatprep.subr.bf16.mxu0 0
        %1877 = vmatpush1.bf16.msra.mxu0 0
        %1878 = vmatprep.mubr.bf16.mxu0 0
        %1879 = vmatmul.mubr.bf16.gmra.mrb[0].mxu0 %v1774
        %v1880 = vpop.f32.mrb[0].mxu0
        %v1881 = vadd.f32 %v1796, %v1880
        %v1882 = vpop.f32.mrb[0].mxu0
        %v1883 = vpop.f32.mrb[0].mxu0
        %v1884 = vpop.f32.mrb[0].mxu0
        %1885 = vdwg.mxu0
        %v1886 = vadd.f32 %v1697, %v1881
        %v1887 = vld [vmem:[%s21] sm:$0x1]
        %v1888 = vld [vmem:[%s22] sm:$0x1]
        %v1889 = vsel %vm918, %v1886, 0.0
        %1890 = vadd.xlane.f32.xlu0 %v1889
        %v1891 = vpop.xlane.xlu0 %1890
        %v1892 = vmul.f32 %v1891, %v922
        %v1893 = vsub.f32 %v1886, %v1892
        %v1894 = vmul.f32 %v1893, %v1893
        %v1895 = vsel %vm918, %v1894, 0.0
        %1896 = vadd.xlane.f32.xlu0 %v1895
        %v1897 = vpop.xlane.xlu0 %1896
        %v1898 = vmul.f32 %v1897, %v922
        %v1899 = vadd.f32 %v1898, 1e-12
        %v1900 = vrsqrt.pop %v1899
        %v1901 = vmul.f32 %v1893, %v1900
        %v1903 = vlaneseq
        %v1904 = vshrl.u32 %v1903, 7
        %v1905 = vsub.s32 0, %v1904
        %v1906 = vrot.slane %v1887, %v1905
        %v1908 = vmul.f32 %v1901, %v1906
        %v1910 = vlaneseq
        %v1911 = vshrl.u32 %v1910, 7
        %v1912 = vsub.s32 0, %v1911
        %v1913 = vrot.slane %v1888, %v1912
        %v1915 = vadd.f32 %v1908, %v1913
        %v1916 = vpack.c.bf16 %v1915, %v1915
        %s1917 = scalar_lea.vmem %s14, 1
        %v1918 = vld [vmem:[%s1917] sm:$0x1]
        %s1919 = scalar_lea.vmem %s7, 32
        %v1920 = vld [vmem:[%s1919] sm:$0xf]
        %v1921 = vld [vmem:[%s1919 + $0x4] sm:$0xf]
        %v1922 = vld [vmem:[%s1919 + $0x8] sm:$0xf]
        %v1923 = vld [vmem:[%s1919 + $0xc] sm:$0xf]
        %s1924 = scalar_lea.vmem %s10, 2
        %v1925 = vld [vmem:[%s1924] sm:$0x1]
        %v1927 = vlaneseq
        %v1928 = vshrl.u32 %v1927, 7
        %v1929 = vsub.s32 0, %v1928
        %v1930 = vrot.slane %v1925, %v1929
        %v1936 = vunpack.c.l.b16 %v1920
        %v1937 = vunpack.c.l.b16 %v1921
        %v1938 = vunpack.c.l.b16 %v1922
        %v1939 = vunpack.c.l.b16 %v1923
        %v1940 = vpack.c.b16 %v1937, %v1936
        %v1941 = vpack.c.b16 %v1939, %v1938
        %v1945 = vsel %vm918, %v1916, 0
        %1947 = vmatprep.subr.bf16.mxu0 0
        %1948 = vmatpush1.bf16.msra.mxu0 %v1940
        %1949 = vmatprep.subr.bf16.mxu0 0
        %1950 = vmatpush1.bf16.msra.mxu0 %v1941
        %1951 = vmatprep.subr.bf16.mxu0 0
        %1952 = vmatpush1.bf16.msra.mxu0 0
        %1953 = vmatprep.subr.bf16.mxu0 0
        %1954 = vmatpush1.bf16.msra.mxu0 0
        %1955 = vmatprep.subr.bf16.mxu0 0
        %1956 = vmatpush1.bf16.msra.mxu0 0
        %1957 = vmatprep.subr.bf16.mxu0 0
        %1958 = vmatpush1.bf16.msra.mxu0 0
        %1959 = vmatprep.subr.bf16.mxu0 0
        %1960 = vmatpush1.bf16.msra.mxu0 0
        %1961 = vmatprep.subr.bf16.mxu0 0
        %1962 = vmatpush1.bf16.msra.mxu0 0
        %1963 = vmatprep.subr.bf16.mxu0 0
        %1964 = vmatpush1.bf16.msra.mxu0 0
        %1965 = vmatprep.subr.bf16.mxu0 0
        %1966 = vmatpush1.bf16.msra.mxu0 0
        %1967 = vmatprep.subr.bf16.mxu0 0
        %1968 = vmatpush1.bf16.msra.mxu0 0
        %1969 = vmatprep.subr.bf16.mxu0 0
        %1970 = vmatpush1.bf16.msra.mxu0 0
        %1971 = vmatprep.subr.bf16.mxu0 0
        %1972 = vmatpush1.bf16.msra.mxu0 0
        %1973 = vmatprep.subr.bf16.mxu0 0
        %1974 = vmatpush1.bf16.msra.mxu0 0
        %1975 = vmatprep.subr.bf16.mxu0 0
        %1976 = vmatpush1.bf16.msra.mxu0 0
        %1977 = vmatprep.subr.bf16.mxu0 0
        %1978 = vmatpush1.bf16.msra.mxu0 0
        %1979 = vmatprep.mubr.bf16.mxu0 0
        %1980 = vmatmul.mubr.bf16.gmra.mrb[0].mxu0 %v1945
        %v1981 = vpop.f32.mrb[0].mxu0
        %v1982 = vadd.f32 %v1930, %v1981
        %v1983 = vpop.f32.mrb[0].mxu0
        %v1984 = vpop.f32.mrb[0].mxu0
        %v1985 = vpop.f32.mrb[0].mxu0
        %1986 = vdwg.mxu0
        %s1987 = scalar_lea.vmem %s8, 32
        %v1988 = vld [vmem:[%s1987] sm:$0xf]
        %v1989 = vld [vmem:[%s1987 + $0x4] sm:$0xf]
        %v1990 = vld [vmem:[%s1987 + $0x8] sm:$0xf]
        %v1991 = vld [vmem:[%s1987 + $0xc] sm:$0xf]
        %s1992 = scalar_lea.vmem %s11, 2
        %v1993 = vld [vmem:[%s1992] sm:$0x1]
        %v1995 = vlaneseq
        %v1996 = vshrl.u32 %v1995, 7
        %v1997 = vsub.s32 0, %v1996
        %v1998 = vrot.slane %v1993, %v1997
        %v2004 = vunpack.c.l.b16 %v1988
        %v2005 = vunpack.c.l.b16 %v1989
        %v2006 = vunpack.c.l.b16 %v1990
        %v2007 = vunpack.c.l.b16 %v1991
        %v2008 = vpack.c.b16 %v2005, %v2004
        %v2009 = vpack.c.b16 %v2007, %v2006
        %2012 = vmatprep.subr.bf16.mxu0 0
        %2013 = vmatpush1.bf16.msra.mxu0 %v2008
        %2014 = vmatprep.subr.bf16.mxu0 0
        %2015 = vmatpush1.bf16.msra.mxu0 %v2009
        %2016 = vmatprep.subr.bf16.mxu0 0
        %2017 = vmatpush1.bf16.msra.mxu0 0
        %2018 = vmatprep.subr.bf16.mxu0 0
        %2019 = vmatpush1.bf16.msra.mxu0 0
        %2020 = vmatprep.subr.bf16.mxu0 0
        %2021 = vmatpush1.bf16.msra.mxu0 0
        %2022 = vmatprep.subr.bf16.mxu0 0
        %2023 = vmatpush1.bf16.msra.mxu0 0
        %2024 = vmatprep.subr.bf16.mxu0 0
        %2025 = vmatpush1.bf16.msra.mxu0 0
        %2026 = vmatprep.subr.bf16.mxu0 0
        %2027 = vmatpush1.bf16.msra.mxu0 0
        %2028 = vmatprep.subr.bf16.mxu0 0
        %2029 = vmatpush1.bf16.msra.mxu0 0
        %2030 = vmatprep.subr.bf16.mxu0 0
        %2031 = vmatpush1.bf16.msra.mxu0 0
        %2032 = vmatprep.subr.bf16.mxu0 0
        %2033 = vmatpush1.bf16.msra.mxu0 0
        %2034 = vmatprep.subr.bf16.mxu0 0
        %2035 = vmatpush1.bf16.msra.mxu0 0
        %2036 = vmatprep.subr.bf16.mxu0 0
        %2037 = vmatpush1.bf16.msra.mxu0 0
        %2038 = vmatprep.subr.bf16.mxu0 0
        %2039 = vmatpush1.bf16.msra.mxu0 0
        %2040 = vmatprep.subr.bf16.mxu0 0
        %2041 = vmatpush1.bf16.msra.mxu0 0
        %2042 = vmatprep.subr.bf16.mxu0 0
        %2043 = vmatpush1.bf16.msra.mxu0 0
        %2044 = vmatprep.mubr.bf16.mxu0 0
        %2045 = vmatmul.mubr.bf16.gmra.mrb[0].mxu0 %v1945
        %v2046 = vpop.f32.mrb[0].mxu0
        %v2047 = vadd.f32 %v1998, %v2046
        %v2048 = vpop.f32.mrb[0].mxu0
        %v2049 = vpop.f32.mrb[0].mxu0
        %v2050 = vpop.f32.mrb[0].mxu0
        %2051 = vdwg.mxu0
        %s2052 = scalar_lea.vmem %s9, 32
        %v2053 = vld [vmem:[%s2052] sm:$0xf]
        %v2054 = vld [vmem:[%s2052 + $0x4] sm:$0xf]
        %v2055 = vld [vmem:[%s2052 + $0x8] sm:$0xf]
        %v2056 = vld [vmem:[%s2052 + $0xc] sm:$0xf]
        %s2057 = scalar_lea.vmem %s12, 2
        %v2058 = vld [vmem:[%s2057] sm:$0x1]
        %v2060 = vlaneseq
        %v2061 = vshrl.u32 %v2060, 7
        %v2062 = vsub.s32 0, %v2061
        %v2063 = vrot.slane %v2058, %v2062
        %v2069 = vunpack.c.l.b16 %v2053
        %v2070 = vunpack.c.l.b16 %v2054
        %v2071 = vunpack.c.l.b16 %v2055
        %v2072 = vunpack.c.l.b16 %v2056
        %v2073 = vpack.c.b16 %v2070, %v2069
        %v2074 = vpack.c.b16 %v2072, %v2071
        %2077 = vmatprep.subr.bf16.mxu0 0
        %2078 = vmatpush1.bf16.msra.mxu0 %v2073
        %2079 = vmatprep.subr.bf16.mxu0 0
        %2080 = vmatpush1.bf16.msra.mxu0 %v2074
        %2081 = vmatprep.subr.bf16.mxu0 0
        %2082 = vmatpush1.bf16.msra.mxu0 0
        %2083 = vmatprep.subr.bf16.mxu0 0
        %2084 = vmatpush1.bf16.msra.mxu0 0
        %2085 = vmatprep.subr.bf16.mxu0 0
        %2086 = vmatpush1.bf16.msra.mxu0 0
        %2087 = vmatprep.subr.bf16.mxu0 0
        %2088 = vmatpush1.bf16.msra.mxu0 0
        %2089 = vmatprep.subr.bf16.mxu0 0
        %2090 = vmatpush1.bf16.msra.mxu0 0
        %2091 = vmatprep.subr.bf16.mxu0 0
        %2092 = vmatpush1.bf16.msra.mxu0 0
        %2093 = vmatprep.subr.bf16.mxu0 0
        %2094 = vmatpush1.bf16.msra.mxu0 0
        %2095 = vmatprep.subr.bf16.mxu0 0
        %2096 = vmatpush1.bf16.msra.mxu0 0
        %2097 = vmatprep.subr.bf16.mxu0 0
        %2098 = vmatpush1.bf16.msra.mxu0 0
        %2099 = vmatprep.subr.bf16.mxu0 0
        %2100 = vmatpush1.bf16.msra.mxu0 0
        %2101 = vmatprep.subr.bf16.mxu0 0
        %2102 = vmatpush1.bf16.msra.mxu0 0
        %2103 = vmatprep.subr.bf16.mxu0 0
        %2104 = vmatpush1.bf16.msra.mxu0 0
        %2105 = vmatprep.subr.bf16.mxu0 0
        %2106 = vmatpush1.bf16.msra.mxu0 0
        %2107 = vmatprep.subr.bf16.mxu0 0
        %2108 = vmatpush1.bf16.msra.mxu0 0
        %2109 = vmatprep.mubr.bf16.mxu0 0
        %2110 = vmatmul.mubr.bf16.gmra.mrb[0].mxu0 %v1945
        %v2111 = vpop.f32.mrb[0].mxu0
        %v2112 = vadd.f32 %v2063, %v2111
        %v2113 = vpop.f32.mrb[0].mxu0
        %v2114 = vpop.f32.mrb[0].mxu0
        %v2115 = vpop.f32.mrb[0].mxu0
        %2116 = vdwg.mxu0
        %v2117 = vpack.c.bf16 %v1982, %v1982
        %v2118 = vpack.c.bf16 %v2047, %v2047
        %v2120 = vsel %vm1143, %v2117, 0
        %v2123 = vsel %vm1143, %v2118, 0
        %2125 = vmatprep.subr.bf16.mxu0 0
        %2126 = vmatpush1.bf16.xpose.msra.mxu0 %v2123
        %2127 = vmatprep.subr.bf16.mxu0 0
        %2128 = vmatpush1.bf16.xpose.msra.mxu0 0
        %2129 = vmatprep.subr.bf16.mxu0 0
        %2130 = vmatpush1.bf16.xpose.msra.mxu0 0
        %2131 = vmatprep.subr.bf16.mxu0 0
        %2132 = vmatpush1.bf16.xpose.msra.mxu0 0
        %2133 = vmatprep.subr.bf16.mxu0 0
        %2134 = vmatpush1.bf16.xpose.msra.mxu0 0
        %2135 = vmatprep.subr.bf16.mxu0 0
        %2136 = vmatpush1.bf16.xpose.msra.mxu0 0
        %2137 = vmatprep.subr.bf16.mxu0 0
        %2138 = vmatpush1.bf16.xpose.msra.mxu0 0
        %2139 = vmatprep.subr.bf16.mxu0 0
        %2140 = vmatpush1.bf16.xpose.msra.mxu0 0
        %2141 = vmatprep.subr.bf16.mxu0 0
        %2142 = vmatpush1.bf16.xpose.msra.mxu0 0
        %2143 = vmatprep.subr.bf16.mxu0 0
        %2144 = vmatpush1.bf16.xpose.msra.mxu0 0
        %2145 = vmatprep.subr.bf16.mxu0 0
        %2146 = vmatpush1.bf16.xpose.msra.mxu0 0
        %2147 = vmatprep.subr.bf16.mxu0 0
        %2148 = vmatpush1.bf16.xpose.msra.mxu0 0
        %2149 = vmatprep.subr.bf16.mxu0 0
        %2150 = vmatpush1.bf16.xpose.msra.mxu0 0
        %2151 = vmatprep.subr.bf16.mxu0 0
        %2152 = vmatpush1.bf16.xpose.msra.mxu0 0
        %2153 = vmatprep.subr.bf16.mxu0 0
        %2154 = vmatpush1.bf16.xpose.msra.mxu0 0
        %2155 = vmatprep.subr.bf16.mxu0 0
        %2156 = vmatpush1.bf16.xpose.msra.mxu0 0
        %2157 = vmatprep.mubr.bf16.mxu0 0
        %2158 = vmatmul.mubr.bf16.gmra.mrb[0].mxu0 %v2120
        %v2159 = vpop.f32.mrb[0].mxu0
        %v2160 = vadd.f32 0.0, %v2159
        %v2161 = vpop.f32.mrb[0].mxu0
        %v2162 = vpop.f32.mrb[0].mxu0
        %v2163 = vpop.f32.mrb[0].mxu0
        %2164 = vdwg.mxu0
        %v2165 = vmul.f32 %v2160, 0.25
        %v2166 = vsel %vm1191, %v2165, -inf
        %2167 = vmax.xlane.f32.xlu0 %v2166
        %v2168 = vpop.xlane.xlu0 %2167
        %v2169 = vsub.f32 %v2165, %v2168
        %v2170 = vmul.f32 %v2169, 1.442695
        %v2171 = vpow.pop %v2170
        %v2172 = vsel %vm1191, %v2171, 0.0
        %2173 = vadd.xlane.f32.xlu0 %v2172
        %v2174 = vpop.xlane.xlu0 %2173
        %v2175 = vrcp.pop %v2174
        %v2176 = vmul.f32 %v2171, %v2175
        %v2177 = vpack.c.bf16 %v2176, %v2176
        %v2178 = vpack.c.bf16 %v2112, %v2112
        %v2180 = vsel %vm1191, %v2177, 0
        %v2183 = vsel %vm1208, %v2178, 0
        %2185 = vmatprep.subr.bf16.mxu0 0
        %2186 = vmatpush1.bf16.msra.mxu0 %v2183
        %2187 = vmatprep.subr.bf16.mxu0 0
        %2188 = vmatpush1.bf16.msra.mxu0 0
        %2189 = vmatprep.subr.bf16.mxu0 0
        %2190 = vmatpush1.bf16.msra.mxu0 0
        %2191 = vmatprep.subr.bf16.mxu0 0
        %2192 = vmatpush1.bf16.msra.mxu0 0
        %2193 = vmatprep.subr.bf16.mxu0 0
        %2194 = vmatpush1.bf16.msra.mxu0 0
        %2195 = vmatprep.subr.bf16.mxu0 0
        %2196 = vmatpush1.bf16.msra.mxu0 0
        %2197 = vmatprep.subr.bf16.mxu0 0
        %2198 = vmatpush1.bf16.msra.mxu0 0
        %2199 = vmatprep.subr.bf16.mxu0 0
        %2200 = vmatpush1.bf16.msra.mxu0 0
        %2201 = vmatprep.subr.bf16.mxu0 0
        %2202 = vmatpush1.bf16.msra.mxu0 0
        %2203 = vmatprep.subr.bf16.mxu0 0
        %2204 = vmatpush1.bf16.msra.mxu0 0
        %2205 = vmatprep.subr.bf16.mxu0 0
        %2206 = vmatpush1.bf16.msra.mxu0 0
        %2207 = vmatprep.subr.bf16.mxu0 0
        %2208 = vmatpush1.bf16.msra.mxu0 0
        %2209 = vmatprep.subr.bf16.mxu0 0
        %2210 = vmatpush1.bf16.msra.mxu0 0
        %2211 = vmatprep.subr.bf16.mxu0 0
        %2212 = vmatpush1.bf16.msra.mxu0 0
        %2213 = vmatprep.subr.bf16.mxu0 0
        %2214 = vmatpush1.bf16.msra.mxu0 0
        %2215 = vmatprep.subr.bf16.mxu0 0
        %2216 = vmatpush1.bf16.msra.mxu0 0
        %2217 = vmatprep.mubr.bf16.mxu0 0
        %2218 = vmatmul.mubr.bf16.gmra.mrb[0].mxu0 %v2180
        %v2219 = vpop.f32.mrb[0].mxu0
        %v2220 = vadd.f32 0.0, %v2219
        %v2221 = vpop.f32.mrb[0].mxu0
        %v2222 = vpop.f32.mrb[0].mxu0
        %v2223 = vpop.f32.mrb[0].mxu0
        %2224 = vdwg.mxu0
        %v2225 = vpack.c.bf16 %v2220, %v2220
        %s2226 = scalar_lea.vmem %s13, 16
        %v2227 = vld [vmem:[%s2226] sm:$0xf]
        %v2228 = vld [vmem:[%s2226 + $0x4] sm:$0xf]
        %v2231 = vunpack.c.l.b16 %v2227
        %v2232 = vunpack.c.l.b16 %v2228
        %v2233 = vpack.c.b16 %v2232, %v2231
        %v2236 = vsel %vm1143, %v2225, 0
        %2238 = vmatprep.subr.bf16.mxu0 0
        %2239 = vmatpush1.bf16.msra.mxu0 %v2233
        %2240 = vmatprep.subr.bf16.mxu0 0
        %2241 = vmatpush1.bf16.msra.mxu0 0
        %2242 = vmatprep.subr.bf16.mxu0 0
        %2243 = vmatpush1.bf16.msra.mxu0 0
        %2244 = vmatprep.subr.bf16.mxu0 0
        %2245 = vmatpush1.bf16.msra.mxu0 0
        %2246 = vmatprep.subr.bf16.mxu0 0
        %2247 = vmatpush1.bf16.msra.mxu0 0
        %2248 = vmatprep.subr.bf16.mxu0 0
        %2249 = vmatpush1.bf16.msra.mxu0 0
        %2250 = vmatprep.subr.bf16.mxu0 0
        %2251 = vmatpush1.bf16.msra.mxu0 0
        %2252 = vmatprep.subr.bf16.mxu0 0
        %2253 = vmatpush1.bf16.msra.mxu0 0
        %2254 = vmatprep.subr.bf16.mxu0 0
        %2255 = vmatpush1.bf16.msra.mxu0 0
        %2256 = vmatprep.subr.bf16.mxu0 0
        %2257 = vmatpush1.bf16.msra.mxu0 0
        %2258 = vmatprep.subr.bf16.mxu0 0
        %2259 = vmatpush1.bf16.msra.mxu0 0
        %2260 = vmatprep.subr.bf16.mxu0 0
        %2261 = vmatpush1.bf16.msra.mxu0 0
        %2262 = vmatprep.subr.bf16.mxu0 0
        %2263 = vmatpush1.bf16.msra.mxu0 0
        %2264 = vmatprep.subr.bf16.mxu0 0
        %2265 = vmatpush1.bf16.msra.mxu0 0
        %2266 = vmatprep.subr.bf16.mxu0 0
        %2267 = vmatpush1.bf16.msra.mxu0 0
        %2268 = vmatprep.subr.bf16.mxu0 0
        %2269 = vmatpush1.bf16.msra.mxu0 0
        %2270 = vmatprep.mubr.bf16.mxu0 0
        %2271 = vmatmul.mubr.bf16.gmra.mrb[0].mxu0 %v2236
        %v2272 = vpop.f32.mrb[0].mxu0
        %v2273 = vadd.f32 0.0, %v2272
        %v2274 = vpop.f32.mrb[0].mxu0
        %v2275 = vpop.f32.mrb[0].mxu0
        %v2276 = vpop.f32.mrb[0].mxu0
        %2277 = vdwg.mxu0
        %v2279 = vlaneseq
        %v2280 = vshrl.u32 %v2279, 7
        %v2281 = vsub.s32 0, %v2280
        %v2282 = vrot.slane %v1918, %v2281
        %v2284 = vadd.f32 %v2282, %v2273
        %s2285 = scalar_lea.vmem %s7, 48
        %v2286 = vld [vmem:[%s2285] sm:$0xf]
        %v2287 = vld [vmem:[%s2285 + $0x4] sm:$0xf]
        %v2288 = vld [vmem:[%s2285 + $0x8] sm:$0xf]
        %v2289 = vld [vmem:[%s2285 + $0xc] sm:$0xf]
        %s2290 = scalar_lea.vmem %s10, 3
        %v2291 = vld [vmem:[%s2290] sm:$0x1]
        %v2293 = vlaneseq
        %v2294 = vshrl.u32 %v2293, 7
        %v2295 = vsub.s32 0, %v2294
        %v2296 = vrot.slane %v2291, %v2295
        %v2302 = vunpack.c.l.b16 %v2286
        %v2303 = vunpack.c.l.b16 %v2287
        %v2304 = vunpack.c.l.b16 %v2288
        %v2305 = vunpack.c.l.b16 %v2289
        %v2306 = vpack.c.b16 %v2303, %v2302
        %v2307 = vpack.c.b16 %v2305, %v2304
        %2310 = vmatprep.subr.bf16.mxu0 0
        %2311 = vmatpush1.bf16.msra.mxu0 %v2306
        %2312 = vmatprep.subr.bf16.mxu0 0
        %2313 = vmatpush1.bf16.msra.mxu0 %v2307
        %2314 = vmatprep.subr.bf16.mxu0 0
        %2315 = vmatpush1.bf16.msra.mxu0 0
        %2316 = vmatprep.subr.bf16.mxu0 0
        %2317 = vmatpush1.bf16.msra.mxu0 0
        %2318 = vmatprep.subr.bf16.mxu0 0
        %2319 = vmatpush1.bf16.msra.mxu0 0
        %2320 = vmatprep.subr.bf16.mxu0 0
        %2321 = vmatpush1.bf16.msra.mxu0 0
        %2322 = vmatprep.subr.bf16.mxu0 0
        %2323 = vmatpush1.bf16.msra.mxu0 0
        %2324 = vmatprep.subr.bf16.mxu0 0
        %2325 = vmatpush1.bf16.msra.mxu0 0
        %2326 = vmatprep.subr.bf16.mxu0 0
        %2327 = vmatpush1.bf16.msra.mxu0 0
        %2328 = vmatprep.subr.bf16.mxu0 0
        %2329 = vmatpush1.bf16.msra.mxu0 0
        %2330 = vmatprep.subr.bf16.mxu0 0
        %2331 = vmatpush1.bf16.msra.mxu0 0
        %2332 = vmatprep.subr.bf16.mxu0 0
        %2333 = vmatpush1.bf16.msra.mxu0 0
        %2334 = vmatprep.subr.bf16.mxu0 0
        %2335 = vmatpush1.bf16.msra.mxu0 0
        %2336 = vmatprep.subr.bf16.mxu0 0
        %2337 = vmatpush1.bf16.msra.mxu0 0
        %2338 = vmatprep.subr.bf16.mxu0 0
        %2339 = vmatpush1.bf16.msra.mxu0 0
        %2340 = vmatprep.subr.bf16.mxu0 0
        %2341 = vmatpush1.bf16.msra.mxu0 0
        %2342 = vmatprep.mubr.bf16.mxu0 0
        %2343 = vmatmul.mubr.bf16.gmra.mrb[0].mxu0 %v1945
        %v2344 = vpop.f32.mrb[0].mxu0
        %v2345 = vadd.f32 %v2296, %v2344
        %v2346 = vpop.f32.mrb[0].mxu0
        %v2347 = vpop.f32.mrb[0].mxu0
        %v2348 = vpop.f32.mrb[0].mxu0
        %2349 = vdwg.mxu0
        %s2350 = scalar_lea.vmem %s8, 48
        %v2351 = vld [vmem:[%s2350] sm:$0xf]
        %v2352 = vld [vmem:[%s2350 + $0x4] sm:$0xf]
        %v2353 = vld [vmem:[%s2350 + $0x8] sm:$0xf]
        %v2354 = vld [vmem:[%s2350 + $0xc] sm:$0xf]
        %s2355 = scalar_lea.vmem %s11, 3
        %v2356 = vld [vmem:[%s2355] sm:$0x1]
        %v2358 = vlaneseq
        %v2359 = vshrl.u32 %v2358, 7
        %v2360 = vsub.s32 0, %v2359
        %v2361 = vrot.slane %v2356, %v2360
        %v2367 = vunpack.c.l.b16 %v2351
        %v2368 = vunpack.c.l.b16 %v2352
        %v2369 = vunpack.c.l.b16 %v2353
        %v2370 = vunpack.c.l.b16 %v2354
        %v2371 = vpack.c.b16 %v2368, %v2367
        %v2372 = vpack.c.b16 %v2370, %v2369
        %2375 = vmatprep.subr.bf16.mxu0 0
        %2376 = vmatpush1.bf16.msra.mxu0 %v2371
        %2377 = vmatprep.subr.bf16.mxu0 0
        %2378 = vmatpush1.bf16.msra.mxu0 %v2372
        %2379 = vmatprep.subr.bf16.mxu0 0
        %2380 = vmatpush1.bf16.msra.mxu0 0
        %2381 = vmatprep.subr.bf16.mxu0 0
        %2382 = vmatpush1.bf16.msra.mxu0 0
        %2383 = vmatprep.subr.bf16.mxu0 0
        %2384 = vmatpush1.bf16.msra.mxu0 0
        %2385 = vmatprep.subr.bf16.mxu0 0
        %2386 = vmatpush1.bf16.msra.mxu0 0
        %2387 = vmatprep.subr.bf16.mxu0 0
        %2388 = vmatpush1.bf16.msra.mxu0 0
        %2389 = vmatprep.subr.bf16.mxu0 0
        %2390 = vmatpush1.bf16.msra.mxu0 0
        %2391 = vmatprep.subr.bf16.mxu0 0
        %2392 = vmatpush1.bf16.msra.mxu0 0
        %2393 = vmatprep.subr.bf16.mxu0 0
        %2394 = vmatpush1.bf16.msra.mxu0 0
        %2395 = vmatprep.subr.bf16.mxu0 0
        %2396 = vmatpush1.bf16.msra.mxu0 0
        %2397 = vmatprep.subr.bf16.mxu0 0
        %2398 = vmatpush1.bf16.msra.mxu0 0
        %2399 = vmatprep.subr.bf16.mxu0 0
        %2400 = vmatpush1.bf16.msra.mxu0 0
        %2401 = vmatprep.subr.bf16.mxu0 0
        %2402 = vmatpush1.bf16.msra.mxu0 0
        %2403 = vmatprep.subr.bf16.mxu0 0
        %2404 = vmatpush1.bf16.msra.mxu0 0
        %2405 = vmatprep.subr.bf16.mxu0 0
        %2406 = vmatpush1.bf16.msra.mxu0 0
        %2407 = vmatprep.mubr.bf16.mxu0 0
        %2408 = vmatmul.mubr.bf16.gmra.mrb[0].mxu0 %v1945
        %v2409 = vpop.f32.mrb[0].mxu0
        %v2410 = vadd.f32 %v2361, %v2409
        %v2411 = vpop.f32.mrb[0].mxu0
        %v2412 = vpop.f32.mrb[0].mxu0
        %v2413 = vpop.f32.mrb[0].mxu0
        %2414 = vdwg.mxu0
        %s2415 = scalar_lea.vmem %s9, 48
        %v2416 = vld [vmem:[%s2415] sm:$0xf]
        %v2417 = vld [vmem:[%s2415 + $0x4] sm:$0xf]
        %v2418 = vld [vmem:[%s2415 + $0x8] sm:$0xf]
        %v2419 = vld [vmem:[%s2415 + $0xc] sm:$0xf]
        %s2420 = scalar_lea.vmem %s12, 3
        %v2421 = vld [vmem:[%s2420] sm:$0x1]
        %v2423 = vlaneseq
        %v2424 = vshrl.u32 %v2423, 7
        %v2425 = vsub.s32 0, %v2424
        %v2426 = vrot.slane %v2421, %v2425
        %v2432 = vunpack.c.l.b16 %v2416
        %v2433 = vunpack.c.l.b16 %v2417
        %v2434 = vunpack.c.l.b16 %v2418
        %v2435 = vunpack.c.l.b16 %v2419
        %v2436 = vpack.c.b16 %v2433, %v2432
        %v2437 = vpack.c.b16 %v2435, %v2434
        %2440 = vmatprep.subr.bf16.mxu0 0
        %2441 = vmatpush1.bf16.msra.mxu0 %v2436
        %2442 = vmatprep.subr.bf16.mxu0 0
        %2443 = vmatpush1.bf16.msra.mxu0 %v2437
        %2444 = vmatprep.subr.bf16.mxu0 0
        %2445 = vmatpush1.bf16.msra.mxu0 0
        %2446 = vmatprep.subr.bf16.mxu0 0
        %2447 = vmatpush1.bf16.msra.mxu0 0
        %2448 = vmatprep.subr.bf16.mxu0 0
        %2449 = vmatpush1.bf16.msra.mxu0 0
        %2450 = vmatprep.subr.bf16.mxu0 0
        %2451 = vmatpush1.bf16.msra.mxu0 0
        %2452 = vmatprep.subr.bf16.mxu0 0
        %2453 = vmatpush1.bf16.msra.mxu0 0
        %2454 = vmatprep.subr.bf16.mxu0 0
        %2455 = vmatpush1.bf16.msra.mxu0 0
        %2456 = vmatprep.subr.bf16.mxu0 0
        %2457 = vmatpush1.bf16.msra.mxu0 0
        %2458 = vmatprep.subr.bf16.mxu0 0
        %2459 = vmatpush1.bf16.msra.mxu0 0
        %2460 = vmatprep.subr.bf16.mxu0 0
        %2461 = vmatpush1.bf16.msra.mxu0 0
        %2462 = vmatprep.subr.bf16.mxu0 0
        %2463 = vmatpush1.bf16.msra.mxu0 0
        %2464 = vmatprep.subr.bf16.mxu0 0
        %2465 = vmatpush1.bf16.msra.mxu0 0
        %2466 = vmatprep.subr.bf16.mxu0 0
        %2467 = vmatpush1.bf16.msra.mxu0 0
        %2468 = vmatprep.subr.bf16.mxu0 0
        %2469 = vmatpush1.bf16.msra.mxu0 0
        %2470 = vmatprep.subr.bf16.mxu0 0
        %2471 = vmatpush1.bf16.msra.mxu0 0
        %2472 = vmatprep.mubr.bf16.mxu0 0
        %2473 = vmatmul.mubr.bf16.gmra.mrb[0].mxu0 %v1945
        %v2474 = vpop.f32.mrb[0].mxu0
        %v2475 = vadd.f32 %v2426, %v2474
        %v2476 = vpop.f32.mrb[0].mxu0
        %v2477 = vpop.f32.mrb[0].mxu0
        %v2478 = vpop.f32.mrb[0].mxu0
        %2479 = vdwg.mxu0
        %v2480 = vpack.c.bf16 %v2345, %v2345
        %v2481 = vpack.c.bf16 %v2410, %v2410
        %v2483 = vsel %vm1143, %v2480, 0
        %v2486 = vsel %vm1143, %v2481, 0
        %2488 = vmatprep.subr.bf16.mxu0 0
        %2489 = vmatpush1.bf16.xpose.msra.mxu0 %v2486
        %2490 = vmatprep.subr.bf16.mxu0 0
        %2491 = vmatpush1.bf16.xpose.msra.mxu0 0
        %2492 = vmatprep.subr.bf16.mxu0 0
        %2493 = vmatpush1.bf16.xpose.msra.mxu0 0
        %2494 = vmatprep.subr.bf16.mxu0 0
        %2495 = vmatpush1.bf16.xpose.msra.mxu0 0
        %2496 = vmatprep.subr.bf16.mxu0 0
        %2497 = vmatpush1.bf16.xpose.msra.mxu0 0
        %2498 = vmatprep.subr.bf16.mxu0 0
        %2499 = vmatpush1.bf16.xpose.msra.mxu0 0
        %2500 = vmatprep.subr.bf16.mxu0 0
        %2501 = vmatpush1.bf16.xpose.msra.mxu0 0
        %2502 = vmatprep.subr.bf16.mxu0 0
        %2503 = vmatpush1.bf16.xpose.msra.mxu0 0
        %2504 = vmatprep.subr.bf16.mxu0 0
        %2505 = vmatpush1.bf16.xpose.msra.mxu0 0
        %2506 = vmatprep.subr.bf16.mxu0 0
        %2507 = vmatpush1.bf16.xpose.msra.mxu0 0
        %2508 = vmatprep.subr.bf16.mxu0 0
        %2509 = vmatpush1.bf16.xpose.msra.mxu0 0
        %2510 = vmatprep.subr.bf16.mxu0 0
        %2511 = vmatpush1.bf16.xpose.msra.mxu0 0
        %2512 = vmatprep.subr.bf16.mxu0 0
        %2513 = vmatpush1.bf16.xpose.msra.mxu0 0
        %2514 = vmatprep.subr.bf16.mxu0 0
        %2515 = vmatpush1.bf16.xpose.msra.mxu0 0
        %2516 = vmatprep.subr.bf16.mxu0 0
        %2517 = vmatpush1.bf16.xpose.msra.mxu0 0
        %2518 = vmatprep.subr.bf16.mxu0 0
        %2519 = vmatpush1.bf16.xpose.msra.mxu0 0
        %2520 = vmatprep.mubr.bf16.mxu0 0
        %2521 = vmatmul.mubr.bf16.gmra.mrb[0].mxu0 %v2483
        %v2522 = vpop.f32.mrb[0].mxu0
        %v2523 = vadd.f32 0.0, %v2522
        %v2524 = vpop.f32.mrb[0].mxu0
        %v2525 = vpop.f32.mrb[0].mxu0
        %v2526 = vpop.f32.mrb[0].mxu0
        %2527 = vdwg.mxu0
        %v2528 = vmul.f32 %v2523, 0.25
        %v2529 = vsel %vm1191, %v2528, -inf
        %2530 = vmax.xlane.f32.xlu0 %v2529
        %v2531 = vpop.xlane.xlu0 %2530
        %v2532 = vsub.f32 %v2528, %v2531
        %v2533 = vmul.f32 %v2532, 1.442695
        %v2534 = vpow.pop %v2533
        %v2535 = vsel %vm1191, %v2534, 0.0
        %2536 = vadd.xlane.f32.xlu0 %v2535
        %v2537 = vpop.xlane.xlu0 %2536
        %v2538 = vrcp.pop %v2537
        %v2539 = vmul.f32 %v2534, %v2538
        %v2540 = vpack.c.bf16 %v2539, %v2539
        %v2541 = vpack.c.bf16 %v2475, %v2475
        %v2543 = vsel %vm1191, %v2540, 0
        %v2546 = vsel %vm1208, %v2541, 0
        %2548 = vmatprep.subr.bf16.mxu0 0
        %2549 = vmatpush1.bf16.msra.mxu0 %v2546
        %2550 = vmatprep.subr.bf16.mxu0 0
        %2551 = vmatpush1.bf16.msra.mxu0 0
        %2552 = vmatprep.subr.bf16.mxu0 0
        %2553 = vmatpush1.bf16.msra.mxu0 0
        %2554 = vmatprep.subr.bf16.mxu0 0
        %2555 = vmatpush1.bf16.msra.mxu0 0
        %2556 = vmatprep.subr.bf16.mxu0 0
        %2557 = vmatpush1.bf16.msra.mxu0 0
        %2558 = vmatprep.subr.bf16.mxu0 0
        %2559 = vmatpush1.bf16.msra.mxu0 0
        %2560 = vmatprep.subr.bf16.mxu0 0
        %2561 = vmatpush1.bf16.msra.mxu0 0
        %2562 = vmatprep.subr.bf16.mxu0 0
        %2563 = vmatpush1.bf16.msra.mxu0 0
        %2564 = vmatprep.subr.bf16.mxu0 0
        %2565 = vmatpush1.bf16.msra.mxu0 0
        %2566 = vmatprep.subr.bf16.mxu0 0
        %2567 = vmatpush1.bf16.msra.mxu0 0
        %2568 = vmatprep.subr.bf16.mxu0 0
        %2569 = vmatpush1.bf16.msra.mxu0 0
        %2570 = vmatprep.subr.bf16.mxu0 0
        %2571 = vmatpush1.bf16.msra.mxu0 0
        %2572 = vmatprep.subr.bf16.mxu0 0
        %2573 = vmatpush1.bf16.msra.mxu0 0
        %2574 = vmatprep.subr.bf16.mxu0 0
        %2575 = vmatpush1.bf16.msra.mxu0 0
        %2576 = vmatprep.subr.bf16.mxu0 0
        %2577 = vmatpush1.bf16.msra.mxu0 0
        %2578 = vmatprep.subr.bf16.mxu0 0
        %2579 = vmatpush1.bf16.msra.mxu0 0
        %2580 = vmatprep.mubr.bf16.mxu0 0
        %2581 = vmatmul.mubr.bf16.gmra.mrb[0].mxu0 %v2543
        %v2582 = vpop.f32.mrb[0].mxu0
        %v2583 = vadd.f32 0.0, %v2582
        %v2584 = vpop.f32.mrb[0].mxu0
        %v2585 = vpop.f32.mrb[0].mxu0
        %v2586 = vpop.f32.mrb[0].mxu0
        %2587 = vdwg.mxu0
        %v2588 = vpack.c.bf16 %v2583, %v2583
        %s2589 = scalar_lea.vmem %s13, 24
        %v2590 = vld [vmem:[%s2589] sm:$0xf]
        %v2591 = vld [vmem:[%s2589 + $0x4] sm:$0xf]
        %v2594 = vunpack.c.l.b16 %v2590
        %v2595 = vunpack.c.l.b16 %v2591
        %v2596 = vpack.c.b16 %v2595, %v2594
        %v2599 = vsel %vm1143, %v2588, 0
        %2601 = vmatprep.subr.bf16.mxu0 0
        %2602 = vmatpush1.bf16.msra.mxu0 %v2596
        %2603 = vmatprep.subr.bf16.mxu0 0
        %2604 = vmatpush1.bf16.msra.mxu0 0
        %2605 = vmatprep.subr.bf16.mxu0 0
        %2606 = vmatpush1.bf16.msra.mxu0 0
        %2607 = vmatprep.subr.bf16.mxu0 0
        %2608 = vmatpush1.bf16.msra.mxu0 0
        %2609 = vmatprep.subr.bf16.mxu0 0
        %2610 = vmatpush1.bf16.msra.mxu0 0
        %2611 = vmatprep.subr.bf16.mxu0 0
        %2612 = vmatpush1.bf16.msra.mxu0 0
        %2613 = vmatprep.subr.bf16.mxu0 0
        %2614 = vmatpush1.bf16.msra.mxu0 0
        %2615 = vmatprep.subr.bf16.mxu0 0
        %2616 = vmatpush1.bf16.msra.mxu0 0
        %2617 = vmatprep.subr.bf16.mxu0 0
        %2618 = vmatpush1.bf16.msra.mxu0 0
        %2619 = vmatprep.subr.bf16.mxu0 0
        %2620 = vmatpush1.bf16.msra.mxu0 0
        %2621 = vmatprep.subr.bf16.mxu0 0
        %2622 = vmatpush1.bf16.msra.mxu0 0
        %2623 = vmatprep.subr.bf16.mxu0 0
        %2624 = vmatpush1.bf16.msra.mxu0 0
        %2625 = vmatprep.subr.bf16.mxu0 0
        %2626 = vmatpush1.bf16.msra.mxu0 0
        %2627 = vmatprep.subr.bf16.mxu0 0
        %2628 = vmatpush1.bf16.msra.mxu0 0
        %2629 = vmatprep.subr.bf16.mxu0 0
        %2630 = vmatpush1.bf16.msra.mxu0 0
        %2631 = vmatprep.subr.bf16.mxu0 0
        %2632 = vmatpush1.bf16.msra.mxu0 0
        %2633 = vmatprep.mubr.bf16.mxu0 0
        %2634 = vmatmul.mubr.bf16.gmra.mrb[0].mxu0 %v2599
        %v2635 = vpop.f32.mrb[0].mxu0
        %v2636 = vadd.f32 0.0, %v2635
        %v2637 = vpop.f32.mrb[0].mxu0
        %v2638 = vpop.f32.mrb[0].mxu0
        %v2639 = vpop.f32.mrb[0].mxu0
        %2640 = vdwg.mxu0
        %v2641 = vadd.f32 %v2284, %v2636
        %v2642 = vadd.f32 %v1915, %v2641
        %s2643 = scalar_lea.vmem %s15, 1
        %v2644 = vld [vmem:[%s2643] sm:$0x1]
        %s2645 = scalar_lea.vmem %s16, 1
        %v2646 = vld [vmem:[%s2645] sm:$0x1]
        %v2647 = vsel %vm918, %v2642, 0.0
        %2648 = vadd.xlane.f32.xlu0 %v2647
        %v2649 = vpop.xlane.xlu0 %2648
        %v2650 = vmul.f32 %v2649, %v922
        %v2651 = vsub.f32 %v2642, %v2650
        %v2652 = vmul.f32 %v2651, %v2651
        %v2653 = vsel %vm918, %v2652, 0.0
        %2654 = vadd.xlane.f32.xlu0 %v2653
        %v2655 = vpop.xlane.xlu0 %2654
        %v2656 = vmul.f32 %v2655, %v922
        %v2657 = vadd.f32 %v2656, 1e-12
        %v2658 = vrsqrt.pop %v2657
        %v2659 = vmul.f32 %v2651, %v2658
        %v2661 = vlaneseq
        %v2662 = vshrl.u32 %v2661, 7
        %v2663 = vsub.s32 0, %v2662
        %v2664 = vrot.slane %v2644, %v2663
        %v2666 = vmul.f32 %v2659, %v2664
        %v2668 = vlaneseq
        %v2669 = vshrl.u32 %v2668, 7
        %v2670 = vsub.s32 0, %v2669
        %v2671 = vrot.slane %v2646, %v2670
        %v2673 = vadd.f32 %v2666, %v2671
        %v2674 = vpack.c.bf16 %v2673, %v2673
        %s2675 = scalar_lea.vmem %s17, 16
        %v2676 = vld [vmem:[%s2675] sm:$0xf]
        %v2677 = vld [vmem:[%s2675 + $0x4] sm:$0xf]
        %v2678 = vld [vmem:[%s2675 + $0x8] sm:$0xf]
        %v2679 = vld [vmem:[%s2675 + $0xc] sm:$0xf]
        %s2680 = scalar_lea.vmem %s18, 1
        %v2681 = vld [vmem:[%s2680] sm:$0x1]
        %v2683 = vlaneseq
        %v2684 = vshrl.u32 %v2683, 7
        %v2685 = vsub.s32 0, %v2684
        %v2686 = vrot.slane %v2681, %v2685
        %v2692 = vunpack.c.l.b16 %v2676
        %v2693 = vunpack.c.l.b16 %v2677
        %v2694 = vunpack.c.l.b16 %v2678
        %v2695 = vunpack.c.l.b16 %v2679
        %v2696 = vpack.c.b16 %v2693, %v2692
        %v2697 = vpack.c.b16 %v2695, %v2694
        %v2701 = vsel %vm918, %v2674, 0
        %2703 = vmatprep.subr.bf16.mxu0 0
        %2704 = vmatpush1.bf16.msra.mxu0 %v2696
        %2705 = vmatprep.subr.bf16.mxu0 0
        %2706 = vmatpush1.bf16.msra.mxu0 %v2697
        %2707 = vmatprep.subr.bf16.mxu0 0
        %2708 = vmatpush1.bf16.msra.mxu0 0
        %2709 = vmatprep.subr.bf16.mxu0 0
        %2710 = vmatpush1.bf16.msra.mxu0 0
        %2711 = vmatprep.subr.bf16.mxu0 0
        %2712 = vmatpush1.bf16.msra.mxu0 0
        %2713 = vmatprep.subr.bf16.mxu0 0
        %2714 = vmatpush1.bf16.msra.mxu0 0
        %2715 = vmatprep.subr.bf16.mxu0 0
        %2716 = vmatpush1.bf16.msra.mxu0 0
        %2717 = vmatprep.subr.bf16.mxu0 0
        %2718 = vmatpush1.bf16.msra.mxu0 0
        %2719 = vmatprep.subr.bf16.mxu0 0
        %2720 = vmatpush1.bf16.msra.mxu0 0
        %2721 = vmatprep.subr.bf16.mxu0 0
        %2722 = vmatpush1.bf16.msra.mxu0 0
        %2723 = vmatprep.subr.bf16.mxu0 0
        %2724 = vmatpush1.bf16.msra.mxu0 0
        %2725 = vmatprep.subr.bf16.mxu0 0
        %2726 = vmatpush1.bf16.msra.mxu0 0
        %2727 = vmatprep.subr.bf16.mxu0 0
        %2728 = vmatpush1.bf16.msra.mxu0 0
        %2729 = vmatprep.subr.bf16.mxu0 0
        %2730 = vmatpush1.bf16.msra.mxu0 0
        %2731 = vmatprep.subr.bf16.mxu0 0
        %2732 = vmatpush1.bf16.msra.mxu0 0
        %2733 = vmatprep.subr.bf16.mxu0 0
        %2734 = vmatpush1.bf16.msra.mxu0 0
        %2735 = vmatprep.mubr.bf16.mxu0 0
        %2736 = vmatmul.mubr.bf16.gmra.mrb[0].mxu0 %v2701
        %v2737 = vpop.f32.mrb[0].mxu0
        %v2738 = vadd.f32 %v2686, %v2737
        %v2739 = vpop.f32.mrb[0].mxu0
        %v2740 = vpop.f32.mrb[0].mxu0
        %v2741 = vpop.f32.mrb[0].mxu0
        %2742 = vdwg.mxu0
        %v2743 = vmul.f32 %v2738, 0.5
        %v2744 = vmul.f32 %v2738, 0.044715
        %v2745 = vmul.f32 %v2744, %v2738
        %v2746 = vmul.f32 %v2745, %v2738
        %v2747 = vadd.f32 %v2738, %v2746
        %v2748 = vmul.f32 %v2747, 0.7978846
        %v2749 = vtanh.pop %v2748
        %v2750 = vadd.f32 %v2749, 1.0
        %v2751 = vmul.f32 %v2743, %v2750
        %v2752 = vpack.c.bf16 %v2751, %v2751
        %s2753 = scalar_lea.vmem %s19, 64
        %v2754 = vld [vmem:[%s2753] sm:$0xf]
        %v2755 = vld [vmem:[%s2753 + $0x4] sm:$0xf]
        %v2756 = vld [vmem:[%s2753 + $0x8] sm:$0xf]
        %v2757 = vld [vmem:[%s2753 + $0xc] sm:$0xf]
        %v2758 = vld [vmem:[%s2753 + $0x10] sm:$0xf]
        %v2759 = vld [vmem:[%s2753 + $0x14] sm:$0xf]
        %v2760 = vld [vmem:[%s2753 + $0x18] sm:$0xf]
        %v2761 = vld [vmem:[%s2753 + $0x1c] sm:$0xf]
        %v2762 = vld [vmem:[%s2753 + $0x20] sm:$0xf]
        %v2763 = vld [vmem:[%s2753 + $0x24] sm:$0xf]
        %v2764 = vld [vmem:[%s2753 + $0x28] sm:$0xf]
        %v2765 = vld [vmem:[%s2753 + $0x2c] sm:$0xf]
        %v2766 = vld [vmem:[%s2753 + $0x30] sm:$0xf]
        %v2767 = vld [vmem:[%s2753 + $0x34] sm:$0xf]
        %v2768 = vld [vmem:[%s2753 + $0x38] sm:$0xf]
        %v2769 = vld [vmem:[%s2753 + $0x3c] sm:$0xf]
        %s2770 = scalar_lea.vmem %s20, 1
        %v2771 = vld [vmem:[%s2770] sm:$0x1]
        %v2773 = vlaneseq
        %v2774 = vshrl.u32 %v2773, 7
        %v2775 = vsub.s32 0, %v2774
        %v2776 = vrot.slane %v2771, %v2775
        %v2794 = vunpack.c.l.b16 %v2754
        %v2795 = vunpack.c.l.b16 %v2755
        %v2796 = vunpack.c.l.b16 %v2756
        %v2797 = vunpack.c.l.b16 %v2757
        %v2798 = vunpack.c.l.b16 %v2758
        %v2799 = vunpack.c.l.b16 %v2759
        %v2800 = vunpack.c.l.b16 %v2760
        %v2801 = vunpack.c.l.b16 %v2761
        %v2802 = vunpack.c.l.b16 %v2762
        %v2803 = vunpack.c.l.b16 %v2763
        %v2804 = vunpack.c.l.b16 %v2764
        %v2805 = vunpack.c.l.b16 %v2765
        %v2806 = vunpack.c.l.b16 %v2766
        %v2807 = vunpack.c.l.b16 %v2767
        %v2808 = vunpack.c.l.b16 %v2768
        %v2809 = vunpack.c.l.b16 %v2769
        %v2810 = vpack.c.b16 %v2795, %v2794
        %v2811 = vpack.c.b16 %v2797, %v2796
        %v2812 = vpack.c.b16 %v2799, %v2798
        %v2813 = vpack.c.b16 %v2801, %v2800
        %v2814 = vpack.c.b16 %v2803, %v2802
        %v2815 = vpack.c.b16 %v2805, %v2804
        %v2816 = vpack.c.b16 %v2807, %v2806
        %v2817 = vpack.c.b16 %v2809, %v2808
        %2826 = vmatprep.subr.bf16.mxu0 0
        %2827 = vmatpush1.bf16.msra.mxu0 %v2810
        %2828 = vmatprep.subr.bf16.mxu0 0
        %2829 = vmatpush1.bf16.msra.mxu0 %v2811
        %2830 = vmatprep.subr.bf16.mxu0 0
        %2831 = vmatpush1.bf16.msra.mxu0 %v2812
        %2832 = vmatprep.subr.bf16.mxu0 0
        %2833 = vmatpush1.bf16.msra.mxu0 %v2813
        %2834 = vmatprep.subr.bf16.mxu0 0
        %2835 = vmatpush1.bf16.msra.mxu0 %v2814
        %2836 = vmatprep.subr.bf16.mxu0 0
        %2837 = vmatpush1.bf16.msra.mxu0 %v2815
        %2838 = vmatprep.subr.bf16.mxu0 0
        %2839 = vmatpush1.bf16.msra.mxu0 %v2816
        %2840 = vmatprep.subr.bf16.mxu0 0
        %2841 = vmatpush1.bf16.msra.mxu0 %v2817
        %2842 = vmatprep.subr.bf16.mxu0 0
        %2843 = vmatpush1.bf16.msra.mxu0 0
        %2844 = vmatprep.subr.bf16.mxu0 0
        %2845 = vmatpush1.bf16.msra.mxu0 0
        %2846 = vmatprep.subr.bf16.mxu0 0
        %2847 = vmatpush1.bf16.msra.mxu0 0
        %2848 = vmatprep.subr.bf16.mxu0 0
        %2849 = vmatpush1.bf16.msra.mxu0 0
        %2850 = vmatprep.subr.bf16.mxu0 0
        %2851 = vmatpush1.bf16.msra.mxu0 0
        %2852 = vmatprep.subr.bf16.mxu0 0
        %2853 = vmatpush1.bf16.msra.mxu0 0
        %2854 = vmatprep.subr.bf16.mxu0 0
        %2855 = vmatpush1.bf16.msra.mxu0 0
        %2856 = vmatprep.subr.bf16.mxu0 0
        %2857 = vmatpush1.bf16.msra.mxu0 0
        %2858 = vmatprep.mubr.bf16.mxu0 0
        %2859 = vmatmul.mubr.bf16.gmra.mrb[0].mxu0 %v2752
        %v2860 = vpop.f32.mrb[0].mxu0
        %v2861 = vadd.f32 %v2776, %v2860
        %v2862 = vpop.f32.mrb[0].mxu0
        %v2863 = vpop.f32.mrb[0].mxu0
        %v2864 = vpop.f32.mrb[0].mxu0
        %2865 = vdwg.mxu0
        %v2866 = vadd.f32 %v2673, %v2861
        %s2867 = scalar_lea.vmem %s21, 1
        %v2868 = vld [vmem:[%s2867] sm:$0x1]
        %s2869 = scalar_lea.vmem %s22, 1
        %v2870 = vld [vmem:[%s2869] sm:$0x1]
        %v2871 = vsel %vm918, %v2866, 0.0
        %2872 = vadd.xlane.f32.xlu0 %v2871
        %v2873 = vpop.xlane.xlu0 %2872
        %v2874 = vmul.f32 %v2873, %v922
        %v2875 = vsub.f32 %v2866, %v2874
        %v2876 = vmul.f32 %v2875, %v2875
        %v2877 = vsel %vm918, %v2876, 0.0
        %2878 = vadd.xlane.f32.xlu0 %v2877
        %v2879 = vpop.xlane.xlu0 %2878
        %v2880 = vmul.f32 %v2879, %v922
        %v2881 = vadd.f32 %v2880, 1e-12
        %v2882 = vrsqrt.pop %v2881
        %v2883 = vmul.f32 %v2875, %v2882
        %v2885 = vlaneseq
        %v2886 = vshrl.u32 %v2885, 7
        %v2887 = vsub.s32 0, %v2886
        %v2888 = vrot.slane %v2868, %v2887
        %v2890 = vmul.f32 %v2883, %v2888
        %v2892 = vlaneseq
        %v2893 = vshrl.u32 %v2892, 7
        %v2894 = vsub.s32 0, %v2893
        %v2895 = vrot.slane %v2870, %v2894
        %v2897 = vadd.f32 %v2890, %v2895
        %v2898 = vpack.c.bf16 %v2897, %v2897
        %v2899 = vld [vmem:[%s23] sm:$0xf]
        %v2900 = vld [vmem:[%s23 + $0x4] sm:$0xf]
        %v2901 = vld [vmem:[%s23 + $0x8] sm:$0xf]
        %v2902 = vld [vmem:[%s23 + $0xc] sm:$0xf]
        %v2903 = vld [vmem:[%s24] sm:$0x1]
        %v2905 = vlaneseq
        %v2906 = vshrl.u32 %v2905, 7
        %v2907 = vsub.s32 0, %v2906
        %v2908 = vrot.slane %v2903, %v2907
        %v2914 = vunpack.c.l.b16 %v2899
        %v2915 = vunpack.c.l.b16 %v2900
        %v2916 = vunpack.c.l.b16 %v2901
        %v2917 = vunpack.c.l.b16 %v2902
        %v2918 = vpack.c.b16 %v2915, %v2914
        %v2919 = vpack.c.b16 %v2917, %v2916
        %v2923 = vsel %vm918, %v2898, 0
        %2925 = vmatprep.subr.bf16.mxu0 0
        %2926 = vmatpush1.bf16.msra.mxu0 %v2918
        %2927 = vmatprep.subr.bf16.mxu0 0
        %2928 = vmatpush1.bf16.msra.mxu0 %v2919
        %2929 = vmatprep.subr.bf16.mxu0 0
        %2930 = vmatpush1.bf16.msra.mxu0 0
        %2931 = vmatprep.subr.bf16.mxu0 0
        %2932 = vmatpush1.bf16.msra.mxu0 0
        %2933 = vmatprep.subr.bf16.mxu0 0
        %2934 = vmatpush1.bf16.msra.mxu0 0
        %2935 = vmatprep.subr.bf16.mxu0 0
        %2936 = vmatpush1.bf16.msra.mxu0 0
        %2937 = vmatprep.subr.bf16.mxu0 0
        %2938 = vmatpush1.bf16.msra.mxu0 0
        %2939 = vmatprep.subr.bf16.mxu0 0
        %2940 = vmatpush1.bf16.msra.mxu0 0
        %2941 = vmatprep.subr.bf16.mxu0 0
        %2942 = vmatpush1.bf16.msra.mxu0 0
        %2943 = vmatprep.subr.bf16.mxu0 0
        %2944 = vmatpush1.bf16.msra.mxu0 0
        %2945 = vmatprep.subr.bf16.mxu0 0
        %2946 = vmatpush1.bf16.msra.mxu0 0
        %2947 = vmatprep.subr.bf16.mxu0 0
        %2948 = vmatpush1.bf16.msra.mxu0 0
        %2949 = vmatprep.subr.bf16.mxu0 0
        %2950 = vmatpush1.bf16.msra.mxu0 0
        %2951 = vmatprep.subr.bf16.mxu0 0
        %2952 = vmatpush1.bf16.msra.mxu0 0
        %2953 = vmatprep.subr.bf16.mxu0 0
        %2954 = vmatpush1.bf16.msra.mxu0 0
        %2955 = vmatprep.subr.bf16.mxu0 0
        %2956 = vmatpush1.bf16.msra.mxu0 0
        %2957 = vmatprep.mubr.bf16.mxu0 0
        %2958 = vmatmul.mubr.bf16.gmra.mrb[0].mxu0 %v2923
        %v2959 = vpop.f32.mrb[0].mxu0
        %v2960 = vadd.f32 %v2908, %v2959
        %v2961 = vpop.f32.mrb[0].mxu0
        %v2962 = vpop.f32.mrb[0].mxu0
        %v2963 = vpop.f32.mrb[0].mxu0
        %2964 = vdwg.mxu0
        %2965 = vst [vmem:[%s799] sm:$0xff] %v2960
        %v2966 = vld [vmem:[%s814] sm:$0xff]
        %vm2967 = vcmp.lt.s32.totalorder %v818, 8
        %v2968 = vsel %vm2967, %v2960, -1e+30
        %2969 = vmax.xlane.f32.xlu0 %v2968
        %v2970 = vpop.xlane.xlu0 %2969
        %v2971 = vsub.f32 %v2968, %v2970
        %v2972 = vmul.f32 %v2971, 1.442695
        %v2973 = vpow.pop %v2972
        %2974 = vadd.xlane.f32.xlu0 %v2973
        %v2975 = vpop.xlane.xlu0 %2974
        %v2976 = vlog2.pop %v2975
        %v2977 = vmul.f32 %v2976, 0.6931472
        %v2978 = vadd.f32 %v2977, %v2970
        %2979 = vset.pattern.permute.xlu0 0
        %2980 = vperm.xlu0 %2979, %v2966
        %v2981 = vpop.permute.xlu0 %2980
        %vm2982 = vcmp.eq.s32.totalorder %v818, %v2981
        %v2983 = vsel %vm2982, %v2960, 0.0
        %2984 = vadd.xlane.f32.xlu0 %v2983
        %v2985 = vpop.xlane.xlu0 %2984
        %vm2986 = vcmp.ne.s32.totalorder %v2966, 4294967196
        %v2987 = vsel %vm2986, 1, 0
        %v2988 = vcvt.s32.f32 %v2987
        %v2989 = vsub.f32 %v2978, %v2985
        %v2990 = vmul.f32 %v2989, %v2988
        %vm2991 = vcmask 7168
        %v2992 = vsel %vm2991, %v2990, 0.0
        %2993 = vadd.xlane.f32.xlu0 %v2992
        %v2994 = vpop.xlane.xlu0 %2993
        %v2995 = vrot.slane %v2994, 4
        %v2996 = vadd.f32 %v2994, %v2995
        %v2997 = vrot.slane %v2996, 2
        %v2998 = vadd.f32 %v2996, %v2997
        %v2999 = vrot.slane %v2998, 1
        %v3000 = vadd.f32 %v2998, %v2999
        %s3001 = vtos %v3000
        %v3002 = vsel %vm2991, %v2988, 0.0
        %3003 = vadd.xlane.f32.xlu0 %v3002
        %v3004 = vpop.xlane.xlu0 %3003
        %v3005 = vrot.slane %v3004, 4
        %v3006 = vadd.f32 %v3004, %v3005
        %v3007 = vrot.slane %v3006, 2
        %v3008 = vadd.f32 %v3006, %v3007
        %v3009 = vrot.slane %v3008, 1
        %v3010 = vadd.f32 %v3008, %v3009
        %s3011 = vtos %v3010
        %vm3012 = vcmp.eq.s32.totalorder %v818, 0
        %vm3013 = vcmp.eq.s32.totalorder %v818, 1
        %v3014 = vstv %s3011
        %v3015 = vsel %vm3013, %v3014, 0.0
        %v3016 = vstv %s3001
        %v3017 = vsel %vm3012, %v3016, %v3015
        %3018 = vst [vmem:[%s806] sm:$0xff] %v3017
        %s3019 = sand.u32 %s587, 1
        %s3020 = scalar_lea.sflag [#allocation3], %s3019
        %s3021 = sand.u32 %s587, 1
        %s3022 = smul.addr %s3021, 8
        %s3023 = scalar_lea.vmem [#allocation2], %s3022
        %s3024 = sand.u32 %s613, 1
        %s3025 = scalar_lea.sflag [#allocation5], %s3024
        %s3026 = sand.u32 %s613, 1
        %s3027 = smul.addr %s3026, 8
        %s3028 = scalar_lea.vmem [#allocation4], %s3027
        // Predicated region
        $region121: #{tpu_custom_call.1} parent=119 // pred_check
          %p3029 = pneg %p597
        $region122: #{tpu_custom_call.1} parent=119 // pred_check_branch
          %3031 = sbr.rel (%p3029) target = $region124
        $region123: #{tpu_custom_call.1} parent=119 // pred_region
          %s3033 = ssub.s32 128, 128
          %3034 = vsyncadd %s3020, %s3033
          %s3035 = smul.addr %s44, 128
          %s3036 = scalar_lea.hbm %s25, %s3035
          %s3038 = sshll.u32 %s3023, 4
          %s3039 = int_to_ptr.vmem [resolvable:$true] %s3038
          %3041 = dma.vmem_to_hbm [thread:$0]  %s3039, 128, %s3036, %s3020
        $region124: #{tpu_custom_call.1} parent=119 // pred_fallthru
          _
        // Predicated region
        $region125: #{tpu_custom_call.1} parent=119 // pred_check
          %p3042 = pneg %p623
        $region126: #{tpu_custom_call.1} parent=119 // pred_check_branch
          %3044 = sbr.rel (%p3042) target = $region128
        $region127: #{tpu_custom_call.1} parent=119 // pred_region
          %s3046 = ssub.s32 128, 128
          %3047 = vsyncadd %s3025, %s3046
          %s3048 = smul.addr %s44, 128
          %s3049 = scalar_lea.hbm %s26, %s3048
          %s3051 = sshll.u32 %s3028, 4
          %s3052 = int_to_ptr.vmem [resolvable:$true] %s3051
          %3054 = dma.vmem_to_hbm [thread:$0]  %s3052, 128, %s3049, %s3025
        $region128: #{tpu_custom_call.1} parent=119 // pred_fallthru
          _
      $region120: #{tpu_custom_call.1} parent=5 // pred_fallthru
        _
      %p3055 = scmp.le.s32.totalorder 2, %s39
      // Predicated region
      $region129: #{tpu_custom_call.1} parent=5 // pred_check
        %p3056 = pneg %p3055
      $region130: #{tpu_custom_call.1} parent=5 // pred_check_branch
        %3058 = sbr.rel (%p3056) target = $region132
      $region131: #{tpu_custom_call.1} parent=5 // pred_region
        %s3059 = ssub.s32 %s39, 2
        // Predicated region
        $region133: #{tpu_custom_call.1} parent=131 // pred_check
          %p3060 = pneg %p603
        $region134: #{tpu_custom_call.1} parent=131 // pred_check_branch
          %3062 = sbr.rel (%p3060) target = $region136
        $region135: #{tpu_custom_call.1} parent=131 // pred_region
          %s3063 = sand.u32 %s588, 1
          %s3064 = scalar_lea.sflag [#allocation3], %s3063
          %s3065 = sand.u32 %s588, 1
          %s3066 = smul.addr %s3065, 8
          %s3067 = scalar_lea.vmem [#allocation2], %s3066
          %3068 = dma.done %s3064, 128
        $region136: #{tpu_custom_call.1} parent=131 // pred_fallthru
          _
        // Predicated region
        $region137: #{tpu_custom_call.1} parent=131 // pred_check
          %p3069 = pneg %p629
        $region138: #{tpu_custom_call.1} parent=131 // pred_check_branch
          %3071 = sbr.rel (%p3069) target = $region140
        $region139: #{tpu_custom_call.1} parent=131 // pred_region
          %s3072 = sand.u32 %s614, 1
          %s3073 = scalar_lea.sflag [#allocation5], %s3072
          %s3074 = sand.u32 %s614, 1
          %s3075 = smul.addr %s3074, 8
          %s3076 = scalar_lea.vmem [#allocation4], %s3075
          %3077 = dma.done %s3073, 128
        $region140: #{tpu_custom_call.1} parent=131 // pred_fallthru
          _
      $region132: #{tpu_custom_call.1} parent=5 // pred_fallthru
        _
    $region6: #{tpu_custom_call.1} parent=1 // loop_footer
      %s43 = sadd.s32 1, %s39
    $region7: #{tpu_custom_call.1} parent=1 // loop_footer_branch
      %38 = sbr.rel target = $region3
    $region8: #{tpu_custom_call.1} parent=1 // loop_exit
      _
    %3078 = vsyncpa [#allocation3], 1
    %s3079 = scalar_lea.sflag [#allocation3], 1
    %3080 = vsyncpa %s3079, 1
    %3081 = vsyncpa [#allocation5], 1
    %s3082 = scalar_lea.sflag [#allocation5], 1
    %3083 = vsyncpa %s3082, 1

</llo_original>
